<compile_context>
chip_gen: v7x
topology: tpu7x:2x2x1
jax: 0.10.0
libtpu: 0.0.40
codegen_flags: <defaults>
</compile_context>

<pallas_src>
import functools
import sys

import jax
import jax.numpy as jnp
from jax.experimental import pallas as pl
from jax.experimental.pallas import tpu as pltpu


# ----------------------------------------------------------------------------- kernel
def _fusion_clam_kernel(nb, *refs):
    x_refs = refs[:nb]                         # nb x (1, TN, d_i)  compute dtype
    wp_refs = refs[nb:2 * nb]                  # nb x (d_i, E)      compute dtype
    (bp_ref, wgbd_ref, bgrow_ref, gexp_ref, gamma_ref, beta_ref,
     w1_ref, b1_ref, wab_ref, bab_ref, wc_ref, bc_ref,
     m_out_ref, m_scr, l_scr, acc_scr) = refs[2 * nb:]

    f32 = jnp.float32
    cdt = wp_refs[0].dtype                     # MXU compute dtype (bf16)
    ki = pl.program_id(1)

    # ---- per-bag init of the online-softmax state -------------------------------
    @pl.when(ki == 0)
    def _():
        m_scr[...] = jnp.full_like(m_scr, -jnp.inf)
        l_scr[...] = jnp.zeros_like(l_scr)
        acc_scr[...] = jnp.zeros_like(acc_scr)

    # ---- per-branch projection: ReLU -> Linear(d_i, E) -> ReLU ------------------
    projs = []
    for i in range(nb):
        xi = jnp.maximum(x_refs[i][0], 0.0).astype(cdt)                    # (TN, d_i)
        pi = jnp.dot(xi, wp_refs[i][...], preferred_element_type=f32)
        projs.append(jnp.maximum(pi + bp_ref[i], 0.0))                     # (TN, E) f32
    proj = jnp.concatenate(projs, axis=1)                                  # (TN, F) f32

    # ---- attention gate: one block-diagonal matmul yields all NB scores ---------
    s = jnp.dot(proj.astype(cdt), wgbd_ref[...],
                preferred_element_type=f32) + bgrow_ref[...]               # (TN, NB)
    s = s - jnp.max(s, axis=1, keepdims=True)
    es = jnp.exp(s)
    w = es * pl.reciprocal(jnp.sum(es, axis=1, keepdims=True), approx=True)
    gate = jnp.dot(w.astype(cdt), gexp_ref[...],
                   preferred_element_type=f32)                             # (TN, F)
    fused = proj * gate

    # ---- LayerNorm over the fused feature dim -----------------------------------
    mu = jnp.mean(fused, axis=1, keepdims=True)
    xc = fused - mu
    var = jnp.mean(xc * xc, axis=1, keepdims=True)
    fused = xc * jax.lax.rsqrt(var + 1e-5) * gamma_ref[...] + beta_ref[...]

    # ---- CLAM_MB gated-attention head -------------------------------------------
    h1 = jnp.dot(fused.astype(cdt), w1_ref[...],
                 preferred_element_type=f32) + b1_ref[...]
    h1 = jnp.maximum(h1, 0.0)                                              # (TN, H) f32
    h1c = h1.astype(cdt)

    ab = jnp.dot(h1c, wab_ref[...], preferred_element_type=f32) + bab_ref[...]
    d_attn = ab.shape[1] // 2
    a = jnp.tanh(ab[:, :d_attn])
    g = jax.nn.sigmoid(ab[:, d_attn:])
    att = jnp.dot((a * g).astype(cdt), wc_ref[...],
                  preferred_element_type=f32) + bc_ref[...]                # (TN, C)

    # ---- online (flash-style) softmax over the instance axis --------------------
    # stats are kept row-oriented (1, C) (matches att); the accumulator is the
    # lane-dense (C, H), so only the tiny (1, C) alpha needs a per-tile relayout.
    m_prev = m_scr[...]                                                    # (1, C)
    m_new = jnp.maximum(m_prev, jnp.max(att, axis=0, keepdims=True))
    alpha = jnp.exp(m_prev - m_new)                                        # (1, C)
    p = jnp.exp(att - m_new)                                               # (TN, C)
    l_scr[...] = alpha * l_scr[...] + jnp.sum(p, axis=0, keepdims=True)
    alpha_col = jnp.transpose(alpha)                                       # (C, 1)
    acc_scr[...] = acc_scr[...] * alpha_col + jax.lax.dot_general(
        p.astype(cdt), h1c, (((0,), (0,)), ((), ())),
        preferred_element_type=f32)                                        # (C, H)
    m_scr[...] = m_new

    # ---- finalize on the last instance tile: M = softmax(A)^T h -----------------
    @pl.when(ki == pl.num_programs(1) - 1)
    def _():
        inv_l = jnp.transpose(pl.reciprocal(l_scr[...], approx=True))      # (C, 1)
        m_out_ref[0] = acc_scr[...] * inv_l                                # (C, H) lane-dense


# ----------------------------------------------------------------------------- wrapper helpers
def _tpu_vmem_defaults():
    """Generation-aware (vmem_limit_bytes, default instance tile)."""
    vmem_cap = 64 * 1024 * 1024                    # conservative default (v7x per-core)
    try:
        vmem_cap = int(pltpu.get_tpu_info().vmem_capacity_bytes)
    except Exception:                              # capability probe only; keep default
        pass
    if vmem_cap >= 96 * 1024 * 1024:               # v5e / v6e: 128 MiB physical VMEM
        return 100 * 1024 * 1024, 512
    return 52 * 1024 * 1024, 256                   # v7x: 64 MiB physical VMEM


def _pick_instance_tile(n, target):
    """Largest tile <= target that divides N and is 16-row aligned (bf16 sublane
    packing), or the full bag if it already fits / no aligned divisor exists."""
    if n <= target:
        return n
    for cand in range(min(target, n), 15, -1):
        if n % cand == 0 and cand % 16 == 0:
            return cand
    # TODO(synk): ragged bags need row masking; until then awkward N uses one full tile.
    return n


def clam_mb_mil_fusion_forward(feature_list, params, *,
                               compute_dtype=jnp.bfloat16, instance_tile=None):
    """feature_list: list of (B, N, d_i) arrays (d_i may differ per branch).

    NOTE: for best MXU/lane utilization use embed_dim (E) that is a multiple of 128
    (the toy test below uses E=32 for speed; correctness is unaffected)."""
    nb = len(feature_list)
    B, N, _ = feature_list[0].shape
    E = params["wp"][0].shape[1]
    F = E * nb
    H = params["w1"].shape[1]
    D = params["wa"].shape[1]
    C = params["wc"].shape[1]

    vmem_limit, tile_target = _tpu_vmem_defaults()
    if instance_tile is None:
        instance_tile = tile_target
    tn = _pick_instance_tile(N, instance_tile)
    n_tiles = N // tn
    cdt = compute_dtype
    f32 = jnp.float32

    # -- operand preparation: bf16 MXU operands, f32 biases / LN params -----------
    xs = [x.astype(cdt) for x in feature_list]             # native d_i, no d_max padding
    wps = [w.astype(cdt) for w in params["wp"]]
    bp = jnp.stack(params["bp"], axis=0)[:, None, :].astype(f32)           # (NB, 1, E)

    wg_bd = jnp.zeros((F, nb), f32)                        # block-diagonal gate weight
    for i in range(nb):
        wg_bd = wg_bd.at[i * E:(i + 1) * E, i].set(params["wg"][i].astype(f32))
    wg_bd = wg_bd.astype(cdt)                                              # (F, NB)
    bg_row = jnp.concatenate(params["bg"]).reshape(1, nb).astype(f32)      # (1, NB)
    gexp = jnp.repeat(jnp.eye(nb, dtype=f32), E, axis=1).astype(cdt)       # (NB, F) 0/1

    gamma = params["ln_gamma"].reshape(1, F).astype(f32)
    beta = params["ln_beta"].reshape(1, F).astype(f32)
    w1 = params["w1"].astype(cdt)
    b1 = params["b1"].reshape(1, H).astype(f32)
    wab = jnp.concatenate([params["wa"], params["wb"]], axis=1).astype(cdt)    # (H, 2D)
    bab = jnp.concatenate([params["ba"], params["bb"]]).reshape(1, 2 * D).astype(f32)
    wc = params["wc"].astype(cdt)
    bc = params["bc"].reshape(1, C).astype(f32)

    inputs = (*xs, *wps, bp, wg_bd, bg_row, gexp, gamma, beta, w1, b1, wab, bab, wc, bc)
    const_shapes = [bp.shape, wg_bd.shape, bg_row.shape, gexp.shape, gamma.shape,
                    beta.shape, w1.shape, b1.shape, wab.shape, bab.shape, wc.shape,
                    bc.shape]

    def build(single_buffer_weights):
        def const_spec(shape):
            idx = lambda b, k, _nd=len(shape): (0,) * _nd
            if single_buffer_weights:
                # weights/biases are re-used every grid step: single-buffer them so the
                # VMEM budget goes to a bigger instance tile instead.
                return pl.BlockSpec(shape, idx, pipeline_mode=pl.Buffered(1))
            return pl.BlockSpec(shape, idx)

        in_specs = (
            [pl.BlockSpec((1, tn, x.shape[-1]), lambda b, k: (b, k, 0)) for x in xs]
            + [const_spec(w.shape) for w in wps]
            + [const_spec(shp) for shp in const_shapes])

        return pl.pallas_call(
            functools.partial(_fusion_clam_kernel, nb),
            out_shape=jax.ShapeDtypeStruct((B, C, H), f32),
            grid=(B, n_tiles),
            in_specs=in_specs,
            out_specs=pl.BlockSpec((1, C, H), lambda b, k: (b, 0, 0)),
            scratch_shapes=[pltpu.VMEM((1, C), f32),     # running per-class max
                            pltpu.VMEM((1, C), f32),     # running per-class exp-sum
                            pltpu.VMEM((C, H), f32)],    # running softmax(A)^T h, lane-dense
            compiler_params=pltpu.CompilerParams(
                dimension_semantics=("parallel", "arbitrary"),
                vmem_limit_bytes=vmem_limit),
        )

    try:
        M = build(True)(*inputs)                                           # (B, C, H)
    except (TypeError, NotImplementedError, ValueError, pltpu.LoweringException) as e:
        # pipeline_mode=pl.Buffered(1) unsupported in this jax build -> default
        # double-buffering (correctness identical, weights use 2x VMEM).
        print(f"warning: single-buffered weight BlockSpecs unsupported "
              f"({type(e).__name__}); falling back to default buffering", file=sys.stderr)
        M = build(False)(*inputs)

    # tiny per-class classifier + class softmax finished in XLA (kernel output is the
    # lane-dense bag representation M).
    logits = jnp.einsum("bch,ch->bc", M, params["wclf"].astype(f32)) \
        + params["bclf"][None, :].astype(f32)
    y_prob = jax.nn.softmax(logits, axis=1)
    y_hat = jnp.argmax(logits, axis=1)
    return {"logits": logits, "Y_prob": y_prob, "Y_hat": y_hat, "bag_features": M}


# ----------------------------------------------------------------------------- reference
def reference_forward(feature_list, params):
    nb = len(feature_list)
    B = feature_list[0].shape[0]
    out_logits, out_prob = [], []
    for b in range(B):
        projs, scores = [], []
        for i in range(nb):
            xi = jnp.maximum(feature_list[i][b], 0.0)
            pi = jnp.maximum(xi @ params["wp"][i] + params["bp"][i], 0.0)
            projs.append(pi)
            scores.append(pi @ params["wg"][i][:, None] + params["bg"][i])
        s = jnp.concatenate(scores, axis=1)
        w = jax.nn.softmax(s, axis=1)
        fused = jnp.concatenate([projs[i] * w[:, i:i + 1] for i in range(nb)], axis=1)
        mu = jnp.mean(fused, axis=1, keepdims=True)
        var = jnp.mean((fused - mu) ** 2, axis=1, keepdims=True)
        fused = (fused - mu) / jnp.sqrt(var + 1e-5)
        fused = fused * params["ln_gamma"] + params["ln_beta"]
        h1 = jnp.maximum(fused @ params["w1"] + params["b1"], 0.0)
        a = jnp.tanh(h1 @ params["wa"] + params["ba"])
        g = jax.nn.sigmoid(h1 @ params["wb"] + params["bb"])
        A = (a * g) @ params["wc"] + params["bc"]
        A_sm = jax.nn.softmax(A, axis=0)
        M = A_sm.T @ h1
        logits = jnp.sum(M * params["wclf"], axis=1) + params["bclf"]
        out_logits.append(logits)
        out_prob.append(jax.nn.softmax(logits))
    return jnp.stack(out_logits), jnp.stack(out_prob)


# ----------------------------------------------------------------------------- params
def init_params(key, in_dims, embed_dim, num_classes, hidden, attn_dim):
    nb = len(in_dims)
    F = embed_dim * nb
    keys = iter(jax.random.split(key, 6 * nb + 16))
    nrm = lambda shape, scale=0.05: (scale * jax.random.normal(next(keys), shape)).astype(jnp.float32)
    return {
        "wp": [nrm((d, embed_dim)) for d in in_dims],
        "bp": [nrm((embed_dim,)) for _ in in_dims],
        "wg": [nrm((embed_dim,)) for _ in in_dims],
        "bg": [nrm((1,)) for _ in in_dims],
        "ln_gamma": jnp.ones((F,), jnp.float32) + nrm((F,), 0.01),
        "ln_beta": nrm((F,), 0.01),
        "w1": nrm((F, hidden)), "b1": nrm((hidden,)),
        "wa": nrm((hidden, attn_dim)), "ba": nrm((attn_dim,)),
        "wb": nrm((hidden, attn_dim)), "bb": nrm((attn_dim,)),
        "wc": nrm((attn_dim, num_classes)), "bc": nrm((num_classes,)),
        "wclf": nrm((num_classes, hidden)), "bclf": nrm((num_classes,)),
    }


# ----------------------------------------------------------------------------- main
if __name__ == "__main__":
    B, N = 2, 32
    embed_dim = 32                      # toy; production should use a multiple of 128
    num_classes = 2
    in_dims = [48, 48, 64, 32]          # scaled-down analogue of [1536, 1536, 2048, 512]
    hidden, attn_dim = 512, 256         # CLAM size_arg='small' head: [F, 512, 256]

    key = jax.random.PRNGKey(0)
    pkey, *xkeys = jax.random.split(key, 1 + len(in_dims))
    params = init_params(pkey, in_dims, embed_dim, num_classes, hidden, attn_dim)
    feature_list = [jax.random.normal(xkeys[i], (B, N, in_dims[i]), jnp.float32)
                    for i in range(len(in_dims))]

    # Round params/features to bf16-representable values so the f32 reference and the
    # bf16-compute kernel differ only by intermediate-activation rounding.
    rnd = lambda a: a.astype(jnp.bfloat16).astype(jnp.float32)
    params = jax.tree_util.tree_map(rnd, params)
    feature_list = [rnd(x) for x in feature_list]

    # instance_tile=16 splits N=32 into 2 instance tiles (16-row, bf16-packing aligned),
    # exercising the online instance-softmax accumulation across grid steps.
    out = clam_mb_mil_fusion_forward(feature_list, params, instance_tile=16)
    jax.block_until_ready(out)

    ref_logits, ref_prob = reference_forward(feature_list, params)
    assert jnp.allclose(out["logits"], ref_logits, atol=2e-2, rtol=2e-2), \
        f"logits mismatch:\n{out['logits']}\n{ref_logits}"
    assert jnp.allclose(out["Y_prob"], ref_prob, atol=2e-2, rtol=2e-2), \
        f"Y_prob mismatch:\n{out['Y_prob']}\n{ref_prob}"

    print("KERNEL_OK")
</pallas_src>

<mosaic_0001>
module attributes {stable_mosaic.version = 11 : i64} {
  func.func @_fusion_clam_kernel(%arg0: i32, %arg1: i32, %arg2: memref<1x16x48xbf16, #tpu.memory_space<vmem>>, %arg3: memref<1x16x48xbf16, #tpu.memory_space<vmem>>, %arg4: memref<1x16x64xbf16, #tpu.memory_space<vmem>>, %arg5: memref<1x16x32xbf16, #tpu.memory_space<vmem>>, %arg6: memref<48x32xbf16, #tpu.memory_space<vmem>>, %arg7: memref<48x32xbf16, #tpu.memory_space<vmem>>, %arg8: memref<64x32xbf16, #tpu.memory_space<vmem>>, %arg9: memref<32x32xbf16, #tpu.memory_space<vmem>>, %arg10: memref<4x1x32xf32, #tpu.memory_space<vmem>>, %arg11: memref<128x4xbf16, #tpu.memory_space<vmem>>, %arg12: memref<1x4xf32, #tpu.memory_space<vmem>>, %arg13: memref<4x128xbf16, #tpu.memory_space<vmem>>, %arg14: memref<1x128xf32, #tpu.memory_space<vmem>>, %arg15: memref<1x128xf32, #tpu.memory_space<vmem>>, %arg16: memref<128x512xbf16, #tpu.memory_space<vmem>>, %arg17: memref<1x512xf32, #tpu.memory_space<vmem>>, %arg18: memref<512x512xbf16, #tpu.memory_space<vmem>>, %arg19: memref<1x512xf32, #tpu.memory_space<vmem>>, %arg20: memref<256x2xbf16, #tpu.memory_space<vmem>>, %arg21: memref<1x2xf32, #tpu.memory_space<vmem>>, %arg22: memref<1x2x512xf32, #tpu.memory_space<vmem>>, %arg23: memref<1x2xf32, #tpu.memory_space<vmem>>, %arg24: memref<1x2xf32, #tpu.memory_space<vmem>>, %arg25: memref<2x512xf32, #tpu.memory_space<vmem>>) attributes {dimension_semantics = [#tpu.dimension_semantics<parallel>, #tpu.dimension_semantics<arbitrary>], iteration_bounds = array<i64: 2, 2>, scalar_prefetch = 0 : i64, scratch_operands = 3 : i64, tpu.core_type = #tpu.core_type<tc>, window_params = [{transform_indices = @transform_0, window_bounds = array<i64: 1, 16, 48>}, {transform_indices = @transform_1, window_bounds = array<i64: 1, 16, 48>}, {transform_indices = @transform_2, window_bounds = array<i64: 1, 16, 64>}, {transform_indices = @transform_3, window_bounds = array<i64: 1, 16, 32>}, {pipeline_mode = #tpu.pipeline_mode<synchronous>, transform_indices = @transform_4, window_bounds = array<i64: 48, 32>}, {pipeline_mode = #tpu.pipeline_mode<synchronous>, transform_indices = @transform_5, window_bounds = array<i64: 48, 32>}, {pipeline_mode = #tpu.pipeline_mode<synchronous>, transform_indices = @transform_6, window_bounds = array<i64: 64, 32>}, {pipeline_mode = #tpu.pipeline_mode<synchronous>, transform_indices = @transform_7, window_bounds = array<i64: 32, 32>}, {pipeline_mode = #tpu.pipeline_mode<synchronous>, transform_indices = @transform_8, window_bounds = array<i64: 4, 1, 32>}, {pipeline_mode = #tpu.pipeline_mode<synchronous>, transform_indices = @transform_9, window_bounds = array<i64: 128, 4>}, {pipeline_mode = #tpu.pipeline_mode<synchronous>, transform_indices = @transform_10, window_bounds = array<i64: 1, 4>}, {pipeline_mode = #tpu.pipeline_mode<synchronous>, transform_indices = @transform_11, window_bounds = array<i64: 4, 128>}, {pipeline_mode = #tpu.pipeline_mode<synchronous>, transform_indices = @transform_12, window_bounds = array<i64: 1, 128>}, {pipeline_mode = #tpu.pipeline_mode<synchronous>, transform_indices = @transform_13, window_bounds = array<i64: 1, 128>}, {pipeline_mode = #tpu.pipeline_mode<synchronous>, transform_indices = @transform_14, window_bounds = array<i64: 128, 512>}, {pipeline_mode = #tpu.pipeline_mode<synchronous>, transform_indices = @transform_15, window_bounds = array<i64: 1, 512>}, {pipeline_mode = #tpu.pipeline_mode<synchronous>, transform_indices = @transform_16, window_bounds = array<i64: 512, 512>}, {pipeline_mode = #tpu.pipeline_mode<synchronous>, transform_indices = @transform_17, window_bounds = array<i64: 1, 512>}, {pipeline_mode = #tpu.pipeline_mode<synchronous>, transform_indices = @transform_18, window_bounds = array<i64: 256, 2>}, {pipeline_mode = #tpu.pipeline_mode<synchronous>, transform_indices = @transform_19, window_bounds = array<i64: 1, 2>}, {transform_indices = @transform_20, window_bounds = array<i64: 1, 2, 512>}]} {
    %c0_i32 = arith.constant 0 : i32
    %0 = arith.cmpi eq, %arg1, %c0_i32 : i32
    %1 = arith.extui %0 : i1 to i32
    %c0_i32_0 = arith.constant 0 : i32
    %2 = arith.cmpi ne, %1, %c0_i32_0 : i32
    scf.if %2 {
      %cst_92 = arith.constant 0xFF800000 : f32
      %150 = vector.broadcast %cst_92 : f32 to vector<1x2xf32>
      %c0_93 = arith.constant 0 : index
      %c0_94 = arith.constant 0 : index
      %151 = vector.load %arg23[%c0_93, %c0_94] : memref<1x2xf32, #tpu.memory_space<vmem>>, vector<1x2xf32>
      tpu.vector_store %arg23[%c0_93, %c0_94], %150 {strides = array<i32>} : memref<1x2xf32, #tpu.memory_space<vmem>>, vector<1x2xf32>,
      %cst_95 = arith.constant 0.000000e+00 : f32
      %152 = vector.broadcast %cst_95 : f32 to vector<1x2xf32>
      %c0_96 = arith.constant 0 : index
      %c0_97 = arith.constant 0 : index
      %153 = vector.load %arg24[%c0_96, %c0_97] : memref<1x2xf32, #tpu.memory_space<vmem>>, vector<1x2xf32>
      tpu.vector_store %arg24[%c0_96, %c0_97], %152 {strides = array<i32>} : memref<1x2xf32, #tpu.memory_space<vmem>>, vector<1x2xf32>,
      %cst_98 = arith.constant 0.000000e+00 : f32
      %154 = vector.broadcast %cst_98 : f32 to vector<2x512xf32>
      %c0_99 = arith.constant 0 : index
      %c0_100 = arith.constant 0 : index
      %155 = vector.load %arg25[%c0_99, %c0_100] : memref<2x512xf32, #tpu.memory_space<vmem>>, vector<2x512xf32>
      tpu.vector_store %arg25[%c0_99, %c0_100], %154 {strides = array<i32>} : memref<2x512xf32, #tpu.memory_space<vmem>>, vector<2x512xf32>,
    } else {
    }
    %c0 = arith.constant 0 : index
    %c0_1 = arith.constant 0 : index
    %c0_2 = arith.constant 0 : index
    %3 = vector.load %arg2[%c0, %c0_1, %c0_2] : memref<1x16x48xbf16, #tpu.memory_space<vmem>>, vector<1x16x48xbf16>
    %4 = vector.shape_cast %3 : vector<1x16x48xbf16> to vector<16x48xbf16>
    %cst = arith.constant 0.000000e+00 : bf16
    %5 = vector.broadcast %cst : bf16 to vector<16x48xbf16>
    %6 = arith.maximumf %4, %5 : vector<16x48xbf16>
    %c0_3 = arith.constant 0 : index
    %c0_4 = arith.constant 0 : index
    %7 = vector.load %arg6[%c0_3, %c0_4] : memref<48x32xbf16, #tpu.memory_space<vmem>>, vector<48x32xbf16>
    %cst_5 = arith.constant dense<0.000000e+00> : vector<16x32xf32>
    %8 = tpu.matmul %6, %7, %cst_5 {dimension_numbers = #tpu.dot_dimension_numbers<[1], [0], [0], [1], [0, 0, 1, 1], [], []>} : vector<16x48xbf16>, vector<48x32xbf16>, vector<16x32xf32> -> vector<16x32xf32>
    %c0_6 = arith.constant 0 : index
    %c0_7 = arith.constant 0 : index
    %c0_8 = arith.constant 0 : index
    %9 = vector.load %arg10[%c0_6, %c0_7, %c0_8] : memref<4x1x32xf32, #tpu.memory_space<vmem>>, vector<1x1x32xf32>
    %10 = vector.shape_cast %9 : vector<1x1x32xf32> to vector<1x32xf32>
    %11 = vector.broadcast %10 : vector<1x32xf32> to vector<16x32xf32>
    %12 = arith.addf %8, %11 : vector<16x32xf32>
    %cst_9 = arith.constant 0.000000e+00 : f32
    %13 = vector.broadcast %cst_9 : f32 to vector<16x32xf32>
    %14 = arith.maximumf %12, %13 : vector<16x32xf32>
    %c0_10 = arith.constant 0 : index
    %c0_11 = arith.constant 0 : index
    %c0_12 = arith.constant 0 : index
    %15 = vector.load %arg3[%c0_10, %c0_11, %c0_12] : memref<1x16x48xbf16, #tpu.memory_space<vmem>>, vector<1x16x48xbf16>
    %16 = vector.shape_cast %15 : vector<1x16x48xbf16> to vector<16x48xbf16>
    %cst_13 = arith.constant 0.000000e+00 : bf16
    %17 = vector.broadcast %cst_13 : bf16 to vector<16x48xbf16>
    %18 = arith.maximumf %16, %17 : vector<16x48xbf16>
    %c0_14 = arith.constant 0 : index
    %c0_15 = arith.constant 0 : index
    %19 = vector.load %arg7[%c0_14, %c0_15] : memref<48x32xbf16, #tpu.memory_space<vmem>>, vector<48x32xbf16>
    %cst_16 = arith.constant dense<0.000000e+00> : vector<16x32xf32>
    %20 = tpu.matmul %18, %19, %cst_16 {dimension_numbers = #tpu.dot_dimension_numbers<[1], [0], [0], [1], [0, 0, 1, 1], [], []>} : vector<16x48xbf16>, vector<48x32xbf16>, vector<16x32xf32> -> vector<16x32xf32>
    %c1 = arith.constant 1 : index
    %c0_17 = arith.constant 0 : index
    %c0_18 = arith.constant 0 : index
    %21 = vector.load %arg10[%c1, %c0_17, %c0_18] : memref<4x1x32xf32, #tpu.memory_space<vmem>>, vector<1x1x32xf32>
    %22 = vector.shape_cast %21 : vector<1x1x32xf32> to vector<1x32xf32>
    %23 = vector.broadcast %22 : vector<1x32xf32> to vector<16x32xf32>
    %24 = arith.addf %20, %23 : vector<16x32xf32>
    %cst_19 = arith.constant 0.000000e+00 : f32
    %25 = vector.broadcast %cst_19 : f32 to vector<16x32xf32>
    %26 = arith.maximumf %24, %25 : vector<16x32xf32>
    %c0_20 = arith.constant 0 : index
    %c0_21 = arith.constant 0 : index
    %c0_22 = arith.constant 0 : index
    %27 = vector.load %arg4[%c0_20, %c0_21, %c0_22] : memref<1x16x64xbf16, #tpu.memory_space<vmem>>, vector<1x16x64xbf16>
    %28 = vector.shape_cast %27 : vector<1x16x64xbf16> to vector<16x64xbf16>
    %cst_23 = arith.constant 0.000000e+00 : bf16
    %29 = vector.broadcast %cst_23 : bf16 to vector<16x64xbf16>
    %30 = arith.maximumf %28, %29 : vector<16x64xbf16>
    %c0_24 = arith.constant 0 : index
    %c0_25 = arith.constant 0 : index
    %31 = vector.load %arg8[%c0_24, %c0_25] : memref<64x32xbf16, #tpu.memory_space<vmem>>, vector<64x32xbf16>
    %cst_26 = arith.constant dense<0.000000e+00> : vector<16x32xf32>
    %32 = tpu.matmul %30, %31, %cst_26 {dimension_numbers = #tpu.dot_dimension_numbers<[1], [0], [0], [1], [0, 0, 1, 1], [], []>} : vector<16x64xbf16>, vector<64x32xbf16>, vector<16x32xf32> -> vector<16x32xf32>
    %c2 = arith.constant 2 : index
    %c0_27 = arith.constant 0 : index
    %c0_28 = arith.constant 0 : index
    %33 = vector.load %arg10[%c2, %c0_27, %c0_28] : memref<4x1x32xf32, #tpu.memory_space<vmem>>, vector<1x1x32xf32>
    %34 = vector.shape_cast %33 : vector<1x1x32xf32> to vector<1x32xf32>
    %35 = vector.broadcast %34 : vector<1x32xf32> to vector<16x32xf32>
    %36 = arith.addf %32, %35 : vector<16x32xf32>
    %cst_29 = arith.constant 0.000000e+00 : f32
    %37 = vector.broadcast %cst_29 : f32 to vector<16x32xf32>
    %38 = arith.maximumf %36, %37 : vector<16x32xf32>
    %c0_30 = arith.constant 0 : index
    %c0_31 = arith.constant 0 : index
    %c0_32 = arith.constant 0 : index
    %39 = vector.load %arg5[%c0_30, %c0_31, %c0_32] : memref<1x16x32xbf16, #tpu.memory_space<vmem>>, vector<1x16x32xbf16>
    %40 = vector.shape_cast %39 : vector<1x16x32xbf16> to vector<16x32xbf16>
    %cst_33 = arith.constant 0.000000e+00 : bf16
    %41 = vector.broadcast %cst_33 : bf16 to vector<16x32xbf16>
    %42 = arith.maximumf %40, %41 : vector<16x32xbf16>
    %c0_34 = arith.constant 0 : index
    %c0_35 = arith.constant 0 : index
    %43 = vector.load %arg9[%c0_34, %c0_35] : memref<32x32xbf16, #tpu.memory_space<vmem>>, vector<32x32xbf16>
    %cst_36 = arith.constant dense<0.000000e+00> : vector<16x32xf32>
    %44 = tpu.matmul %42, %43, %cst_36 {dimension_numbers = #tpu.dot_dimension_numbers<[1], [0], [0], [1], [0, 0, 1, 1], [], []>} : vector<16x32xbf16>, vector<32x32xbf16>, vector<16x32xf32> -> vector<16x32xf32>
    %c3 = arith.constant 3 : index
    %c0_37 = arith.constant 0 : index
    %c0_38 = arith.constant 0 : index
    %45 = vector.load %arg10[%c3, %c0_37, %c0_38] : memref<4x1x32xf32, #tpu.memory_space<vmem>>, vector<1x1x32xf32>
    %46 = vector.shape_cast %45 : vector<1x1x32xf32> to vector<1x32xf32>
    %47 = vector.broadcast %46 : vector<1x32xf32> to vector<16x32xf32>
    %48 = arith.addf %44, %47 : vector<16x32xf32>
    %cst_39 = arith.constant 0.000000e+00 : f32
    %49 = vector.broadcast %cst_39 : f32 to vector<16x32xf32>
    %50 = arith.maximumf %48, %49 : vector<16x32xf32>
    %51 = tpu.concatenate %14, %26, %38, %50 in 1 : vector<16x32xf32>, vector<16x32xf32>, vector<16x32xf32>, vector<16x32xf32> -> vector<16x128xf32>
    %52 = arith.truncf %51 : vector<16x128xf32> to vector<16x128xbf16>
    %c0_40 = arith.constant 0 : index
    %c0_41 = arith.constant 0 : index
    %53 = vector.load %arg11[%c0_40, %c0_41] : memref<128x4xbf16, #tpu.memory_space<vmem>>, vector<128x4xbf16>
    %cst_42 = arith.constant dense<0.000000e+00> : vector<16x4xf32>
    %54 = tpu.matmul %52, %53, %cst_42 {dimension_numbers = #tpu.dot_dimension_numbers<[1], [0], [0], [1], [0, 0, 1, 1], [], []>} : vector<16x128xbf16>, vector<128x4xbf16>, vector<16x4xf32> -> vector<16x4xf32>
    %c0_43 = arith.constant 0 : index
    %c0_44 = arith.constant 0 : index
    %55 = vector.load %arg12[%c0_43, %c0_44] : memref<1x4xf32, #tpu.memory_space<vmem>>, vector<1x4xf32>
    %56 = vector.broadcast %55 : vector<1x4xf32> to vector<16x4xf32>
    %57 = arith.addf %54, %56 : vector<16x4xf32>
    %cst_45 = arith.constant dense<0xFF800000> : vector<16xf32>
    %58 = vector.multi_reduction <maximumf>, %57, %cst_45 [1] : vector<16x4xf32> to vector<16xf32>
    %59 = vector.shape_cast %58 : vector<16xf32> to vector<16x1xf32>
    %60 = vector.broadcast %59 : vector<16x1xf32> to vector<16x4xf32>
    %61 = arith.subf %57, %60 : vector<16x4xf32>
    %62 = math.exp %61 : vector<16x4xf32>
    %cst_46 = arith.constant dense<0.000000e+00> : vector<16xf32>
    %63 = vector.multi_reduction <add>, %62, %cst_46 [1] : vector<16x4xf32> to vector<16xf32>
    %64 = vector.shape_cast %63 : vector<16xf32> to vector<16x1xf32>
    %65 = tpu.reciprocal %64 {approx = true} : vector<16x1xf32> -> vector<16x1xf32>
    %66 = vector.broadcast %65 : vector<16x1xf32> to vector<16x4xf32>
    %67 = arith.mulf %62, %66 : vector<16x4xf32>
    %68 = arith.truncf %67 : vector<16x4xf32> to vector<16x4xbf16>
    %c0_47 = arith.constant 0 : index
    %c0_48 = arith.constant 0 : index
    %69 = vector.load %arg13[%c0_47, %c0_48] : memref<4x128xbf16, #tpu.memory_space<vmem>>, vector<4x128xbf16>
    %cst_49 = arith.constant dense<0.000000e+00> : vector<16x128xf32>
    %70 = tpu.matmul %68, %69, %cst_49 {dimension_numbers = #tpu.dot_dimension_numbers<[1], [0], [0], [1], [0, 0, 1, 1], [], []>} : vector<16x4xbf16>, vector<4x128xbf16>, vector<16x128xf32> -> vector<16x128xf32>
    %71 = arith.mulf %51, %70 : vector<16x128xf32>
    %cst_50 = arith.constant dense<0.000000e+00> : vector<16xf32>
    %72 = vector.multi_reduction <add>, %71, %cst_50 [1] : vector<16x128xf32> to vector<16xf32>
    %73 = vector.shape_cast %72 : vector<16xf32> to vector<16x1xf32>
    %cst_51 = arith.constant 1.280000e+02 : f32
    %74 = vector.broadcast %cst_51 : f32 to vector<16x1xf32>
    %75 = arith.divf %73, %74 : vector<16x1xf32>
    %76 = vector.broadcast %75 : vector<16x1xf32> to vector<16x128xf32>
    %77 = arith.subf %71, %76 : vector<16x128xf32>
    %78 = arith.mulf %77, %77 : vector<16x128xf32>
    %cst_52 = arith.constant dense<0.000000e+00> : vector<16xf32>
    %79 = vector.multi_reduction <add>, %78, %cst_52 [1] : vector<16x128xf32> to vector<16xf32>
    %80 = vector.shape_cast %79 : vector<16xf32> to vector<16x1xf32>
    %cst_53 = arith.constant 1.280000e+02 : f32
    %81 = vector.broadcast %cst_53 : f32 to vector<16x1xf32>
    %82 = arith.divf %80, %81 : vector<16x1xf32>
    %cst_54 = arith.constant 9.99999974E-6 : f32
    %83 = vector.broadcast %cst_54 : f32 to vector<16x1xf32>
    %84 = arith.addf %82, %83 : vector<16x1xf32>
    %85 = math.rsqrt %84 : vector<16x1xf32>
    %86 = vector.broadcast %85 : vector<16x1xf32> to vector<16x128xf32>
    %87 = arith.mulf %77, %86 : vector<16x128xf32>
    %c0_55 = arith.constant 0 : index
    %c0_56 = arith.constant 0 : index
    %88 = vector.load %arg14[%c0_55, %c0_56] : memref<1x128xf32, #tpu.memory_space<vmem>>, vector<1x128xf32>
    %89 = vector.broadcast %88 : vector<1x128xf32> to vector<16x128xf32>
    %90 = arith.mulf %87, %89 : vector<16x128xf32>
    %c0_57 = arith.constant 0 : index
    %c0_58 = arith.constant 0 : index
    %91 = vector.load %arg15[%c0_57, %c0_58] : memref<1x128xf32, #tpu.memory_space<vmem>>, vector<1x128xf32>
    %92 = vector.broadcast %91 : vector<1x128xf32> to vector<16x128xf32>
    %93 = arith.addf %90, %92 : vector<16x128xf32>
    %94 = arith.truncf %93 : vector<16x128xf32> to vector<16x128xbf16>
    %c0_59 = arith.constant 0 : index
    %c0_60 = arith.constant 0 : index
    %95 = vector.load %arg16[%c0_59, %c0_60] : memref<128x512xbf16, #tpu.memory_space<vmem>>, vector<128x512xbf16>
    %cst_61 = arith.constant dense<0.000000e+00> : vector<16x512xf32>
    %96 = tpu.matmul %94, %95, %cst_61 {dimension_numbers = #tpu.dot_dimension_numbers<[1], [0], [0], [1], [0, 0, 1, 1], [], []>} : vector<16x128xbf16>, vector<128x512xbf16>, vector<16x512xf32> -> vector<16x512xf32>
    %c0_62 = arith.constant 0 : index
    %c0_63 = arith.constant 0 : index
    %97 = vector.load %arg17[%c0_62, %c0_63] : memref<1x512xf32, #tpu.memory_space<vmem>>, vector<1x512xf32>
    %98 = vector.broadcast %97 : vector<1x512xf32> to vector<16x512xf32>
    %99 = arith.addf %96, %98 : vector<16x512xf32>
    %cst_64 = arith.constant 0.000000e+00 : f32
    %100 = vector.broadcast %cst_64 : f32 to vector<16x512xf32>
    %101 = arith.maximumf %99, %100 : vector<16x512xf32>
    %102 = arith.truncf %101 : vector<16x512xf32> to vector<16x512xbf16>
    %c0_65 = arith.constant 0 : index
    %c0_66 = arith.constant 0 : index
    %103 = vector.load %arg18[%c0_65, %c0_66] : memref<512x512xbf16, #tpu.memory_space<vmem>>, vector<512x512xbf16>
    %cst_67 = arith.constant dense<0.000000e+00> : vector<16x512xf32>
    %104 = tpu.matmul %102, %103, %cst_67 {dimension_numbers = #tpu.dot_dimension_numbers<[1], [0], [0], [1], [0, 0, 1, 1], [], []>} : vector<16x512xbf16>, vector<512x512xbf16>, vector<16x512xf32> -> vector<16x512xf32>
    %c0_68 = arith.constant 0 : index
    %c0_69 = arith.constant 0 : index
    %105 = vector.load %arg19[%c0_68, %c0_69] : memref<1x512xf32, #tpu.memory_space<vmem>>, vector<1x512xf32>
    %106 = vector.broadcast %105 : vector<1x512xf32> to vector<16x512xf32>
    %107 = arith.addf %104, %106 : vector<16x512xf32>
    %108 = vector.extract_strided_slice %107 {offsets = [0, 0], sizes = [16, 256], strides = [1, 1]} : vector<16x512xf32> to vector<16x256xf32>
    %109 = math.tanh %108 : vector<16x256xf32>
    %110 = vector.extract_strided_slice %107 {offsets = [0, 256], sizes = [16, 256], strides = [1, 1]} : vector<16x512xf32> to vector<16x256xf32>
    %111 = arith.negf %110 : vector<16x256xf32>
    %112 = math.exp %111 : vector<16x256xf32>
    %cst_70 = arith.constant 1.000000e+00 : f32
    %113 = vector.broadcast %cst_70 : f32 to vector<16x256xf32>
    %114 = arith.addf %113, %112 : vector<16x256xf32>
    %115 = arith.divf %113, %114 : vector<16x256xf32>
    %116 = arith.mulf %109, %115 : vector<16x256xf32>
    %117 = arith.truncf %116 : vector<16x256xf32> to vector<16x256xbf16>
    %c0_71 = arith.constant 0 : index
    %c0_72 = arith.constant 0 : index
    %118 = vector.load %arg20[%c0_71, %c0_72] : memref<256x2xbf16, #tpu.memory_space<vmem>>, vector<256x2xbf16>
    %cst_73 = arith.constant dense<0.000000e+00> : vector<16x2xf32>
    %119 = tpu.matmul %117, %118, %cst_73 {dimension_numbers = #tpu.dot_dimension_numbers<[1], [0], [0], [1], [0, 0, 1, 1], [], []>} : vector<16x256xbf16>, vector<256x2xbf16>, vector<16x2xf32> -> vector<16x2xf32>
    %c0_74 = arith.constant 0 : index
    %c0_75 = arith.constant 0 : index
    %120 = vector.load %arg21[%c0_74, %c0_75] : memref<1x2xf32, #tpu.memory_space<vmem>>, vector<1x2xf32>
    %121 = vector.broadcast %120 : vector<1x2xf32> to vector<16x2xf32>
    %122 = arith.addf %119, %121 : vector<16x2xf32>
    %c0_76 = arith.constant 0 : index
    %c0_77 = arith.constant 0 : index
    %123 = vector.load %arg23[%c0_76, %c0_77] : memref<1x2xf32, #tpu.memory_space<vmem>>, vector<1x2xf32>
    %cst_78 = arith.constant dense<0xFF800000> : vector<2xf32>
    %124 = vector.multi_reduction <maximumf>, %122, %cst_78 [0] : vector<16x2xf32> to vector<2xf32>
    %125 = vector.shape_cast %124 : vector<2xf32> to vector<1x2xf32>
    %126 = arith.maximumf %123, %125 : vector<1x2xf32>
    %127 = arith.subf %123, %126 : vector<1x2xf32>
    %128 = math.exp %127 : vector<1x2xf32>
    %129 = vector.broadcast %126 : vector<1x2xf32> to vector<16x2xf32>
    %130 = arith.subf %122, %129 : vector<16x2xf32>
    %131 = math.exp %130 : vector<16x2xf32>
    %c0_79 = arith.constant 0 : index
    %c0_80 = arith.constant 0 : index
    %132 = vector.load %arg24[%c0_79, %c0_80] : memref<1x2xf32, #tpu.memory_space<vmem>>, vector<1x2xf32>
    %133 = arith.mulf %128, %132 : vector<1x2xf32>
    %cst_81 = arith.constant dense<0.000000e+00> : vector<2xf32>
    %134 = vector.multi_reduction <add>, %131, %cst_81 [0] : vector<16x2xf32> to vector<2xf32>
    %135 = vector.shape_cast %134 : vector<2xf32> to vector<1x2xf32>
    %136 = arith.addf %133, %135 : vector<1x2xf32>
    %c0_82 = arith.constant 0 : index
    %c0_83 = arith.constant 0 : index
    %137 = vector.load %arg24[%c0_82, %c0_83] : memref<1x2xf32, #tpu.memory_space<vmem>>, vector<1x2xf32>
    tpu.vector_store %arg24[%c0_82, %c0_83], %136 {strides = array<i32>} : memref<1x2xf32, #tpu.memory_space<vmem>>, vector<1x2xf32>,
    %138 = tpu.transpose %128, [1, 0] : vector<1x2xf32> -> vector<2x1xf32>
    %c0_84 = arith.constant 0 : index
    %c0_85 = arith.constant 0 : index
    %139 = vector.load %arg25[%c0_84, %c0_85] : memref<2x512xf32, #tpu.memory_space<vmem>>, vector<2x512xf32>
    %140 = vector.broadcast %138 : vector<2x1xf32> to vector<2x512xf32>
    %141 = arith.mulf %139, %140 : vector<2x512xf32>
    %142 = arith.truncf %131 : vector<16x2xf32> to vector<16x2xbf16>
    %cst_86 = arith.constant dense<0.000000e+00> : vector<2x512xf32>
    %143 = tpu.matmul %142, %102, %cst_86 {dimension_numbers = #tpu.dot_dimension_numbers<[0], [0], [1], [1], [0, 1, 1, 1], [], []>} : vector<16x2xbf16>, vector<16x512xbf16>, vector<2x512xf32> -> vector<2x512xf32>
    %144 = arith.addf %141, %143 : vector<2x512xf32>
    %c0_87 = arith.constant 0 : index
    %c0_88 = arith.constant 0 : index
    %145 = vector.load %arg25[%c0_87, %c0_88] : memref<2x512xf32, #tpu.memory_space<vmem>>, vector<2x512xf32>
    tpu.vector_store %arg25[%c0_87, %c0_88], %144 {strides = array<i32>} : memref<2x512xf32, #tpu.memory_space<vmem>>, vector<2x512xf32>,
    %c0_89 = arith.constant 0 : index
    %c0_90 = arith.constant 0 : index
    %146 = vector.load %arg23[%c0_89, %c0_90] : memref<1x2xf32, #tpu.memory_space<vmem>>, vector<1x2xf32>
    tpu.vector_store %arg23[%c0_89, %c0_90], %126 {strides = array<i32>} : memref<1x2xf32, #tpu.memory_space<vmem>>, vector<1x2xf32>,
    %c1_i32 = arith.constant 1 : i32
    %147 = arith.cmpi eq, %arg1, %c1_i32 : i32
    %148 = arith.extui %147 : i1 to i32
    %c0_i32_91 = arith.constant 0 : i32
    %149 = arith.cmpi ne, %148, %c0_i32_91 : i32
    scf.if %149 {
      %c0_92 = arith.constant 0 : index
      %c0_93 = arith.constant 0 : index
      %150 = vector.load %arg24[%c0_92, %c0_93] : memref<1x2xf32, #tpu.memory_space<vmem>>, vector<1x2xf32>
      %151 = tpu.reciprocal %150 {approx = true} : vector<1x2xf32> -> vector<1x2xf32>
      %152 = tpu.transpose %151, [1, 0] : vector<1x2xf32> -> vector<2x1xf32>
      %c0_94 = arith.constant 0 : index
      %c0_95 = arith.constant 0 : index
      %153 = vector.load %arg25[%c0_94, %c0_95] : memref<2x512xf32, #tpu.memory_space<vmem>>, vector<2x512xf32>
      %154 = vector.broadcast %152 : vector<2x1xf32> to vector<2x512xf32>
      %155 = arith.mulf %153, %154 : vector<2x512xf32>
      %c0_96 = arith.constant 0 : index
      %c0_97 = arith.constant 0 : index
      %c0_98 = arith.constant 0 : index
      %156 = vector.load %arg22[%c0_96, %c0_97, %c0_98] : memref<1x2x512xf32, #tpu.memory_space<vmem>>, vector<1x2x512xf32>
      %157 = vector.shape_cast %156 : vector<1x2x512xf32> to vector<2x512xf32>
      %158 = vector.shape_cast %155 : vector<2x512xf32> to vector<1x2x512xf32>
      tpu.vector_store %arg22[%c0_96, %c0_97, %c0_98], %158 {strides = array<i32>} : memref<1x2x512xf32, #tpu.memory_space<vmem>>, vector<1x2x512xf32>,
    } else {
    }
    return
  }
  func.func @transform_0(%arg0: i32, %arg1: i32) -> (i32, i32, i32) {
    %c0_i32 = arith.constant 0 : i32
    %c0_i32_0 = arith.constant 0 : i32
    return %arg0, %arg1, %c0_i32 : i32, i32, i32
  }
  func.func @transform_1(%arg0: i32, %arg1: i32) -> (i32, i32, i32) {
    %c0_i32 = arith.constant 0 : i32
    %c0_i32_0 = arith.constant 0 : i32
    return %arg0, %arg1, %c0_i32 : i32, i32, i32
  }
  func.func @transform_2(%arg0: i32, %arg1: i32) -> (i32, i32, i32) {
    %c0_i32 = arith.constant 0 : i32
    %c0_i32_0 = arith.constant 0 : i32
    return %arg0, %arg1, %c0_i32 : i32, i32, i32
  }
  func.func @transform_3(%arg0: i32, %arg1: i32) -> (i32, i32, i32) {
    %c0_i32 = arith.constant 0 : i32
    %c0_i32_0 = arith.constant 0 : i32
    return %arg0, %arg1, %c0_i32 : i32, i32, i32
  }
  func.func @transform_4(%arg0: i32, %arg1: i32) -> (i32, i32) {
    %c0_i32 = arith.constant 0 : i32
    %c0_i32_0 = arith.constant 0 : i32
    %c0_i32_1 = arith.constant 0 : i32
    return %c0_i32, %c0_i32_0 : i32, i32
  }
  func.func @transform_5(%arg0: i32, %arg1: i32) -> (i32, i32) {
    %c0_i32 = arith.constant 0 : i32
    %c0_i32_0 = arith.constant 0 : i32
    %c0_i32_1 = arith.constant 0 : i32
    return %c0_i32, %c0_i32_0 : i32, i32
  }
  func.func @transform_6(%arg0: i32, %arg1: i32) -> (i32, i32) {
    %c0_i32 = arith.constant 0 : i32
    %c0_i32_0 = arith.constant 0 : i32
    %c0_i32_1 = arith.constant 0 : i32
    return %c0_i32, %c0_i32_0 : i32, i32
  }
  func.func @transform_7(%arg0: i32, %arg1: i32) -> (i32, i32) {
    %c0_i32 = arith.constant 0 : i32
    %c0_i32_0 = arith.constant 0 : i32
    %c0_i32_1 = arith.constant 0 : i32
    return %c0_i32, %c0_i32_0 : i32, i32
  }
  func.func @transform_8(%arg0: i32, %arg1: i32) -> (i32, i32, i32) {
    %c0_i32 = arith.constant 0 : i32
    %c0_i32_0 = arith.constant 0 : i32
    %c0_i32_1 = arith.constant 0 : i32
    %c0_i32_2 = arith.constant 0 : i32
    return %c0_i32, %c0_i32_0, %c0_i32_1 : i32, i32, i32
  }
  func.func @transform_9(%arg0: i32, %arg1: i32) -> (i32, i32) {
    %c0_i32 = arith.constant 0 : i32
    %c0_i32_0 = arith.constant 0 : i32
    %c0_i32_1 = arith.constant 0 : i32
    return %c0_i32, %c0_i32_0 : i32, i32
  }
  func.func @transform_10(%arg0: i32, %arg1: i32) -> (i32, i32) {
    %c0_i32 = arith.constant 0 : i32
    %c0_i32_0 = arith.constant 0 : i32
    %c0_i32_1 = arith.constant 0 : i32
    return %c0_i32, %c0_i32_0 : i32, i32
  }
  func.func @transform_11(%arg0: i32, %arg1: i32) -> (i32, i32) {
    %c0_i32 = arith.constant 0 : i32
    %c0_i32_0 = arith.constant 0 : i32
    %c0_i32_1 = arith.constant 0 : i32
    return %c0_i32, %c0_i32_0 : i32, i32
  }
  func.func @transform_12(%arg0: i32, %arg1: i32) -> (i32, i32) {
    %c0_i32 = arith.constant 0 : i32
    %c0_i32_0 = arith.constant 0 : i32
    %c0_i32_1 = arith.constant 0 : i32
    return %c0_i32, %c0_i32_0 : i32, i32
  }
  func.func @transform_13(%arg0: i32, %arg1: i32) -> (i32, i32) {
    %c0_i32 = arith.constant 0 : i32
    %c0_i32_0 = arith.constant 0 : i32
    %c0_i32_1 = arith.constant 0 : i32
    return %c0_i32, %c0_i32_0 : i32, i32
  }
  func.func @transform_14(%arg0: i32, %arg1: i32) -> (i32, i32) {
    %c0_i32 = arith.constant 0 : i32
    %c0_i32_0 = arith.constant 0 : i32
    %c0_i32_1 = arith.constant 0 : i32
    return %c0_i32, %c0_i32_0 : i32, i32
  }
  func.func @transform_15(%arg0: i32, %arg1: i32) -> (i32, i32) {
    %c0_i32 = arith.constant 0 : i32
    %c0_i32_0 = arith.constant 0 : i32
    %c0_i32_1 = arith.constant 0 : i32
    return %c0_i32, %c0_i32_0 : i32, i32
  }
  func.func @transform_16(%arg0: i32, %arg1: i32) -> (i32, i32) {
    %c0_i32 = arith.constant 0 : i32
    %c0_i32_0 = arith.constant 0 : i32
    %c0_i32_1 = arith.constant 0 : i32
    return %c0_i32, %c0_i32_0 : i32, i32
  }
  func.func @transform_17(%arg0: i32, %arg1: i32) -> (i32, i32) {
    %c0_i32 = arith.constant 0 : i32
    %c0_i32_0 = arith.constant 0 : i32
    %c0_i32_1 = arith.constant 0 : i32
    return %c0_i32, %c0_i32_0 : i32, i32
  }
  func.func @transform_18(%arg0: i32, %arg1: i32) -> (i32, i32) {
    %c0_i32 = arith.constant 0 : i32
    %c0_i32_0 = arith.constant 0 : i32
    %c0_i32_1 = arith.constant 0 : i32
    return %c0_i32, %c0_i32_0 : i32, i32
  }
  func.func @transform_19(%arg0: i32, %arg1: i32) -> (i32, i32) {
    %c0_i32 = arith.constant 0 : i32
    %c0_i32_0 = arith.constant 0 : i32
    %c0_i32_1 = arith.constant 0 : i32
    return %c0_i32, %c0_i32_0 : i32, i32
  }
  func.func @transform_20(%arg0: i32, %arg1: i32) -> (i32, i32, i32) {
    %c0_i32 = arith.constant 0 : i32
    %c0_i32_0 = arith.constant 0 : i32
    %c0_i32_1 = arith.constant 0 : i32
    return %arg0, %c0_i32, %c0_i32_0 : i32, i32, i32
  }
}

</mosaic_0001>

<llo_original>
// kernel: tpu_custom_call.1
$region0: #{tpu_custom_call.1}
  #allocation0 [shape = 'u32[]', space=smem, size = 0x4, offset = 0x4, fixed_abs, tag = 'smem constant byte address 0x4 - core index']
  #allocation1 [shape = 'u32[144,128]{1,0:T(1,128)}', space=vmem, size = 0x12000, scoped, tag = 'internal scratch']
  #allocation2 [shape = 'f32[1,2]{1,0:T(1,128)}', space=vmem, size = 0x200, scoped, tag = 'scratch operand']
  #allocation3 [shape = 'f32[1,2]{1,0:T(1,128)}', space=vmem, size = 0x200, scoped, tag = 'scratch operand']
  #allocation4 [shape = 'f32[2,512]{1,0:T(2,128)}', space=vmem, size = 0x1000, scoped, tag = 'scratch operand']
  %s0 = inlined_call_operand.vmem [shape: bf16[2,32,48], index: 0, kind: input, shape index: {}]
  %s1 = inlined_call_operand.vmem [shape: bf16[2,32,48], index: 1, kind: input, shape index: {}]
  %s2 = inlined_call_operand.vmem [shape: bf16[2,32,64], index: 2, kind: input, shape index: {}]
  %s3 = inlined_call_operand.hbm [shape: bf16[2,32,32], index: 3, kind: input, shape index: {}]
  %s4 = inlined_call_operand.vmem [shape: bf16[48,32], index: 4, kind: input, shape index: {}]
  %s5 = inlined_call_operand.vmem [shape: bf16[48,32], index: 5, kind: input, shape index: {}]
  %s6 = inlined_call_operand.vmem [shape: bf16[64,32], index: 6, kind: input, shape index: {}]
  %s7 = inlined_call_operand.vmem [shape: bf16[32,32], index: 7, kind: input, shape index: {}]
  %s8 = inlined_call_operand.vmem [shape: f32[4,1,32], index: 8, kind: input, shape index: {}]
  %s9 = inlined_call_operand.vmem [shape: bf16[128,4], index: 9, kind: input, shape index: {}]
  %s10 = inlined_call_operand.vmem [shape: f32[1,4], index: 10, kind: input, shape index: {}]
  %s11 = inlined_call_operand.hbm [shape: bf16[4,128], index: 11, kind: input, shape index: {}]
  %s12 = inlined_call_operand.hbm [shape: f32[1,128], index: 12, kind: input, shape index: {}]
  %s13 = inlined_call_operand.hbm [shape: f32[1,128], index: 13, kind: input, shape index: {}]
  %s14 = inlined_call_operand.vmem [shape: bf16[128,512], index: 14, kind: input, shape index: {}]
  %s15 = inlined_call_operand.vmem [shape: f32[1,512], index: 15, kind: input, shape index: {}]
  %s16 = inlined_call_operand.hbm [shape: bf16[512,512], index: 16, kind: input, shape index: {}]
  %s17 = inlined_call_operand.vmem [shape: f32[1,512], index: 17, kind: input, shape index: {}]
  %s18 = inlined_call_operand.vmem [shape: bf16[256,2], index: 18, kind: input, shape index: {}]
  %s19 = inlined_call_operand.vmem [shape: f32[1,2], index: 19, kind: input, shape index: {}]
  %s20 = inlined_call_operand.hbm [shape: f32[2,2,512], index: 20, kind: output, shape index: {}]
  %s21 = sld [smem:[#allocation0]]
  $region141: #{tpu_custom_call.1} parent=0
    _
  %s23 = ssub.s32 1, %s21
  %s24 = scalar_select 0, %s23, %s21
  $region1: #{tpu_custom_call.1} parent=0
    #allocation5 [shape = 'u8[8192]{0}', space=vmem, size = 0x2000, scoped, tag = 'input window, operand 3']
    #allocation6 [shape = 's32[2]{0}', space=sflag, size = 0x8, scoped, tag = 'scoped memory for tpu_custom_call.1']
    #allocation7 [shape = 's32[2]{0}', space=sflag, size = 0x8, scoped, tag = 'scoped memory for tpu_custom_call.1']
    #allocation8 [shape = 'u8[1024]{0}', space=vmem, size = 0x400, scoped, tag = 'input window, operand 11, single buffered']
    #allocation9 [shape = 's32[1]{0}', space=sflag, size = 0x4, scoped, tag = 'scoped memory for tpu_custom_call.1']
    #allocation10 [shape = 'u8[512]{0}', space=vmem, size = 0x400, scoped, tag = 'input window, operand 12, single buffered']
    #allocation11 [shape = 'u8[512]{0}', space=vmem, size = 0x400, scoped, tag = 'input window, operand 13, single buffered']
    #allocation12 [shape = 's32[1]{0}', space=sflag, size = 0x4, scoped, tag = 'scoped memory for tpu_custom_call.1']
    #allocation13 [shape = 'u8[524288]{0}', space=vmem, size = 0x80000, scoped, tag = 'input window, operand 16, single buffered']
    #allocation14 [shape = 'u8[8192]{0}', space=vmem, size = 0x2000, scoped, tag = 'output window, operand 0']
    %25 = vsyncpa [#allocation6], 0
    %s26 = scalar_lea.sflag [#allocation6], 1
    %27 = vsyncpa %s26, 0
    %28 = vsyncpa [#allocation9], 0
    %29 = vsyncpa [#allocation12], 0
    %30 = vsyncpa [#allocation7], 0
    %s31 = scalar_lea.sflag [#allocation7], 1
    %32 = vsyncpa %s31, 0
    loop: start=0, step=1, limit=6
    $region2: #{tpu_custom_call.1} parent=1 // loop_pre_header
      _
    $region3: #{tpu_custom_call.1} parent=1 // loop_header
      %s34 = sphi 0, %s38
      %p35 = scmp.ge.s32.totalorder %s34, 6
      %s41 = sphi 0, %s53
      %s42 = sphi 0, %s49
      %s43 = sphi 0, %s41
      %s44 = sphi 0, %s42
      %s45 = sphi 0, %s43
      %s46 = sphi 0, %s44
      %s58 = sphi 0, %s60
      %s61 = sphi 0, %s58
      %s62 = sphi 0, %s61
      %s78 = sphi 0, %s62
      %s86 = sphi 0, %s88
      %s89 = sphi 0, %s86
      %s90 = sphi 0, %s89
      %s106 = sphi 0, %s90
      %s114 = sphi 0, %s116
      %s117 = sphi 0, %s114
      %s118 = sphi 0, %s117
      %s134 = sphi 0, %s118
      %s142 = sphi 0, %s144
      %s145 = sphi 0, %s142
      %s146 = sphi 0, %s145
      %s162 = sphi 0, %s146
      %s166 = sphi 0, %s166
      %s168 = sphi 0, %s166
      %s169 = sphi 0, %s168
      %s183 = sphi 0, %s169
      %s187 = sphi 0, %s187
      %s189 = sphi 0, %s187
      %s190 = sphi 0, %s189
      %s204 = sphi 0, %s190
      %s208 = sphi 0, %s208
      %s210 = sphi 0, %s208
      %s211 = sphi 0, %s210
      %s225 = sphi 0, %s211
      %s229 = sphi 0, %s229
      %s231 = sphi 0, %s229
      %s232 = sphi 0, %s231
      %s246 = sphi 0, %s232
      %s250 = sphi 0, %s250
      %s252 = sphi 0, %s250
      %s253 = sphi 0, %s252
      %s267 = sphi 0, %s253
      %s271 = sphi 0, %s271
      %s273 = sphi 0, %s271
      %s274 = sphi 0, %s273
      %s288 = sphi 0, %s274
      %s292 = sphi 0, %s292
      %s294 = sphi 0, %s292
      %s295 = sphi 0, %s294
      %s309 = sphi 0, %s295
      %s313 = sphi 0, %s313
      %s315 = sphi 0, %s313
      %s316 = sphi 0, %s315
      %s330 = sphi 0, %s316
      %s334 = sphi 0, %s334
      %s336 = sphi 0, %s334
      %s337 = sphi 0, %s336
      %s351 = sphi 0, %s337
      %s355 = sphi 0, %s355
      %s357 = sphi 0, %s355
      %s358 = sphi 0, %s357
      %s372 = sphi 0, %s358
      %s376 = sphi 0, %s376
      %s378 = sphi 0, %s376
      %s379 = sphi 0, %s378
      %s393 = sphi 0, %s379
      %s397 = sphi 0, %s397
      %s399 = sphi 0, %s397
      %s400 = sphi 0, %s399
      %s414 = sphi 0, %s400
      %s418 = sphi 0, %s418
      %s420 = sphi 0, %s418
      %s421 = sphi 0, %s420
      %s435 = sphi 0, %s421
      %s439 = sphi 0, %s439
      %s441 = sphi 0, %s439
      %s442 = sphi 0, %s441
      %s456 = sphi 0, %s442
      %s460 = sphi 0, %s460
      %s462 = sphi 0, %s460
      %s463 = sphi 0, %s462
      %s477 = sphi 0, %s463
      %s481 = sphi 0, %s481
      %s483 = sphi 0, %s481
      %s484 = sphi 0, %s483
      %s498 = sphi 0, %s484
      %s504 = sphi 0, %s506
      %s507 = sphi 0, %s504
      %s508 = sphi 0, %s507
      %s524 = sphi 0, %s508
    $region4: #{tpu_custom_call.1} parent=1 // loop_header_branch
      %37 = sbr.rel (%p35) target = $region8
    $region5: #{tpu_custom_call.1} parent=1 // loop_body
      %s39 = ssub.s32 %s34, 1
      %s40 = ssub.s32 %s34, 2
      %s47 = sadd.s32 1, %s42
      %p48 = scmp.ge.s32.totalorder %s47, 2
      %s49 = scalar_select %p48, 0, %s47
      %s50 = sadd.s32 1, %s41
      %s51 = scalar_select %p48, %s50, %s41
      %p52 = scmp.ge.s32.totalorder %s51, 2
      %s53 = scalar_select %p52, 0, %s51
      %s54 = ssub.s32 %s41, %s53
      %s55 = ssub.s32 %s42, %s49
      %s56 = sor.u32 %s54, %s55
      %p57 = scmp.eq.s32.totalorder %s56, 0
      %s59 = sadd.s32 %s58, 1
      %s60 = scalar_select %p57, %s58, %s59
      %p63 = pneg %p57
      %p64 = scmp.eq.s32.totalorder %s34, 3
      %p65 = por %p63, %p64
      %p66 = scmp.ne.s32.totalorder %s58, %s61
      %p67 = scmp.eq.s32.totalorder %s34, 0
      %p68 = por %p66, %p67
      %p69 = scmp.ne.s32.totalorder %s58, %s61
      %p70 = scmp.eq.s32.totalorder %s39, 3
      %p71 = por %p69, %p70
      %p72 = scmp.ne.s32.totalorder %s61, %s62
      %p73 = scmp.eq.s32.totalorder %s39, 0
      %p74 = por %p72, %p73
      %p75 = scmp.ne.s32.totalorder %s61, %s62
      %p76 = scmp.eq.s32.totalorder %s40, 3
      %p77 = por %p75, %p76
      %p79 = scmp.ne.s32.totalorder %s62, %s78
      %p80 = scmp.eq.s32.totalorder %s40, 0
      %p81 = por %p79, %p80
      %s82 = ssub.s32 %s41, %s53
      %s83 = ssub.s32 %s42, %s49
      %s84 = sor.u32 %s82, %s83
      %p85 = scmp.eq.s32.totalorder %s84, 0
      %s87 = sadd.s32 %s86, 1
      %s88 = scalar_select %p85, %s86, %s87
      %p91 = pneg %p85
      %p92 = scmp.eq.s32.totalorder %s34, 3
      %p93 = por %p91, %p92
      %p94 = scmp.ne.s32.totalorder %s86, %s89
      %p95 = scmp.eq.s32.totalorder %s34, 0
      %p96 = por %p94, %p95
      %p97 = scmp.ne.s32.totalorder %s86, %s89
      %p98 = scmp.eq.s32.totalorder %s39, 3
      %p99 = por %p97, %p98
      %p100 = scmp.ne.s32.totalorder %s89, %s90
      %p101 = scmp.eq.s32.totalorder %s39, 0
      %p102 = por %p100, %p101
      %p103 = scmp.ne.s32.totalorder %s89, %s90
      %p104 = scmp.eq.s32.totalorder %s40, 3
      %p105 = por %p103, %p104
      %p107 = scmp.ne.s32.totalorder %s90, %s106
      %p108 = scmp.eq.s32.totalorder %s40, 0
      %p109 = por %p107, %p108
      %s110 = ssub.s32 %s41, %s53
      %s111 = ssub.s32 %s42, %s49
      %s112 = sor.u32 %s110, %s111
      %p113 = scmp.eq.s32.totalorder %s112, 0
      %s115 = sadd.s32 %s114, 1
      %s116 = scalar_select %p113, %s114, %s115
      %p119 = pneg %p113
      %p120 = scmp.eq.s32.totalorder %s34, 3
      %p121 = por %p119, %p120
      %p122 = scmp.ne.s32.totalorder %s114, %s117
      %p123 = scmp.eq.s32.totalorder %s34, 0
      %p124 = por %p122, %p123
      %p125 = scmp.ne.s32.totalorder %s114, %s117
      %p126 = scmp.eq.s32.totalorder %s39, 3
      %p127 = por %p125, %p126
      %p128 = scmp.ne.s32.totalorder %s117, %s118
      %p129 = scmp.eq.s32.totalorder %s39, 0
      %p130 = por %p128, %p129
      %p131 = scmp.ne.s32.totalorder %s117, %s118
      %p132 = scmp.eq.s32.totalorder %s40, 3
      %p133 = por %p131, %p132
      %p135 = scmp.ne.s32.totalorder %s118, %s134
      %p136 = scmp.eq.s32.totalorder %s40, 0
      %p137 = por %p135, %p136
      %s138 = ssub.s32 %s41, %s53
      %s139 = ssub.s32 %s42, %s49
      %s140 = sor.u32 %s138, %s139
      %p141 = scmp.eq.s32.totalorder %s140, 0
      %s143 = sadd.s32 %s142, 1
      %s144 = scalar_select %p141, %s142, %s143
      %p147 = pneg %p141
      %p148 = scmp.eq.s32.totalorder %s34, 3
      %p149 = por %p147, %p148
      %p150 = scmp.ne.s32.totalorder %s142, %s145
      %p151 = scmp.eq.s32.totalorder %s34, 0
      %p152 = por %p150, %p151
      %p153 = scmp.ne.s32.totalorder %s142, %s145
      %p154 = scmp.eq.s32.totalorder %s39, 3
      %p155 = por %p153, %p154
      %p156 = scmp.ne.s32.totalorder %s145, %s146
      %p157 = scmp.eq.s32.totalorder %s39, 0
      %p158 = por %p156, %p157
      %p159 = scmp.ne.s32.totalorder %s145, %s146
      %p160 = scmp.eq.s32.totalorder %s40, 3
      %p161 = por %p159, %p160
      %p163 = scmp.ne.s32.totalorder %s146, %s162
      %p164 = scmp.eq.s32.totalorder %s40, 0
      %p165 = por %p163, %p164
      %s167 = sadd.s32 %s166, 1
      %p170 = scmp.eq.s32.totalorder %s34, 3
      %p171 = scmp.ne.s32.totalorder %s166, %s168
      %p172 = scmp.eq.s32.totalorder %s34, 0
      %p173 = por %p171, %p172
      %p174 = scmp.ne.s32.totalorder %s166, %s168
      %p175 = scmp.eq.s32.totalorder %s39, 3
      %p176 = por %p174, %p175
      %p177 = scmp.ne.s32.totalorder %s168, %s169
      %p178 = scmp.eq.s32.totalorder %s39, 0
      %p179 = por %p177, %p178
      %p180 = scmp.ne.s32.totalorder %s168, %s169
      %p181 = scmp.eq.s32.totalorder %s40, 3
      %p182 = por %p180, %p181
      %p184 = scmp.ne.s32.totalorder %s169, %s183
      %p185 = scmp.eq.s32.totalorder %s40, 0
      %p186 = por %p184, %p185
      %s188 = sadd.s32 %s187, 1
      %p191 = scmp.eq.s32.totalorder %s34, 3
      %p192 = scmp.ne.s32.totalorder %s187, %s189
      %p193 = scmp.eq.s32.totalorder %s34, 0
      %p194 = por %p192, %p193
      %p195 = scmp.ne.s32.totalorder %s187, %s189
      %p196 = scmp.eq.s32.totalorder %s39, 3
      %p197 = por %p195, %p196
      %p198 = scmp.ne.s32.totalorder %s189, %s190
      %p199 = scmp.eq.s32.totalorder %s39, 0
      %p200 = por %p198, %p199
      %p201 = scmp.ne.s32.totalorder %s189, %s190
      %p202 = scmp.eq.s32.totalorder %s40, 3
      %p203 = por %p201, %p202
      %p205 = scmp.ne.s32.totalorder %s190, %s204
      %p206 = scmp.eq.s32.totalorder %s40, 0
      %p207 = por %p205, %p206
      %s209 = sadd.s32 %s208, 1
      %p212 = scmp.eq.s32.totalorder %s34, 3
      %p213 = scmp.ne.s32.totalorder %s208, %s210
      %p214 = scmp.eq.s32.totalorder %s34, 0
      %p215 = por %p213, %p214
      %p216 = scmp.ne.s32.totalorder %s208, %s210
      %p217 = scmp.eq.s32.totalorder %s39, 3
      %p218 = por %p216, %p217
      %p219 = scmp.ne.s32.totalorder %s210, %s211
      %p220 = scmp.eq.s32.totalorder %s39, 0
      %p221 = por %p219, %p220
      %p222 = scmp.ne.s32.totalorder %s210, %s211
      %p223 = scmp.eq.s32.totalorder %s40, 3
      %p224 = por %p222, %p223
      %p226 = scmp.ne.s32.totalorder %s211, %s225
      %p227 = scmp.eq.s32.totalorder %s40, 0
      %p228 = por %p226, %p227
      %s230 = sadd.s32 %s229, 1
      %p233 = scmp.eq.s32.totalorder %s34, 3
      %p234 = scmp.ne.s32.totalorder %s229, %s231
      %p235 = scmp.eq.s32.totalorder %s34, 0
      %p236 = por %p234, %p235
      %p237 = scmp.ne.s32.totalorder %s229, %s231
      %p238 = scmp.eq.s32.totalorder %s39, 3
      %p239 = por %p237, %p238
      %p240 = scmp.ne.s32.totalorder %s231, %s232
      %p241 = scmp.eq.s32.totalorder %s39, 0
      %p242 = por %p240, %p241
      %p243 = scmp.ne.s32.totalorder %s231, %s232
      %p244 = scmp.eq.s32.totalorder %s40, 3
      %p245 = por %p243, %p244
      %p247 = scmp.ne.s32.totalorder %s232, %s246
      %p248 = scmp.eq.s32.totalorder %s40, 0
      %p249 = por %p247, %p248
      %s251 = sadd.s32 %s250, 1
      %p254 = scmp.eq.s32.totalorder %s34, 3
      %p255 = scmp.ne.s32.totalorder %s250, %s252
      %p256 = scmp.eq.s32.totalorder %s34, 0
      %p257 = por %p255, %p256
      %p258 = scmp.ne.s32.totalorder %s250, %s252
      %p259 = scmp.eq.s32.totalorder %s39, 3
      %p260 = por %p258, %p259
      %p261 = scmp.ne.s32.totalorder %s252, %s253
      %p262 = scmp.eq.s32.totalorder %s39, 0
      %p263 = por %p261, %p262
      %p264 = scmp.ne.s32.totalorder %s252, %s253
      %p265 = scmp.eq.s32.totalorder %s40, 3
      %p266 = por %p264, %p265
      %p268 = scmp.ne.s32.totalorder %s253, %s267
      %p269 = scmp.eq.s32.totalorder %s40, 0
      %p270 = por %p268, %p269
      %s272 = sadd.s32 %s271, 1
      %p275 = scmp.eq.s32.totalorder %s34, 3
      %p276 = scmp.ne.s32.totalorder %s271, %s273
      %p277 = scmp.eq.s32.totalorder %s34, 0
      %p278 = por %p276, %p277
      %p279 = scmp.ne.s32.totalorder %s271, %s273
      %p280 = scmp.eq.s32.totalorder %s39, 3
      %p281 = por %p279, %p280
      %p282 = scmp.ne.s32.totalorder %s273, %s274
      %p283 = scmp.eq.s32.totalorder %s39, 0
      %p284 = por %p282, %p283
      %p285 = scmp.ne.s32.totalorder %s273, %s274
      %p286 = scmp.eq.s32.totalorder %s40, 3
      %p287 = por %p285, %p286
      %p289 = scmp.ne.s32.totalorder %s274, %s288
      %p290 = scmp.eq.s32.totalorder %s40, 0
      %p291 = por %p289, %p290
      %s293 = sadd.s32 %s292, 1
      %p296 = scmp.eq.s32.totalorder %s34, 3
      %p297 = scmp.ne.s32.totalorder %s292, %s294
      %p298 = scmp.eq.s32.totalorder %s34, 0
      %p299 = por %p297, %p298
      %p300 = scmp.ne.s32.totalorder %s292, %s294
      %p301 = scmp.eq.s32.totalorder %s39, 3
      %p302 = por %p300, %p301
      %p303 = scmp.ne.s32.totalorder %s294, %s295
      %p304 = scmp.eq.s32.totalorder %s39, 0
      %p305 = por %p303, %p304
      %p306 = scmp.ne.s32.totalorder %s294, %s295
      %p307 = scmp.eq.s32.totalorder %s40, 3
      %p308 = por %p306, %p307
      %p310 = scmp.ne.s32.totalorder %s295, %s309
      %p311 = scmp.eq.s32.totalorder %s40, 0
      %p312 = por %p310, %p311
      %s314 = sadd.s32 %s313, 1
      %p317 = scmp.eq.s32.totalorder %s34, 3
      %p318 = scmp.ne.s32.totalorder %s313, %s315
      %p319 = scmp.eq.s32.totalorder %s34, 0
      %p320 = por %p318, %p319
      %p321 = scmp.ne.s32.totalorder %s313, %s315
      %p322 = scmp.eq.s32.totalorder %s39, 3
      %p323 = por %p321, %p322
      %p324 = scmp.ne.s32.totalorder %s315, %s316
      %p325 = scmp.eq.s32.totalorder %s39, 0
      %p326 = por %p324, %p325
      %p327 = scmp.ne.s32.totalorder %s315, %s316
      %p328 = scmp.eq.s32.totalorder %s40, 3
      %p329 = por %p327, %p328
      %p331 = scmp.ne.s32.totalorder %s316, %s330
      %p332 = scmp.eq.s32.totalorder %s40, 0
      %p333 = por %p331, %p332
      %s335 = sadd.s32 %s334, 1
      %p338 = scmp.eq.s32.totalorder %s34, 3
      %p339 = scmp.ne.s32.totalorder %s334, %s336
      %p340 = scmp.eq.s32.totalorder %s34, 0
      %p341 = por %p339, %p340
      %p342 = scmp.ne.s32.totalorder %s334, %s336
      %p343 = scmp.eq.s32.totalorder %s39, 3
      %p344 = por %p342, %p343
      %p345 = scmp.ne.s32.totalorder %s336, %s337
      %p346 = scmp.eq.s32.totalorder %s39, 0
      %p347 = por %p345, %p346
      %p348 = scmp.ne.s32.totalorder %s336, %s337
      %p349 = scmp.eq.s32.totalorder %s40, 3
      %p350 = por %p348, %p349
      %p352 = scmp.ne.s32.totalorder %s337, %s351
      %p353 = scmp.eq.s32.totalorder %s40, 0
      %p354 = por %p352, %p353
      %s356 = sadd.s32 %s355, 1
      %p359 = scmp.eq.s32.totalorder %s34, 3
      %p360 = scmp.ne.s32.totalorder %s355, %s357
      %p361 = scmp.eq.s32.totalorder %s34, 0
      %p362 = por %p360, %p361
      %p363 = scmp.ne.s32.totalorder %s355, %s357
      %p364 = scmp.eq.s32.totalorder %s39, 3
      %p365 = por %p363, %p364
      %p366 = scmp.ne.s32.totalorder %s357, %s358
      %p367 = scmp.eq.s32.totalorder %s39, 0
      %p368 = por %p366, %p367
      %p369 = scmp.ne.s32.totalorder %s357, %s358
      %p370 = scmp.eq.s32.totalorder %s40, 3
      %p371 = por %p369, %p370
      %p373 = scmp.ne.s32.totalorder %s358, %s372
      %p374 = scmp.eq.s32.totalorder %s40, 0
      %p375 = por %p373, %p374
      %s377 = sadd.s32 %s376, 1
      %p380 = scmp.eq.s32.totalorder %s34, 3
      %p381 = scmp.ne.s32.totalorder %s376, %s378
      %p382 = scmp.eq.s32.totalorder %s34, 0
      %p383 = por %p381, %p382
      %p384 = scmp.ne.s32.totalorder %s376, %s378
      %p385 = scmp.eq.s32.totalorder %s39, 3
      %p386 = por %p384, %p385
      %p387 = scmp.ne.s32.totalorder %s378, %s379
      %p388 = scmp.eq.s32.totalorder %s39, 0
      %p389 = por %p387, %p388
      %p390 = scmp.ne.s32.totalorder %s378, %s379
      %p391 = scmp.eq.s32.totalorder %s40, 3
      %p392 = por %p390, %p391
      %p394 = scmp.ne.s32.totalorder %s379, %s393
      %p395 = scmp.eq.s32.totalorder %s40, 0
      %p396 = por %p394, %p395
      %s398 = sadd.s32 %s397, 1
      %p401 = scmp.eq.s32.totalorder %s34, 3
      %p402 = scmp.ne.s32.totalorder %s397, %s399
      %p403 = scmp.eq.s32.totalorder %s34, 0
      %p404 = por %p402, %p403
      %p405 = scmp.ne.s32.totalorder %s397, %s399
      %p406 = scmp.eq.s32.totalorder %s39, 3
      %p407 = por %p405, %p406
      %p408 = scmp.ne.s32.totalorder %s399, %s400
      %p409 = scmp.eq.s32.totalorder %s39, 0
      %p410 = por %p408, %p409
      %p411 = scmp.ne.s32.totalorder %s399, %s400
      %p412 = scmp.eq.s32.totalorder %s40, 3
      %p413 = por %p411, %p412
      %p415 = scmp.ne.s32.totalorder %s400, %s414
      %p416 = scmp.eq.s32.totalorder %s40, 0
      %p417 = por %p415, %p416
      %s419 = sadd.s32 %s418, 1
      %p422 = scmp.eq.s32.totalorder %s34, 3
      %p423 = scmp.ne.s32.totalorder %s418, %s420
      %p424 = scmp.eq.s32.totalorder %s34, 0
      %p425 = por %p423, %p424
      %p426 = scmp.ne.s32.totalorder %s418, %s420
      %p427 = scmp.eq.s32.totalorder %s39, 3
      %p428 = por %p426, %p427
      %p429 = scmp.ne.s32.totalorder %s420, %s421
      %p430 = scmp.eq.s32.totalorder %s39, 0
      %p431 = por %p429, %p430
      %p432 = scmp.ne.s32.totalorder %s420, %s421
      %p433 = scmp.eq.s32.totalorder %s40, 3
      %p434 = por %p432, %p433
      %p436 = scmp.ne.s32.totalorder %s421, %s435
      %p437 = scmp.eq.s32.totalorder %s40, 0
      %p438 = por %p436, %p437
      %s440 = sadd.s32 %s439, 1
      %p443 = scmp.eq.s32.totalorder %s34, 3
      %p444 = scmp.ne.s32.totalorder %s439, %s441
      %p445 = scmp.eq.s32.totalorder %s34, 0
      %p446 = por %p444, %p445
      %p447 = scmp.ne.s32.totalorder %s439, %s441
      %p448 = scmp.eq.s32.totalorder %s39, 3
      %p449 = por %p447, %p448
      %p450 = scmp.ne.s32.totalorder %s441, %s442
      %p451 = scmp.eq.s32.totalorder %s39, 0
      %p452 = por %p450, %p451
      %p453 = scmp.ne.s32.totalorder %s441, %s442
      %p454 = scmp.eq.s32.totalorder %s40, 3
      %p455 = por %p453, %p454
      %p457 = scmp.ne.s32.totalorder %s442, %s456
      %p458 = scmp.eq.s32.totalorder %s40, 0
      %p459 = por %p457, %p458
      %s461 = sadd.s32 %s460, 1
      %p464 = scmp.eq.s32.totalorder %s34, 3
      %p465 = scmp.ne.s32.totalorder %s460, %s462
      %p466 = scmp.eq.s32.totalorder %s34, 0
      %p467 = por %p465, %p466
      %p468 = scmp.ne.s32.totalorder %s460, %s462
      %p469 = scmp.eq.s32.totalorder %s39, 3
      %p470 = por %p468, %p469
      %p471 = scmp.ne.s32.totalorder %s462, %s463
      %p472 = scmp.eq.s32.totalorder %s39, 0
      %p473 = por %p471, %p472
      %p474 = scmp.ne.s32.totalorder %s462, %s463
      %p475 = scmp.eq.s32.totalorder %s40, 3
      %p476 = por %p474, %p475
      %p478 = scmp.ne.s32.totalorder %s463, %s477
      %p479 = scmp.eq.s32.totalorder %s40, 0
      %p480 = por %p478, %p479
      %s482 = sadd.s32 %s481, 1
      %p485 = scmp.eq.s32.totalorder %s34, 3
      %p486 = scmp.ne.s32.totalorder %s481, %s483
      %p487 = scmp.eq.s32.totalorder %s34, 0
      %p488 = por %p486, %p487
      %p489 = scmp.ne.s32.totalorder %s481, %s483
      %p490 = scmp.eq.s32.totalorder %s39, 3
      %p491 = por %p489, %p490
      %p492 = scmp.ne.s32.totalorder %s483, %s484
      %p493 = scmp.eq.s32.totalorder %s39, 0
      %p494 = por %p492, %p493
      %p495 = scmp.ne.s32.totalorder %s483, %s484
      %p496 = scmp.eq.s32.totalorder %s40, 3
      %p497 = por %p495, %p496
      %p499 = scmp.ne.s32.totalorder %s484, %s498
      %p500 = scmp.eq.s32.totalorder %s40, 0
      %p501 = por %p499, %p500
      %s502 = ssub.s32 %s41, %s53
      %p503 = scmp.eq.s32.totalorder %s502, 0
      %s505 = sadd.s32 %s504, 1
      %s506 = scalar_select %p503, %s504, %s505
      %p509 = pneg %p503
      %p510 = scmp.eq.s32.totalorder %s34, 3
      %p511 = por %p509, %p510
      %p512 = scmp.ne.s32.totalorder %s504, %s507
      %p513 = scmp.eq.s32.totalorder %s34, 0
      %p514 = por %p512, %p513
      %p515 = scmp.ne.s32.totalorder %s504, %s507
      %p516 = scmp.eq.s32.totalorder %s39, 3
      %p517 = por %p515, %p516
      %p518 = scmp.ne.s32.totalorder %s507, %s508
      %p519 = scmp.eq.s32.totalorder %s39, 0
      %p520 = por %p518, %p519
      %p521 = scmp.ne.s32.totalorder %s507, %s508
      %p522 = scmp.eq.s32.totalorder %s40, 3
      %p523 = por %p521, %p522
      %p525 = scmp.ne.s32.totalorder %s508, %s524
      %p526 = scmp.eq.s32.totalorder %s40, 0
      %p527 = por %p525, %p526
      %p528 = scmp.le.s32.totalorder 1, %s34
      %p529 = scmp.lt.s32.totalorder %s34, 5
      %p530 = pnand %p528, %p529
      %p531 = pneg %p530
      // Predicated region
      $region9: #{tpu_custom_call.1} parent=5 // pred_check
        _
      $region10: #{tpu_custom_call.1} parent=5 // pred_check_branch
        %533 = sbr.rel (%p530) target = $region12
      $region11: #{tpu_custom_call.1} parent=5 // pred_region
        %s534 = ssub.s32 %s34, 1
        // Predicated region
        $region13: #{tpu_custom_call.1} parent=11 // pred_check
          %p535 = pneg %p179
        $region14: #{tpu_custom_call.1} parent=11 // pred_check_branch
          %537 = sbr.rel (%p535) target = $region16
        $region15: #{tpu_custom_call.1} parent=11 // pred_region
          _
        $region16: #{tpu_custom_call.1} parent=11 // pred_fallthru
          _
        // Predicated region
        $region17: #{tpu_custom_call.1} parent=11 // pred_check
          %p538 = pneg %p200
        $region18: #{tpu_custom_call.1} parent=11 // pred_check_branch
          %540 = sbr.rel (%p538) target = $region20
        $region19: #{tpu_custom_call.1} parent=11 // pred_region
          _
        $region20: #{tpu_custom_call.1} parent=11 // pred_fallthru
          _
        // Predicated region
        $region21: #{tpu_custom_call.1} parent=11 // pred_check
          %p541 = pneg %p221
        $region22: #{tpu_custom_call.1} parent=11 // pred_check_branch
          %543 = sbr.rel (%p541) target = $region24
        $region23: #{tpu_custom_call.1} parent=11 // pred_region
          _
        $region24: #{tpu_custom_call.1} parent=11 // pred_fallthru
          _
        // Predicated region
        $region25: #{tpu_custom_call.1} parent=11 // pred_check
          %p544 = pneg %p242
        $region26: #{tpu_custom_call.1} parent=11 // pred_check_branch
          %546 = sbr.rel (%p544) target = $region28
        $region27: #{tpu_custom_call.1} parent=11 // pred_region
          _
        $region28: #{tpu_custom_call.1} parent=11 // pred_fallthru
          _
        // Predicated region
        $region29: #{tpu_custom_call.1} parent=11 // pred_check
          %p547 = pneg %p263
        $region30: #{tpu_custom_call.1} parent=11 // pred_check_branch
          %549 = sbr.rel (%p547) target = $region32
        $region31: #{tpu_custom_call.1} parent=11 // pred_region
          _
        $region32: #{tpu_custom_call.1} parent=11 // pred_fallthru
          _
        // Predicated region
        $region33: #{tpu_custom_call.1} parent=11 // pred_check
          %p550 = pneg %p284
        $region34: #{tpu_custom_call.1} parent=11 // pred_check_branch
          %552 = sbr.rel (%p550) target = $region36
        $region35: #{tpu_custom_call.1} parent=11 // pred_region
          _
        $region36: #{tpu_custom_call.1} parent=11 // pred_fallthru
          _
        // Predicated region
        $region37: #{tpu_custom_call.1} parent=11 // pred_check
          %p553 = pneg %p305
        $region38: #{tpu_custom_call.1} parent=11 // pred_check_branch
          %555 = sbr.rel (%p553) target = $region40
        $region39: #{tpu_custom_call.1} parent=11 // pred_region
          _
        $region40: #{tpu_custom_call.1} parent=11 // pred_fallthru
          _
        // Predicated region
        $region41: #{tpu_custom_call.1} parent=11 // pred_check
          %p556 = pneg %p326
        $region42: #{tpu_custom_call.1} parent=11 // pred_check_branch
          %558 = sbr.rel (%p556) target = $region44
        $region43: #{tpu_custom_call.1} parent=11 // pred_region
          %s560 = ssub.s32 32, 32
          %561 = vsyncadd [#allocation9], %s560
          %s563 = sshll.u32 [#allocation8], 4
          %s564 = int_to_ptr.vmem [resolvable:$true] %s563
          %566 = dma.hbm_to_vmem [thread:$0]  %s11, 32, %s564, [#allocation9]
        $region44: #{tpu_custom_call.1} parent=11 // pred_fallthru
          _
        // Predicated region
        $region45: #{tpu_custom_call.1} parent=11 // pred_check
          %p567 = pneg %p347
        $region46: #{tpu_custom_call.1} parent=11 // pred_check_branch
          %569 = sbr.rel (%p567) target = $region48
        $region47: #{tpu_custom_call.1} parent=11 // pred_region
          %s571 = ssub.s32 16, 16
          %572 = vsyncadd [#allocation9], %s571
          %s574 = sshll.u32 [#allocation10], 4
          %s575 = int_to_ptr.vmem [resolvable:$true] %s574
          %577 = dma.hbm_to_vmem [thread:$0]  %s12, 16, %s575, [#allocation9]
        $region48: #{tpu_custom_call.1} parent=11 // pred_fallthru
          _
        // Predicated region
        $region49: #{tpu_custom_call.1} parent=11 // pred_check
          %p578 = pneg %p368
        $region50: #{tpu_custom_call.1} parent=11 // pred_check_branch
          %580 = sbr.rel (%p578) target = $region52
        $region51: #{tpu_custom_call.1} parent=11 // pred_region
          %s582 = ssub.s32 16, 16
          %583 = vsyncadd [#allocation12], %s582
          %s585 = sshll.u32 [#allocation11], 4
          %s586 = int_to_ptr.vmem [resolvable:$true] %s585
          %588 = dma.hbm_to_vmem [thread:$0]  %s13, 16, %s586, [#allocation12]
        $region52: #{tpu_custom_call.1} parent=11 // pred_fallthru
          _
        // Predicated region
        $region53: #{tpu_custom_call.1} parent=11 // pred_check
          %p589 = pneg %p389
        $region54: #{tpu_custom_call.1} parent=11 // pred_check_branch
          %591 = sbr.rel (%p589) target = $region56
        $region55: #{tpu_custom_call.1} parent=11 // pred_region
          _
        $region56: #{tpu_custom_call.1} parent=11 // pred_fallthru
          _
        // Predicated region
        $region57: #{tpu_custom_call.1} parent=11 // pred_check
          %p592 = pneg %p410
        $region58: #{tpu_custom_call.1} parent=11 // pred_check_branch
          %594 = sbr.rel (%p592) target = $region60
        $region59: #{tpu_custom_call.1} parent=11 // pred_region
          _
        $region60: #{tpu_custom_call.1} parent=11 // pred_fallthru
          _
        // Predicated region
        $region61: #{tpu_custom_call.1} parent=11 // pred_check
          %p595 = pneg %p431
        $region62: #{tpu_custom_call.1} parent=11 // pred_check_branch
          %597 = sbr.rel (%p595) target = $region64
        $region63: #{tpu_custom_call.1} parent=11 // pred_region
          %s599 = ssub.s32 16384, 16384
          %600 = vsyncadd [#allocation12], %s599
          %s601 = sshll.u32 [#allocation13], 4
          %s602 = int_to_ptr.vmem [resolvable:$true] %s601
          %607 = dma.hbm_to_vmem [thread:$0]  %s16, 16384, %s602, [#allocation12], 256, 256, 16
        $region64: #{tpu_custom_call.1} parent=11 // pred_fallthru
          _
        // Predicated region
        $region65: #{tpu_custom_call.1} parent=11 // pred_check
          %p608 = pneg %p452
        $region66: #{tpu_custom_call.1} parent=11 // pred_check_branch
          %610 = sbr.rel (%p608) target = $region68
        $region67: #{tpu_custom_call.1} parent=11 // pred_region
          _
        $region68: #{tpu_custom_call.1} parent=11 // pred_fallthru
          _
        // Predicated region
        $region69: #{tpu_custom_call.1} parent=11 // pred_check
          %p611 = pneg %p473
        $region70: #{tpu_custom_call.1} parent=11 // pred_check_branch
          %613 = sbr.rel (%p611) target = $region72
        $region71: #{tpu_custom_call.1} parent=11 // pred_region
          _
        $region72: #{tpu_custom_call.1} parent=11 // pred_fallthru
          _
        // Predicated region
        $region73: #{tpu_custom_call.1} parent=11 // pred_check
          %p614 = pneg %p494
        $region74: #{tpu_custom_call.1} parent=11 // pred_check_branch
          %616 = sbr.rel (%p614) target = $region76
        $region75: #{tpu_custom_call.1} parent=11 // pred_region
          _
        $region76: #{tpu_custom_call.1} parent=11 // pred_fallthru
          _
      $region12: #{tpu_custom_call.1} parent=5 // pred_fallthru
        _
      %p617 = scmp.lt.s32.totalorder %s34, 4
      // Predicated region
      $region77: #{tpu_custom_call.1} parent=5 // pred_check
        %p618 = pneg %p617
      $region78: #{tpu_custom_call.1} parent=5 // pred_check_branch
        %620 = sbr.rel (%p618) target = $region80
      $region79: #{tpu_custom_call.1} parent=5 // pred_region
        // Predicated region
        $region81: #{tpu_custom_call.1} parent=79 // pred_check
          %p621 = pneg %p68
        $region82: #{tpu_custom_call.1} parent=79 // pred_check_branch
          %623 = sbr.rel (%p621) target = $region84
        $region83: #{tpu_custom_call.1} parent=79 // pred_region
          %s624 = smul.u32 2, %s42
          %p625 = scmp.lt.s32.totalorder %s41, 1
          %s626 = scalar_select %p625, %s41, 1
          %p627 = scmp.lt.s32.totalorder %s624, 3
          %s628 = scalar_select %p627, %s624, 3
          %s629 = smul.addr %s626, 4
          %s630 = sadd.s32 %s628, %s629
          %s631 = smul.addr %s630, 4
          %s632 = scalar_lea.vmem %s0, %s631
          %s633 = smul.u32 2, %s42
        $region84: #{tpu_custom_call.1} parent=79 // pred_fallthru
          _
        // Predicated region
        $region85: #{tpu_custom_call.1} parent=79 // pred_check
          %p634 = pneg %p96
        $region86: #{tpu_custom_call.1} parent=79 // pred_check_branch
          %636 = sbr.rel (%p634) target = $region88
        $region87: #{tpu_custom_call.1} parent=79 // pred_region
          %s637 = smul.u32 2, %s42
          %p638 = scmp.lt.s32.totalorder %s41, 1
          %s639 = scalar_select %p638, %s41, 1
          %p640 = scmp.lt.s32.totalorder %s637, 3
          %s641 = scalar_select %p640, %s637, 3
          %s642 = smul.addr %s639, 4
          %s643 = sadd.s32 %s641, %s642
          %s644 = smul.addr %s643, 4
          %s645 = scalar_lea.vmem %s1, %s644
          %s646 = smul.u32 2, %s42
        $region88: #{tpu_custom_call.1} parent=79 // pred_fallthru
          _
        // Predicated region
        $region89: #{tpu_custom_call.1} parent=79 // pred_check
          %p647 = pneg %p124
        $region90: #{tpu_custom_call.1} parent=79 // pred_check_branch
          %649 = sbr.rel (%p647) target = $region92
        $region91: #{tpu_custom_call.1} parent=79 // pred_region
          %s650 = smul.u32 2, %s42
          %p651 = scmp.lt.s32.totalorder %s41, 1
          %s652 = scalar_select %p651, %s41, 1
          %p653 = scmp.lt.s32.totalorder %s650, 3
          %s654 = scalar_select %p653, %s650, 3
          %s655 = smul.addr %s652, 4
          %s656 = sadd.s32 %s654, %s655
          %s657 = smul.addr %s656, 4
          %s658 = scalar_lea.vmem %s2, %s657
          %s659 = smul.u32 2, %s42
        $region92: #{tpu_custom_call.1} parent=79 // pred_fallthru
          _
        // Predicated region
        $region93: #{tpu_custom_call.1} parent=79 // pred_check
          %p660 = pneg %p152
        $region94: #{tpu_custom_call.1} parent=79 // pred_check_branch
          %662 = sbr.rel (%p660) target = $region96
        $region95: #{tpu_custom_call.1} parent=79 // pred_region
          %s663 = sand.u32 %s142, 1
          %s664 = scalar_lea.sflag [#allocation6], %s663
          %s665 = sand.u32 %s142, 1
          %s666 = smul.addr %s665, 8
          %s667 = scalar_lea.vmem [#allocation5], %s666
          %s668 = smul.u32 2, %s42
          %s670 = ssub.s32 128, 128
          %671 = vsyncadd %s664, %s670
          %s672 = smul.addr %s41, 4
          %s673 = sadd.s32 %s668, %s672
          %s674 = smul.addr %s673, 64
          %s675 = scalar_lea.hbm %s3, %s674
          %s676 = sshll.u32 %s667, 4
          %s677 = int_to_ptr.vmem [resolvable:$true] %s676
          %682 = dma.hbm_to_vmem [thread:$0]  %s675, 128, %s677, %s664, 64, 64, 4
        $region96: #{tpu_custom_call.1} parent=79 // pred_fallthru
          _
      $region80: #{tpu_custom_call.1} parent=5 // pred_fallthru
        _
      %p683 = scmp.le.s32.totalorder 1, %s34
      %p684 = scmp.lt.s32.totalorder %s34, 5
      %p685 = pnand %p683, %p684
      %p686 = pneg %p685
      // Predicated region
      $region97: #{tpu_custom_call.1} parent=5 // pred_check
        _
      $region98: #{tpu_custom_call.1} parent=5 // pred_check_branch
        %688 = sbr.rel (%p685) target = $region100
      $region99: #{tpu_custom_call.1} parent=5 // pred_region
        %s689 = ssub.s32 %s34, 1
        %s690 = sand.u32 %s145, 1
        %s691 = scalar_lea.sflag [#allocation6], %s690
        %s692 = sand.u32 %s145, 1
        %s693 = smul.addr %s692, 8
        %s694 = scalar_lea.vmem [#allocation5], %s693
        // Predicated region
        $region101: #{tpu_custom_call.1} parent=99 // pred_check
          %p695 = pneg %p158
        $region102: #{tpu_custom_call.1} parent=99 // pred_check_branch
          %697 = sbr.rel (%p695) target = $region104
        $region103: #{tpu_custom_call.1} parent=99 // pred_region
          %698 = dma.done %s691, 128
        $region104: #{tpu_custom_call.1} parent=99 // pred_fallthru
          _
        // Predicated region
        $region105: #{tpu_custom_call.1} parent=99 // pred_check
          %p699 = pneg %p326
        $region106: #{tpu_custom_call.1} parent=99 // pred_check_branch
          %701 = sbr.rel (%p699) target = $region108
        $region107: #{tpu_custom_call.1} parent=99 // pred_region
          %702 = dma.done [#allocation9], 32
        $region108: #{tpu_custom_call.1} parent=99 // pred_fallthru
          _
        // Predicated region
        $region109: #{tpu_custom_call.1} parent=99 // pred_check
          %p703 = pneg %p347
        $region110: #{tpu_custom_call.1} parent=99 // pred_check_branch
          %705 = sbr.rel (%p703) target = $region112
        $region111: #{tpu_custom_call.1} parent=99 // pred_region
          %706 = dma.done [#allocation9], 16
        $region112: #{tpu_custom_call.1} parent=99 // pred_fallthru
          _
        // Predicated region
        $region113: #{tpu_custom_call.1} parent=99 // pred_check
          %p707 = pneg %p368
        $region114: #{tpu_custom_call.1} parent=99 // pred_check_branch
          %709 = sbr.rel (%p707) target = $region116
        $region115: #{tpu_custom_call.1} parent=99 // pred_region
          %710 = dma.done [#allocation12], 16
        $region116: #{tpu_custom_call.1} parent=99 // pred_fallthru
          _
        // Predicated region
        $region117: #{tpu_custom_call.1} parent=99 // pred_check
          %p711 = pneg %p431
        $region118: #{tpu_custom_call.1} parent=99 // pred_check_branch
          %713 = sbr.rel (%p711) target = $region120
        $region119: #{tpu_custom_call.1} parent=99 // pred_region
          %714 = dma.done [#allocation12], 16384
        $region120: #{tpu_custom_call.1} parent=99 // pred_fallthru
          _
        %s715 = smul.u32 2, %s44
        %p716 = scmp.lt.s32.totalorder %s43, 1
        %s717 = scalar_select %p716, %s43, 1
        %p718 = scmp.lt.s32.totalorder %s715, 3
        %s719 = scalar_select %p718, %s715, 3
        %s720 = smul.addr %s717, 4
        %s721 = sadd.s32 %s719, %s720
        %s722 = smul.addr %s721, 4
        %s723 = scalar_lea.vmem %s0, %s722
        %p724 = pneg %p74
        %p725 = pneg %p71
        %s726 = smul.u32 2, %s44
        %p727 = scmp.lt.s32.totalorder %s43, 1
        %s728 = scalar_select %p727, %s43, 1
        %p729 = scmp.lt.s32.totalorder %s726, 3
        %s730 = scalar_select %p729, %s726, 3
        %s731 = smul.addr %s728, 4
        %s732 = sadd.s32 %s730, %s731
        %s733 = smul.addr %s732, 4
        %s734 = scalar_lea.vmem %s1, %s733
        %p735 = pneg %p102
        %p736 = pneg %p99
        %s737 = smul.u32 2, %s44
        %p738 = scmp.lt.s32.totalorder %s43, 1
        %s739 = scalar_select %p738, %s43, 1
        %p740 = scmp.lt.s32.totalorder %s737, 3
        %s741 = scalar_select %p740, %s737, 3
        %s742 = smul.addr %s739, 4
        %s743 = sadd.s32 %s741, %s742
        %s744 = smul.addr %s743, 4
        %s745 = scalar_lea.vmem %s2, %s744
        %p746 = pneg %p130
        %p747 = pneg %p127
        %s748 = sand.u32 %s145, 1
        %s749 = scalar_lea.sflag [#allocation6], %s748
        %s750 = sand.u32 %s145, 1
        %s751 = smul.addr %s750, 8
        %s752 = scalar_lea.vmem [#allocation5], %s751
        %p753 = pneg %p158
        %p754 = pneg %p155
        %p755 = pneg %p179
        %p756 = pneg %p176
        %p757 = pneg %p200
        %p758 = pneg %p197
        %p759 = pneg %p221
        %p760 = pneg %p218
        %p761 = pneg %p242
        %p762 = pneg %p239
        %p763 = pneg %p263
        %p764 = pneg %p260
        %p765 = pneg %p284
        %p766 = pneg %p281
        %p767 = pneg %p305
        %p768 = pneg %p302
        %p769 = pneg %p326
        %p770 = pneg %p323
        %p771 = pneg %p347
        %p772 = pneg %p344
        %p773 = pneg %p368
        %p774 = pneg %p365
        %p775 = pneg %p389
        %p776 = pneg %p386
        %p777 = pneg %p410
        %p778 = pneg %p407
        %p779 = pneg %p431
        %p780 = pneg %p428
        %p781 = pneg %p452
        %p782 = pneg %p449
        %p783 = pneg %p473
        %p784 = pneg %p470
        %p785 = pneg %p494
        %p786 = pneg %p491
        %p787 = pneg %p520
        %p788 = pneg %p517
        %s789 = sand.u32 %s507, 1
        %s790 = scalar_lea.sflag [#allocation7], %s789
        %s791 = sand.u32 %s507, 1
        %s792 = smul.addr %s791, 8
        %s793 = scalar_lea.vmem [#allocation14], %s792
        %s794 = smul.u32 2, %s44
        %p795 = scmp.lt.s32.totalorder %s43, 1
        %s796 = scalar_select %p795, %s43, 1
        %p797 = scmp.lt.s32.totalorder %s794, 3
        %s798 = scalar_select %p797, %s794, 3
        %s799 = smul.addr %s796, 4
        %s800 = sadd.s32 %s798, %s799
        %s801 = smul.addr %s800, 4
        %s802 = scalar_lea.vmem %s0, %s801
        %s803 = smul.u32 2, %s44
        %s804 = smul.u32 2, %s44
        %p805 = scmp.lt.s32.totalorder %s43, 1
        %s806 = scalar_select %p805, %s43, 1
        %p807 = scmp.lt.s32.totalorder %s804, 3
        %s808 = scalar_select %p807, %s804, 3
        %s809 = smul.addr %s806, 4
        %s810 = sadd.s32 %s808, %s809
        %s811 = smul.addr %s810, 4
        %s812 = scalar_lea.vmem %s1, %s811
        %s813 = smul.u32 2, %s44
        %s814 = smul.u32 2, %s44
        %p815 = scmp.lt.s32.totalorder %s43, 1
        %s816 = scalar_select %p815, %s43, 1
        %p817 = scmp.lt.s32.totalorder %s814, 3
        %s818 = scalar_select %p817, %s814, 3
        %s819 = smul.addr %s816, 4
        %s820 = sadd.s32 %s818, %s819
        %s821 = smul.addr %s820, 4
        %s822 = scalar_lea.vmem %s2, %s821
        %s823 = smul.u32 2, %s44
        %s824 = smul.u32 2, %s44
        %p826 = scmp.eq.s32.totalorder %s44, 0
        // Predicated region
        $region121: #{tpu_custom_call.1} parent=99 // pred_check
          %p827 = pneg %p826
        $region122: #{tpu_custom_call.1} parent=99 // pred_check_branch
          %829 = sbr.rel (%p827) target = $region124
        $region123: #{tpu_custom_call.1} parent=99 // pred_region
          %vm830 = vcmask 8192
          %831 = vst.msk [vmem:[#allocation2] sm:$0x1] %vm830, -inf
          %832 = vst.msk [vmem:[#allocation3] sm:$0x1] %vm830, 0.0
          %833 = vst [vmem:[#allocation4] sm:$0xff] 0.0
        $region124: #{tpu_custom_call.1} parent=99 // pred_fallthru
          _
        %v834 = vld [vmem:[%s802] sm:$0xf]
        %v835 = vld [vmem:[%s802 + $0x4] sm:$0xf]
        %v836 = vmax.bf16 %v834, 0
        %v837 = vmax.bf16 %v835, 0
        %v838 = vld [vmem:[%s4] sm:$0xf]
        %v839 = vld [vmem:[%s4 + $0x4] sm:$0xf]
        %v840 = vld [vmem:[%s4 + $0x8] sm:$0xf]
        %v841 = vld [vmem:[%s4 + $0xc] sm:$0xf]
        %v842 = vld [vmem:[%s4 + $0x10] sm:$0xf]
        %v843 = vld [vmem:[%s4 + $0x14] sm:$0xf]
        %v844 = vld [vmem:[%s8] sm:$0x1]
        %v846 = vlaneseq
        %v847 = vshrl.u32 %v846, 7
        %v848 = vsub.s32 0, %v847
        %v849 = vrot.slane %v844, %v848
        %v853 = vunpack.c.l.b16 %v836
        %v854 = vunpack.c.l.b16 %v837
        %v855 = vpack.c.b16 %v854, %v853
        %v862 = vunpack.c.l.b16 %v838
        %v863 = vunpack.c.l.b16 %v839
        %v864 = vunpack.c.l.b16 %v840
        %v865 = vunpack.c.l.b16 %v841
        %v866 = vunpack.c.l.b16 %v842
        %v867 = vunpack.c.l.b16 %v843
        %v868 = vpack.c.b16 %v863, %v862
        %v869 = vpack.c.b16 %v865, %v864
        %v870 = vpack.c.b16 %v867, %v866
        %vm874 = vcmask 392192
        %v876 = vsel %vm874, %v855, 0
        %878 = vmatprep.subr.bf16.mxu0 0
        %879 = vmatpush1.bf16.msra.mxu0 %v868
        %880 = vmatprep.subr.bf16.mxu0 0
        %881 = vmatpush1.bf16.msra.mxu0 %v869
        %882 = vmatprep.subr.bf16.mxu0 0
        %883 = vmatpush1.bf16.msra.mxu0 %v870
        %884 = vmatprep.subr.bf16.mxu0 0
        %885 = vmatpush1.bf16.msra.mxu0 0
        %886 = vmatprep.subr.bf16.mxu0 0
        %887 = vmatpush1.bf16.msra.mxu0 0
        %888 = vmatprep.subr.bf16.mxu0 0
        %889 = vmatpush1.bf16.msra.mxu0 0
        %890 = vmatprep.subr.bf16.mxu0 0
        %891 = vmatpush1.bf16.msra.mxu0 0
        %892 = vmatprep.subr.bf16.mxu0 0
        %893 = vmatpush1.bf16.msra.mxu0 0
        %894 = vmatprep.subr.bf16.mxu0 0
        %895 = vmatpush1.bf16.msra.mxu0 0
        %896 = vmatprep.subr.bf16.mxu0 0
        %897 = vmatpush1.bf16.msra.mxu0 0
        %898 = vmatprep.subr.bf16.mxu0 0
        %899 = vmatpush1.bf16.msra.mxu0 0
        %900 = vmatprep.subr.bf16.mxu0 0
        %901 = vmatpush1.bf16.msra.mxu0 0
        %902 = vmatprep.subr.bf16.mxu0 0
        %903 = vmatpush1.bf16.msra.mxu0 0
        %904 = vmatprep.subr.bf16.mxu0 0
        %905 = vmatpush1.bf16.msra.mxu0 0
        %906 = vmatprep.subr.bf16.mxu0 0
        %907 = vmatpush1.bf16.msra.mxu0 0
        %908 = vmatprep.subr.bf16.mxu0 0
        %909 = vmatpush1.bf16.msra.mxu0 0
        %910 = vmatprep.mubr.bf16.mxu0 0
        %911 = vmatmul.mubr.bf16.gmra.mrb[0].mxu0 %v876
        %v912 = vpop.f32.mrb[0].mxu0
        %v913 = vadd.f32 %v849, %v912
        %v914 = vpop.f32.mrb[0].mxu0
        %v915 = vpop.f32.mrb[0].mxu0
        %v916 = vadd.f32 %v849, %v915
        %v917 = vpop.f32.mrb[0].mxu0
        %918 = vdwg.mxu0
        %v919 = vmax.f32 %v913, 0.0
        %v920 = vmax.f32 %v916, 0.0
        %v921 = vld [vmem:[%s812] sm:$0xf]
        %v922 = vld [vmem:[%s812 + $0x4] sm:$0xf]
        %v923 = vmax.bf16 %v921, 0
        %v924 = vmax.bf16 %v922, 0
        %v925 = vld [vmem:[%s5] sm:$0xf]
        %v926 = vld [vmem:[%s5 + $0x4] sm:$0xf]
        %v927 = vld [vmem:[%s5 + $0x8] sm:$0xf]
        %v928 = vld [vmem:[%s5 + $0xc] sm:$0xf]
        %v929 = vld [vmem:[%s5 + $0x10] sm:$0xf]
        %v930 = vld [vmem:[%s5 + $0x14] sm:$0xf]
        %s931 = scalar_lea.vmem %s8, 1
        %v932 = vld [vmem:[%s931] sm:$0x1]
        %v934 = vlaneseq
        %v935 = vshrl.u32 %v934, 7
        %v936 = vsub.s32 0, %v935
        %v937 = vrot.slane %v932, %v936
        %v941 = vunpack.c.l.b16 %v923
        %v942 = vunpack.c.l.b16 %v924
        %v943 = vpack.c.b16 %v942, %v941
        %v950 = vunpack.c.l.b16 %v925
        %v951 = vunpack.c.l.b16 %v926
        %v952 = vunpack.c.l.b16 %v927
        %v953 = vunpack.c.l.b16 %v928
        %v954 = vunpack.c.l.b16 %v929
        %v955 = vunpack.c.l.b16 %v930
        %v956 = vpack.c.b16 %v951, %v950
        %v957 = vpack.c.b16 %v953, %v952
        %v958 = vpack.c.b16 %v955, %v954
        %v963 = vsel %vm874, %v943, 0
        %965 = vmatprep.subr.bf16.mxu0 0
        %966 = vmatpush1.bf16.msra.mxu0 %v956
        %967 = vmatprep.subr.bf16.mxu0 0
        %968 = vmatpush1.bf16.msra.mxu0 %v957
        %969 = vmatprep.subr.bf16.mxu0 0
        %970 = vmatpush1.bf16.msra.mxu0 %v958
        %971 = vmatprep.subr.bf16.mxu0 0
        %972 = vmatpush1.bf16.msra.mxu0 0
        %973 = vmatprep.subr.bf16.mxu0 0
        %974 = vmatpush1.bf16.msra.mxu0 0
        %975 = vmatprep.subr.bf16.mxu0 0
        %976 = vmatpush1.bf16.msra.mxu0 0
        %977 = vmatprep.subr.bf16.mxu0 0
        %978 = vmatpush1.bf16.msra.mxu0 0
        %979 = vmatprep.subr.bf16.mxu0 0
        %980 = vmatpush1.bf16.msra.mxu0 0
        %981 = vmatprep.subr.bf16.mxu0 0
        %982 = vmatpush1.bf16.msra.mxu0 0
        %983 = vmatprep.subr.bf16.mxu0 0
        %984 = vmatpush1.bf16.msra.mxu0 0
        %985 = vmatprep.subr.bf16.mxu0 0
        %986 = vmatpush1.bf16.msra.mxu0 0
        %987 = vmatprep.subr.bf16.mxu0 0
        %988 = vmatpush1.bf16.msra.mxu0 0
        %989 = vmatprep.subr.bf16.mxu0 0
        %990 = vmatpush1.bf16.msra.mxu0 0
        %991 = vmatprep.subr.bf16.mxu0 0
        %992 = vmatpush1.bf16.msra.mxu0 0
        %993 = vmatprep.subr.bf16.mxu0 0
        %994 = vmatpush1.bf16.msra.mxu0 0
        %995 = vmatprep.subr.bf16.mxu0 0
        %996 = vmatpush1.bf16.msra.mxu0 0
        %997 = vmatprep.mubr.bf16.mxu0 0
        %998 = vmatmul.mubr.bf16.gmra.mrb[0].mxu0 %v963
        %v999 = vpop.f32.mrb[0].mxu0
        %v1000 = vadd.f32 %v937, %v999
        %v1001 = vpop.f32.mrb[0].mxu0
        %v1002 = vpop.f32.mrb[0].mxu0
        %v1003 = vadd.f32 %v937, %v1002
        %v1004 = vpop.f32.mrb[0].mxu0
        %1005 = vdwg.mxu0
        %v1006 = vmax.f32 %v1000, 0.0
        %v1007 = vmax.f32 %v1003, 0.0
        %v1008 = vld [vmem:[%s822] sm:$0xf]
        %v1009 = vld [vmem:[%s822 + $0x4] sm:$0xf]
        %v1010 = vmax.bf16 %v1008, 0
        %v1011 = vmax.bf16 %v1009, 0
        %v1012 = vld [vmem:[%s6] sm:$0xf]
        %v1013 = vld [vmem:[%s6 + $0x4] sm:$0xf]
        %v1014 = vld [vmem:[%s6 + $0x8] sm:$0xf]
        %v1015 = vld [vmem:[%s6 + $0xc] sm:$0xf]
        %v1016 = vld [vmem:[%s6 + $0x10] sm:$0xf]
        %v1017 = vld [vmem:[%s6 + $0x14] sm:$0xf]
        %v1018 = vld [vmem:[%s6 + $0x18] sm:$0xf]
        %v1019 = vld [vmem:[%s6 + $0x1c] sm:$0xf]
        %s1020 = scalar_lea.vmem %s8, 2
        %v1021 = vld [vmem:[%s1020] sm:$0x1]
        %v1023 = vlaneseq
        %v1024 = vshrl.u32 %v1023, 7
        %v1025 = vsub.s32 0, %v1024
        %v1026 = vrot.slane %v1021, %v1025
        %v1030 = vunpack.c.l.b16 %v1010
        %v1031 = vunpack.c.l.b16 %v1011
        %v1032 = vpack.c.b16 %v1031, %v1030
        %v1041 = vunpack.c.l.b16 %v1012
        %v1042 = vunpack.c.l.b16 %v1013
        %v1043 = vunpack.c.l.b16 %v1014
        %v1044 = vunpack.c.l.b16 %v1015
        %v1045 = vunpack.c.l.b16 %v1016
        %v1046 = vunpack.c.l.b16 %v1017
        %v1047 = vunpack.c.l.b16 %v1018
        %v1048 = vunpack.c.l.b16 %v1019
        %v1049 = vpack.c.b16 %v1042, %v1041
        %v1050 = vpack.c.b16 %v1044, %v1043
        %v1051 = vpack.c.b16 %v1046, %v1045
        %v1052 = vpack.c.b16 %v1048, %v1047
        %vm1057 = vcmask 523264
        %v1059 = vsel %vm1057, %v1032, 0
        %1061 = vmatprep.subr.bf16.mxu0 0
        %1062 = vmatpush1.bf16.msra.mxu0 %v1049
        %1063 = vmatprep.subr.bf16.mxu0 0
        %1064 = vmatpush1.bf16.msra.mxu0 %v1050
        %1065 = vmatprep.subr.bf16.mxu0 0
        %1066 = vmatpush1.bf16.msra.mxu0 %v1051
        %1067 = vmatprep.subr.bf16.mxu0 0
        %1068 = vmatpush1.bf16.msra.mxu0 %v1052
        %1069 = vmatprep.subr.bf16.mxu0 0
        %1070 = vmatpush1.bf16.msra.mxu0 0
        %1071 = vmatprep.subr.bf16.mxu0 0
        %1072 = vmatpush1.bf16.msra.mxu0 0
        %1073 = vmatprep.subr.bf16.mxu0 0
        %1074 = vmatpush1.bf16.msra.mxu0 0
        %1075 = vmatprep.subr.bf16.mxu0 0
        %1076 = vmatpush1.bf16.msra.mxu0 0
        %1077 = vmatprep.subr.bf16.mxu0 0
        %1078 = vmatpush1.bf16.msra.mxu0 0
        %1079 = vmatprep.subr.bf16.mxu0 0
        %1080 = vmatpush1.bf16.msra.mxu0 0
        %1081 = vmatprep.subr.bf16.mxu0 0
        %1082 = vmatpush1.bf16.msra.mxu0 0
        %1083 = vmatprep.subr.bf16.mxu0 0
        %1084 = vmatpush1.bf16.msra.mxu0 0
        %1085 = vmatprep.subr.bf16.mxu0 0
        %1086 = vmatpush1.bf16.msra.mxu0 0
        %1087 = vmatprep.subr.bf16.mxu0 0
        %1088 = vmatpush1.bf16.msra.mxu0 0
        %1089 = vmatprep.subr.bf16.mxu0 0
        %1090 = vmatpush1.bf16.msra.mxu0 0
        %1091 = vmatprep.subr.bf16.mxu0 0
        %1092 = vmatpush1.bf16.msra.mxu0 0
        %1093 = vmatprep.mubr.bf16.mxu0 0
        %1094 = vmatmul.mubr.bf16.gmra.mrb[0].mxu0 %v1059
        %v1095 = vpop.f32.mrb[0].mxu0
        %v1096 = vadd.f32 %v1026, %v1095
        %v1097 = vpop.f32.mrb[0].mxu0
        %v1098 = vpop.f32.mrb[0].mxu0
        %v1099 = vadd.f32 %v1026, %v1098
        %v1100 = vpop.f32.mrb[0].mxu0
        %1101 = vdwg.mxu0
        %v1102 = vmax.f32 %v1096, 0.0
        %v1103 = vmax.f32 %v1099, 0.0
        %v1104 = vld [vmem:[%s694] sm:$0xf]
        %v1105 = vld [vmem:[%s694 + $0x4] sm:$0xf]
        %v1106 = vmax.bf16 %v1104, 0
        %v1107 = vmax.bf16 %v1105, 0
        %v1108 = vld [vmem:[%s7] sm:$0xf]
        %v1109 = vld [vmem:[%s7 + $0x4] sm:$0xf]
        %v1110 = vld [vmem:[%s7 + $0x8] sm:$0xf]
        %v1111 = vld [vmem:[%s7 + $0xc] sm:$0xf]
        %s1112 = scalar_lea.vmem %s8, 3
        %v1113 = vld [vmem:[%s1112] sm:$0x1]
        %v1115 = vlaneseq
        %v1116 = vshrl.u32 %v1115, 7
        %v1117 = vsub.s32 0, %v1116
        %v1118 = vrot.slane %v1113, %v1117
        %v1122 = vunpack.c.l.b16 %v1106
        %v1123 = vunpack.c.l.b16 %v1107
        %v1124 = vpack.c.b16 %v1123, %v1122
        %v1129 = vunpack.c.l.b16 %v1108
        %v1130 = vunpack.c.l.b16 %v1109
        %v1131 = vunpack.c.l.b16 %v1110
        %v1132 = vunpack.c.l.b16 %v1111
        %v1133 = vpack.c.b16 %v1130, %v1129
        %v1134 = vpack.c.b16 %v1132, %v1131
        %vm1137 = vcmask 261120
        %v1139 = vsel %vm1137, %v1124, 0
        %1141 = vmatprep.subr.bf16.mxu0 0
        %1142 = vmatpush1.bf16.msra.mxu0 %v1133
        %1143 = vmatprep.subr.bf16.mxu0 0
        %1144 = vmatpush1.bf16.msra.mxu0 %v1134
        %1145 = vmatprep.subr.bf16.mxu0 0
        %1146 = vmatpush1.bf16.msra.mxu0 0
        %1147 = vmatprep.subr.bf16.mxu0 0
        %1148 = vmatpush1.bf16.msra.mxu0 0
        %1149 = vmatprep.subr.bf16.mxu0 0
        %1150 = vmatpush1.bf16.msra.mxu0 0
        %1151 = vmatprep.subr.bf16.mxu0 0
        %1152 = vmatpush1.bf16.msra.mxu0 0
        %1153 = vmatprep.subr.bf16.mxu0 0
        %1154 = vmatpush1.bf16.msra.mxu0 0
        %1155 = vmatprep.subr.bf16.mxu0 0
        %1156 = vmatpush1.bf16.msra.mxu0 0
        %1157 = vmatprep.subr.bf16.mxu0 0
        %1158 = vmatpush1.bf16.msra.mxu0 0
        %1159 = vmatprep.subr.bf16.mxu0 0
        %1160 = vmatpush1.bf16.msra.mxu0 0
        %1161 = vmatprep.subr.bf16.mxu0 0
        %1162 = vmatpush1.bf16.msra.mxu0 0
        %1163 = vmatprep.subr.bf16.mxu0 0
        %1164 = vmatpush1.bf16.msra.mxu0 0
        %1165 = vmatprep.subr.bf16.mxu0 0
        %1166 = vmatpush1.bf16.msra.mxu0 0
        %1167 = vmatprep.subr.bf16.mxu0 0
        %1168 = vmatpush1.bf16.msra.mxu0 0
        %1169 = vmatprep.subr.bf16.mxu0 0
        %1170 = vmatpush1.bf16.msra.mxu0 0
        %1171 = vmatprep.subr.bf16.mxu0 0
        %1172 = vmatpush1.bf16.msra.mxu0 0
        %1173 = vmatprep.mubr.bf16.mxu0 0
        %1174 = vmatmul.mubr.bf16.gmra.mrb[0].mxu0 %v1139
        %v1175 = vpop.f32.mrb[0].mxu0
        %v1176 = vadd.f32 %v1118, %v1175
        %v1177 = vpop.f32.mrb[0].mxu0
        %v1178 = vpop.f32.mrb[0].mxu0
        %v1179 = vadd.f32 %v1118, %v1178
        %v1180 = vpop.f32.mrb[0].mxu0
        %1181 = vdwg.mxu0
        %v1182 = vmax.f32 %v1176, 0.0
        %v1183 = vmax.f32 %v1179, 0.0
        %1186 = vrot.lane.b32.xlu0 %v1006, 32
        %v1187 = vpop.permute.xlu0 %1186
        %1188 = vrot.lane.b32.xlu0 %v1007, 32
        %v1189 = vpop.permute.xlu0 %1188
        %1194 = vrot.lane.b32.xlu0 %v1102, 64
        %v1195 = vpop.permute.xlu0 %1194
        %1196 = vrot.lane.b32.xlu0 %v1103, 64
        %v1197 = vpop.permute.xlu0 %1196
        %1202 = vrot.lane.b32.xlu0 %v1182, 96
        %v1203 = vpop.permute.xlu0 %1202
        %1204 = vrot.lane.b32.xlu0 %v1183, 96
        %v1205 = vpop.permute.xlu0 %1204
        %v1208 = vsel %vm1137, %v919, %v1187
        %v1209 = vsel %vm1137, %v920, %v1189
        %v1210 = vsel %vm1057, %v1208, %v1195
        %v1211 = vsel %vm1057, %v1209, %v1197
        %vm1212 = vcmask 785408
        %v1213 = vsel %vm1212, %v1210, %v1203
        %v1214 = vsel %vm1212, %v1211, %v1205
        %v1215 = vpack.c.bf16 %v1214, %v1213
        %v1216 = vld [vmem:[%s9] sm:$0xf]
        %v1217 = vld [vmem:[%s9 + $0x4] sm:$0xf]
        %v1218 = vld [vmem:[%s9 + $0x8] sm:$0xf]
        %v1219 = vld [vmem:[%s9 + $0xc] sm:$0xf]
        %v1220 = vld [vmem:[%s9 + $0x10] sm:$0xf]
        %v1221 = vld [vmem:[%s9 + $0x14] sm:$0xf]
        %v1222 = vld [vmem:[%s9 + $0x18] sm:$0xf]
        %v1223 = vld [vmem:[%s9 + $0x1c] sm:$0xf]
        %v1224 = vld [vmem:[%s9 + $0x20] sm:$0xf]
        %v1225 = vld [vmem:[%s9 + $0x24] sm:$0xf]
        %v1226 = vld [vmem:[%s9 + $0x28] sm:$0xf]
        %v1227 = vld [vmem:[%s9 + $0x2c] sm:$0xf]
        %v1228 = vld [vmem:[%s9 + $0x30] sm:$0xf]
        %v1229 = vld [vmem:[%s9 + $0x34] sm:$0xf]
        %v1230 = vld [vmem:[%s9 + $0x38] sm:$0xf]
        %v1231 = vld [vmem:[%s9 + $0x3c] sm:$0xf]
        %v1232 = vld [vmem:[%s10] sm:$0x1]
        %v1234 = vlaneseq
        %v1235 = vshrl.u32 %v1234, 7
        %v1236 = vsub.s32 0, %v1235
        %v1237 = vrot.slane %v1232, %v1236
        %v1255 = vunpack.c.l.b16 %v1216
        %v1256 = vunpack.c.l.b16 %v1217
        %v1257 = vunpack.c.l.b16 %v1218
        %v1258 = vunpack.c.l.b16 %v1219
        %v1259 = vunpack.c.l.b16 %v1220
        %v1260 = vunpack.c.l.b16 %v1221
        %v1261 = vunpack.c.l.b16 %v1222
        %v1262 = vunpack.c.l.b16 %v1223
        %v1263 = vunpack.c.l.b16 %v1224
        %v1264 = vunpack.c.l.b16 %v1225
        %v1265 = vunpack.c.l.b16 %v1226
        %v1266 = vunpack.c.l.b16 %v1227
        %v1267 = vunpack.c.l.b16 %v1228
        %v1268 = vunpack.c.l.b16 %v1229
        %v1269 = vunpack.c.l.b16 %v1230
        %v1270 = vunpack.c.l.b16 %v1231
        %v1271 = vpack.c.b16 %v1256, %v1255
        %v1272 = vpack.c.b16 %v1258, %v1257
        %v1273 = vpack.c.b16 %v1260, %v1259
        %v1274 = vpack.c.b16 %v1262, %v1261
        %v1275 = vpack.c.b16 %v1264, %v1263
        %v1276 = vpack.c.b16 %v1266, %v1265
        %v1277 = vpack.c.b16 %v1268, %v1267
        %v1278 = vpack.c.b16 %v1270, %v1269
        %1287 = vmatprep.subr.bf16.mxu0 0
        %1288 = vmatpush1.bf16.msra.mxu0 %v1271
        %1289 = vmatprep.subr.bf16.mxu0 0
        %1290 = vmatpush1.bf16.msra.mxu0 %v1272
        %1291 = vmatprep.subr.bf16.mxu0 0
        %1292 = vmatpush1.bf16.msra.mxu0 %v1273
        %1293 = vmatprep.subr.bf16.mxu0 0
        %1294 = vmatpush1.bf16.msra.mxu0 %v1274
        %1295 = vmatprep.subr.bf16.mxu0 0
        %1296 = vmatpush1.bf16.msra.mxu0 %v1275
        %1297 = vmatprep.subr.bf16.mxu0 0
        %1298 = vmatpush1.bf16.msra.mxu0 %v1276
        %1299 = vmatprep.subr.bf16.mxu0 0
        %1300 = vmatpush1.bf16.msra.mxu0 %v1277
        %1301 = vmatprep.subr.bf16.mxu0 0
        %1302 = vmatpush1.bf16.msra.mxu0 %v1278
        %1303 = vmatprep.subr.bf16.mxu0 0
        %1304 = vmatpush1.bf16.msra.mxu0 0
        %1305 = vmatprep.subr.bf16.mxu0 0
        %1306 = vmatpush1.bf16.msra.mxu0 0
        %1307 = vmatprep.subr.bf16.mxu0 0
        %1308 = vmatpush1.bf16.msra.mxu0 0
        %1309 = vmatprep.subr.bf16.mxu0 0
        %1310 = vmatpush1.bf16.msra.mxu0 0
        %1311 = vmatprep.subr.bf16.mxu0 0
        %1312 = vmatpush1.bf16.msra.mxu0 0
        %1313 = vmatprep.subr.bf16.mxu0 0
        %1314 = vmatpush1.bf16.msra.mxu0 0
        %1315 = vmatprep.subr.bf16.mxu0 0
        %1316 = vmatpush1.bf16.msra.mxu0 0
        %1317 = vmatprep.subr.bf16.mxu0 0
        %1318 = vmatpush1.bf16.msra.mxu0 0
        %1319 = vmatprep.mubr.bf16.mxu0 0
        %1320 = vmatmul.mubr.bf16.gmra.mrb[0].mxu0 %v1215
        %v1321 = vpop.f32.mrb[0].mxu0
        %v1322 = vadd.f32 %v1237, %v1321
        %v1323 = vpop.f32.mrb[0].mxu0
        %v1324 = vpop.f32.mrb[0].mxu0
        %v1325 = vadd.f32 %v1237, %v1324
        %v1326 = vpop.f32.mrb[0].mxu0
        %1327 = vdwg.mxu0
        %vm1328 = vcmask 31744
        %v1329 = vsel %vm1328, %v1322, -inf
        %1330 = vmax.xlane.f32.xlu0 %v1329
        %v1331 = vpop.xlane.xlu0 %1330
        %v1332 = vsel %vm1328, %v1325, -inf
        %1333 = vmax.xlane.f32.xlu0 %v1332
        %v1334 = vpop.xlane.xlu0 %1333
        %v1335 = vsub.f32 %v1322, %v1331
        %v1336 = vsub.f32 %v1325, %v1334
        %v1337 = vmul.f32 %v1335, 1.442695
        %v1338 = vpow.pop %v1337
        %v1339 = vmul.f32 %v1336, 1.442695
        %v1340 = vpow.pop %v1339
        %v1341 = vsel %vm1328, %v1338, 0.0
        %1342 = vadd.xlane.f32.xlu0 %v1341
        %v1343 = vpop.xlane.xlu0 %1342
        %v1344 = vsel %vm1328, %v1340, 0.0
        %1345 = vadd.xlane.f32.xlu0 %v1344
        %v1346 = vpop.xlane.xlu0 %1345
        %v1347 = vrcp.pop %v1343
        %v1348 = vrcp.pop %v1346
        %v1349 = vmul.f32 %v1338, %v1347
        %v1350 = vmul.f32 %v1340, %v1348
        %v1351 = vpack.c.bf16 %v1350, %v1349
        %v1352 = vld [vmem:[#allocation8] sm:$0x3]
        %v1354 = vsel %vm1328, %v1351, 0
        %vm1356 = vcmask 1041408
        %v1358 = vsel %vm1356, %v1352, 0
        %1360 = vmatprep.subr.bf16.mxu0 0
        %1361 = vmatpush1.bf16.msra.mxu0 %v1358
        %1362 = vmatprep.subr.bf16.mxu0 0
        %1363 = vmatpush1.bf16.msra.mxu0 0
        %1364 = vmatprep.subr.bf16.mxu0 0
        %1365 = vmatpush1.bf16.msra.mxu0 0
        %1366 = vmatprep.subr.bf16.mxu0 0
        %1367 = vmatpush1.bf16.msra.mxu0 0
        %1368 = vmatprep.subr.bf16.mxu0 0
        %1369 = vmatpush1.bf16.msra.mxu0 0
        %1370 = vmatprep.subr.bf16.mxu0 0
        %1371 = vmatpush1.bf16.msra.mxu0 0
        %1372 = vmatprep.subr.bf16.mxu0 0
        %1373 = vmatpush1.bf16.msra.mxu0 0
        %1374 = vmatprep.subr.bf16.mxu0 0
        %1375 = vmatpush1.bf16.msra.mxu0 0
        %1376 = vmatprep.subr.bf16.mxu0 0
        %1377 = vmatpush1.bf16.msra.mxu0 0
        %1378 = vmatprep.subr.bf16.mxu0 0
        %1379 = vmatpush1.bf16.msra.mxu0 0
        %1380 = vmatprep.subr.bf16.mxu0 0
        %1381 = vmatpush1.bf16.msra.mxu0 0
        %1382 = vmatprep.subr.bf16.mxu0 0
        %1383 = vmatpush1.bf16.msra.mxu0 0
        %1384 = vmatprep.subr.bf16.mxu0 0
        %1385 = vmatpush1.bf16.msra.mxu0 0
        %1386 = vmatprep.subr.bf16.mxu0 0
        %1387 = vmatpush1.bf16.msra.mxu0 0
        %1388 = vmatprep.subr.bf16.mxu0 0
        %1389 = vmatpush1.bf16.msra.mxu0 0
        %1390 = vmatprep.subr.bf16.mxu0 0
        %1391 = vmatpush1.bf16.msra.mxu0 0
        %1392 = vmatprep.mubr.bf16.mxu0 0
        %1393 = vmatmul.mubr.bf16.gmra.mrb[0].mxu0 %v1354
        %v1394 = vpop.f32.mrb[0].mxu0
        %v1395 = vadd.f32 0.0, %v1394
        %v1396 = vpop.f32.mrb[0].mxu0
        %v1397 = vpop.f32.mrb[0].mxu0
        %v1398 = vadd.f32 0.0, %v1397
        %v1399 = vpop.f32.mrb[0].mxu0
        %1400 = vdwg.mxu0
        %v1401 = vmul.f32 %v1213, %v1395
        %v1402 = vmul.f32 %v1214, %v1398
        %1403 = vadd.xlane.f32.xlu0 %v1401
        %v1404 = vpop.xlane.xlu0 %1403
        %1405 = vadd.xlane.f32.xlu0 %v1402
        %v1406 = vpop.xlane.xlu0 %1405
        %v1407 = vrcp.pop 128.0
        %v1408 = vmul.f32 %v1404, %v1407
        %v1409 = vmul.f32 %v1406, %v1407
        %v1410 = vsub.f32 %v1401, %v1408
        %v1411 = vsub.f32 %v1402, %v1409
        %v1412 = vmul.f32 %v1410, %v1410
        %v1413 = vmul.f32 %v1411, %v1411
        %1414 = vadd.xlane.f32.xlu0 %v1412
        %v1415 = vpop.xlane.xlu0 %1414
        %1416 = vadd.xlane.f32.xlu0 %v1413
        %v1417 = vpop.xlane.xlu0 %1416
        %v1418 = vmul.f32 %v1415, %v1407
        %v1419 = vmul.f32 %v1417, %v1407
        %v1420 = vadd.f32 %v1418, 1e-05
        %v1421 = vadd.f32 %v1419, 1e-05
        %v1422 = vrsqrt.pop %v1420
        %v1423 = vrsqrt.pop %v1421
        %v1424 = vmul.f32 %v1410, %v1422
        %v1425 = vmul.f32 %v1411, %v1423
        %v1426 = vld [vmem:[#allocation10] sm:$0x1]
        %v1428 = vlaneseq
        %v1429 = vshrl.u32 %v1428, 7
        %v1430 = vsub.s32 0, %v1429
        %v1431 = vrot.slane %v1426, %v1430
        %v1433 = vmul.f32 %v1424, %v1431
        %v1434 = vmul.f32 %v1425, %v1431
        %v1435 = vld [vmem:[#allocation11] sm:$0x1]
        %v1437 = vlaneseq
        %v1438 = vshrl.u32 %v1437, 7
        %v1439 = vsub.s32 0, %v1438
        %v1440 = vrot.slane %v1435, %v1439
        %v1442 = vadd.f32 %v1433, %v1440
        %v1443 = vadd.f32 %v1434, %v1440
        %v1444 = vpack.c.bf16 %v1443, %v1442
        %v1445 = vld [vmem:[%s14] sm:$0xff]
        %v1446 = vld [vmem:[%s14 + $0x8] sm:$0xff]
        %v1447 = vld [vmem:[%s14 + $0x10] sm:$0xff]
        %v1448 = vld [vmem:[%s14 + $0x18] sm:$0xff]
        %v1449 = vld [vmem:[%s14 + $0x20] sm:$0xff]
        %v1450 = vld [vmem:[%s14 + $0x28] sm:$0xff]
        %v1451 = vld [vmem:[%s14 + $0x30] sm:$0xff]
        %v1452 = vld [vmem:[%s14 + $0x38] sm:$0xff]
        %v1453 = vld [vmem:[%s14 + $0x40] sm:$0xff]
        %v1454 = vld [vmem:[%s14 + $0x48] sm:$0xff]
        %v1455 = vld [vmem:[%s14 + $0x50] sm:$0xff]
        %v1456 = vld [vmem:[%s14 + $0x58] sm:$0xff]
        %v1457 = vld [vmem:[%s14 + $0x60] sm:$0xff]
        %v1458 = vld [vmem:[%s14 + $0x68] sm:$0xff]
        %v1459 = vld [vmem:[%s14 + $0x70] sm:$0xff]
        %v1460 = vld [vmem:[%s14 + $0x78] sm:$0xff]
        %v1461 = vld [vmem:[%s14 + $0x80] sm:$0xff]
        %v1462 = vld [vmem:[%s14 + $0x88] sm:$0xff]
        %v1463 = vld [vmem:[%s14 + $0x90] sm:$0xff]
        %v1464 = vld [vmem:[%s14 + $0x98] sm:$0xff]
        %v1465 = vld [vmem:[%s14 + $0xa0] sm:$0xff]
        %v1466 = vld [vmem:[%s14 + $0xa8] sm:$0xff]
        %v1467 = vld [vmem:[%s14 + $0xb0] sm:$0xff]
        %v1468 = vld [vmem:[%s14 + $0xb8] sm:$0xff]
        %v1469 = vld [vmem:[%s14 + $0xc0] sm:$0xff]
        %v1470 = vld [vmem:[%s14 + $0xc8] sm:$0xff]
        %v1471 = vld [vmem:[%s14 + $0xd0] sm:$0xff]
        %v1472 = vld [vmem:[%s14 + $0xd8] sm:$0xff]
        %v1473 = vld [vmem:[%s14 + $0xe0] sm:$0xff]
        %v1474 = vld [vmem:[%s14 + $0xe8] sm:$0xff]
        %v1475 = vld [vmem:[%s14 + $0xf0] sm:$0xff]
        %v1476 = vld [vmem:[%s14 + $0xf8] sm:$0xff]
        %v1477 = vld [vmem:[%s15] sm:$0xf]
        %v1479 = vlaneseq
        %v1480 = vshrl.u32 %v1479, 7
        %v1481 = vsub.s32 0, %v1480
        %v1482 = vrot.slane %v1477, %v1481
        %v1483 = vlaneseq
        %v1484 = vshrl.u32 %v1483, 7
        %v1485 = vsub.s32 1, %v1484
        %v1486 = vrot.slane %v1477, %v1485
        %v1487 = vlaneseq
        %v1488 = vshrl.u32 %v1487, 7
        %v1489 = vsub.s32 2, %v1488
        %v1490 = vrot.slane %v1477, %v1489
        %v1491 = vlaneseq
        %v1492 = vshrl.u32 %v1491, 7
        %v1493 = vsub.s32 3, %v1492
        %v1494 = vrot.slane %v1477, %v1493
        %v1531 = vunpack.c.l.b16 %v1445
        %v1532 = vunpack.c.h.b16 %v1445
        %v1533 = vunpack.c.l.b16 %v1446
        %v1534 = vunpack.c.h.b16 %v1446
        %v1535 = vunpack.c.l.b16 %v1447
        %v1536 = vunpack.c.h.b16 %v1447
        %v1537 = vunpack.c.l.b16 %v1448
        %v1538 = vunpack.c.h.b16 %v1448
        %v1539 = vunpack.c.l.b16 %v1449
        %v1540 = vunpack.c.h.b16 %v1449
        %v1541 = vunpack.c.l.b16 %v1450
        %v1542 = vunpack.c.h.b16 %v1450
        %v1543 = vunpack.c.l.b16 %v1451
        %v1544 = vunpack.c.h.b16 %v1451
        %v1545 = vunpack.c.l.b16 %v1452
        %v1546 = vunpack.c.h.b16 %v1452
        %v1547 = vunpack.c.l.b16 %v1453
        %v1548 = vunpack.c.h.b16 %v1453
        %v1549 = vunpack.c.l.b16 %v1454
        %v1550 = vunpack.c.h.b16 %v1454
        %v1551 = vunpack.c.l.b16 %v1455
        %v1552 = vunpack.c.h.b16 %v1455
        %v1553 = vunpack.c.l.b16 %v1456
        %v1554 = vunpack.c.h.b16 %v1456
        %v1555 = vunpack.c.l.b16 %v1457
        %v1556 = vunpack.c.h.b16 %v1457
        %v1557 = vunpack.c.l.b16 %v1458
        %v1558 = vunpack.c.h.b16 %v1458
        %v1559 = vunpack.c.l.b16 %v1459
        %v1560 = vunpack.c.h.b16 %v1459
        %v1561 = vunpack.c.l.b16 %v1460
        %v1562 = vunpack.c.h.b16 %v1460
        %v1563 = vunpack.c.l.b16 %v1461
        %v1564 = vunpack.c.h.b16 %v1461
        %v1565 = vunpack.c.l.b16 %v1462
        %v1566 = vunpack.c.h.b16 %v1462
        %v1567 = vunpack.c.l.b16 %v1463
        %v1568 = vunpack.c.h.b16 %v1463
        %v1569 = vunpack.c.l.b16 %v1464
        %v1570 = vunpack.c.h.b16 %v1464
        %v1571 = vunpack.c.l.b16 %v1465
        %v1572 = vunpack.c.h.b16 %v1465
        %v1573 = vunpack.c.l.b16 %v1466
        %v1574 = vunpack.c.h.b16 %v1466
        %v1575 = vunpack.c.l.b16 %v1467
        %v1576 = vunpack.c.h.b16 %v1467
        %v1577 = vunpack.c.l.b16 %v1468
        %v1578 = vunpack.c.h.b16 %v1468
        %v1579 = vunpack.c.l.b16 %v1469
        %v1580 = vunpack.c.h.b16 %v1469
        %v1581 = vunpack.c.l.b16 %v1470
        %v1582 = vunpack.c.h.b16 %v1470
        %v1583 = vunpack.c.l.b16 %v1471
        %v1584 = vunpack.c.h.b16 %v1471
        %v1585 = vunpack.c.l.b16 %v1472
        %v1586 = vunpack.c.h.b16 %v1472
        %v1587 = vunpack.c.l.b16 %v1473
        %v1588 = vunpack.c.h.b16 %v1473
        %v1589 = vunpack.c.l.b16 %v1474
        %v1590 = vunpack.c.h.b16 %v1474
        %v1591 = vunpack.c.l.b16 %v1475
        %v1592 = vunpack.c.h.b16 %v1475
        %v1593 = vunpack.c.l.b16 %v1476
        %v1594 = vunpack.c.h.b16 %v1476
        %v1595 = vpack.c.b16 %v1535, %v1531
        %v1596 = vpack.c.b16 %v1536, %v1532
        %v1597 = vpack.c.b16 %v1537, %v1533
        %v1598 = vpack.c.b16 %v1538, %v1534
        %v1599 = vpack.c.b16 %v1543, %v1539
        %v1600 = vpack.c.b16 %v1544, %v1540
        %v1601 = vpack.c.b16 %v1545, %v1541
        %v1602 = vpack.c.b16 %v1546, %v1542
        %v1603 = vpack.c.b16 %v1551, %v1547
        %v1604 = vpack.c.b16 %v1552, %v1548
        %v1605 = vpack.c.b16 %v1553, %v1549
        %v1606 = vpack.c.b16 %v1554, %v1550
        %v1607 = vpack.c.b16 %v1559, %v1555
        %v1608 = vpack.c.b16 %v1560, %v1556
        %v1609 = vpack.c.b16 %v1561, %v1557
        %v1610 = vpack.c.b16 %v1562, %v1558
        %v1611 = vpack.c.b16 %v1567, %v1563
        %v1612 = vpack.c.b16 %v1568, %v1564
        %v1613 = vpack.c.b16 %v1569, %v1565
        %v1614 = vpack.c.b16 %v1570, %v1566
        %v1615 = vpack.c.b16 %v1575, %v1571
        %v1616 = vpack.c.b16 %v1576, %v1572
        %v1617 = vpack.c.b16 %v1577, %v1573
        %v1618 = vpack.c.b16 %v1578, %v1574
        %v1619 = vpack.c.b16 %v1583, %v1579
        %v1620 = vpack.c.b16 %v1584, %v1580
        %v1621 = vpack.c.b16 %v1585, %v1581
        %v1622 = vpack.c.b16 %v1586, %v1582
        %v1623 = vpack.c.b16 %v1591, %v1587
        %v1624 = vpack.c.b16 %v1592, %v1588
        %v1625 = vpack.c.b16 %v1593, %v1589
        %v1626 = vpack.c.b16 %v1594, %v1590
        %1659 = vmatprep.subr.bf16.mxu0 %v1596
        %1660 = vmatpush1.bf16.msra.mxu0 %v1595
        %1661 = vmatprep.subr.bf16.mxu0 %v1600
        %1662 = vmatpush1.bf16.msra.mxu0 %v1599
        %1663 = vmatprep.subr.bf16.mxu0 %v1604
        %1664 = vmatpush1.bf16.msra.mxu0 %v1603
        %1665 = vmatprep.subr.bf16.mxu0 %v1608
        %1666 = vmatpush1.bf16.msra.mxu0 %v1607
        %1667 = vmatprep.subr.bf16.mxu0 %v1612
        %1668 = vmatpush1.bf16.msra.mxu0 %v1611
        %1669 = vmatprep.subr.bf16.mxu0 %v1616
        %1670 = vmatpush1.bf16.msra.mxu0 %v1615
        %1671 = vmatprep.subr.bf16.mxu0 %v1620
        %1672 = vmatpush1.bf16.msra.mxu0 %v1619
        %1673 = vmatprep.subr.bf16.mxu0 %v1624
        %1674 = vmatpush1.bf16.msra.mxu0 %v1623
        %1675 = vmatprep.subr.bf16.mxu0 0
        %1676 = vmatpush1.bf16.msra.mxu0 0
        %1677 = vmatprep.subr.bf16.mxu0 0
        %1678 = vmatpush1.bf16.msra.mxu0 0
        %1679 = vmatprep.subr.bf16.mxu0 0
        %1680 = vmatpush1.bf16.msra.mxu0 0
        %1681 = vmatprep.subr.bf16.mxu0 0
        %1682 = vmatpush1.bf16.msra.mxu0 0
        %1683 = vmatprep.subr.bf16.mxu0 0
        %1684 = vmatpush1.bf16.msra.mxu0 0
        %1685 = vmatprep.subr.bf16.mxu0 0
        %1686 = vmatpush1.bf16.msra.mxu0 0
        %1687 = vmatprep.subr.bf16.mxu0 0
        %1688 = vmatpush1.bf16.msra.mxu0 0
        %1689 = vmatprep.subr.bf16.mxu0 0
        %1690 = vmatpush1.bf16.msra.mxu0 0
        %1691 = vmatprep.mubr.bf16.mxu0 0
        %1692 = vmatmul.mubr.bf16.gmra.mrb[0].mxu0 %v1444
        %v1693 = vpop.f32.mrb[0].mxu0
        %v1694 = vadd.f32 %v1482, %v1693
        %v1695 = vpop.f32.mrb[0].mxu0
        %v1696 = vadd.f32 %v1486, %v1695
        %v1697 = vpop.f32.mrb[0].mxu0
        %v1698 = vadd.f32 %v1482, %v1697
        %v1699 = vpop.f32.mrb[0].mxu0
        %v1700 = vadd.f32 %v1486, %v1699
        %1701 = vdwg.mxu0
        %1702 = vmatprep.subr.bf16.mxu0 %v1598
        %1703 = vmatpush1.bf16.msra.mxu0 %v1597
        %1704 = vmatprep.subr.bf16.mxu0 %v1602
        %1705 = vmatpush1.bf16.msra.mxu0 %v1601
        %1706 = vmatprep.subr.bf16.mxu0 %v1606
        %1707 = vmatpush1.bf16.msra.mxu0 %v1605
        %1708 = vmatprep.subr.bf16.mxu0 %v1610
        %1709 = vmatpush1.bf16.msra.mxu0 %v1609
        %1710 = vmatprep.subr.bf16.mxu0 %v1614
        %1711 = vmatpush1.bf16.msra.mxu0 %v1613
        %1712 = vmatprep.subr.bf16.mxu0 %v1618
        %1713 = vmatpush1.bf16.msra.mxu0 %v1617
        %1714 = vmatprep.subr.bf16.mxu0 %v1622
        %1715 = vmatpush1.bf16.msra.mxu0 %v1621
        %1716 = vmatprep.subr.bf16.mxu0 %v1626
        %1717 = vmatpush1.bf16.msra.mxu0 %v1625
        %1718 = vmatprep.subr.bf16.mxu0 0
        %1719 = vmatpush1.bf16.msra.mxu0 0
        %1720 = vmatprep.subr.bf16.mxu0 0
        %1721 = vmatpush1.bf16.msra.mxu0 0
        %1722 = vmatprep.subr.bf16.mxu0 0
        %1723 = vmatpush1.bf16.msra.mxu0 0
        %1724 = vmatprep.subr.bf16.mxu0 0
        %1725 = vmatpush1.bf16.msra.mxu0 0
        %1726 = vmatprep.subr.bf16.mxu0 0
        %1727 = vmatpush1.bf16.msra.mxu0 0
        %1728 = vmatprep.subr.bf16.mxu0 0
        %1729 = vmatpush1.bf16.msra.mxu0 0
        %1730 = vmatprep.subr.bf16.mxu0 0
        %1731 = vmatpush1.bf16.msra.mxu0 0
        %1732 = vmatprep.subr.bf16.mxu0 0
        %1733 = vmatpush1.bf16.msra.mxu0 0
        %1734 = vmatprep.mubr.bf16.mxu0 0
        %1735 = vmatmul.mubr.bf16.gmra.mrb[0].mxu0 %v1444
        %v1736 = vpop.f32.mrb[0].mxu0
        %v1737 = vadd.f32 %v1490, %v1736
        %v1738 = vpop.f32.mrb[0].mxu0
        %v1739 = vadd.f32 %v1494, %v1738
        %v1740 = vpop.f32.mrb[0].mxu0
        %v1741 = vadd.f32 %v1490, %v1740
        %v1742 = vpop.f32.mrb[0].mxu0
        %v1743 = vadd.f32 %v1494, %v1742
        %1744 = vdwg.mxu0
        %v1745 = vmax.f32 %v1694, 0.0
        %v1746 = vmax.f32 %v1696, 0.0
        %v1747 = vmax.f32 %v1737, 0.0
        %v1748 = vmax.f32 %v1739, 0.0
        %v1749 = vmax.f32 %v1698, 0.0
        %v1750 = vmax.f32 %v1700, 0.0
        %v1751 = vmax.f32 %v1741, 0.0
        %v1752 = vmax.f32 %v1743, 0.0
        %v1753 = vpack.c.bf16 %v1749, %v1745
        %v1754 = vpack.c.bf16 %v1750, %v1746
        %v1755 = vpack.c.bf16 %v1751, %v1747
        %v1756 = vpack.c.bf16 %v1752, %v1748
        %v1757 = vld [vmem:[#allocation13] sm:$0xff]
        %v1758 = vld [vmem:[#allocation13 + $0x8] sm:$0xff]
        %v1759 = vld [vmem:[#allocation13 + $0x10] sm:$0xff]
        %v1760 = vld [vmem:[#allocation13 + $0x18] sm:$0xff]
        %v1761 = vld [vmem:[#allocation13 + $0x20] sm:$0xff]
        %v1762 = vld [vmem:[#allocation13 + $0x28] sm:$0xff]
        %v1763 = vld [vmem:[#allocation13 + $0x30] sm:$0xff]
        %v1764 = vld [vmem:[#allocation13 + $0x38] sm:$0xff]
        %v1765 = vld [vmem:[#allocation13 + $0x40] sm:$0xff]
        %v1766 = vld [vmem:[#allocation13 + $0x48] sm:$0xff]
        %v1767 = vld [vmem:[#allocation13 + $0x50] sm:$0xff]
        %v1768 = vld [vmem:[#allocation13 + $0x58] sm:$0xff]
        %v1769 = vld [vmem:[#allocation13 + $0x60] sm:$0xff]
        %v1770 = vld [vmem:[#allocation13 + $0x68] sm:$0xff]
        %v1771 = vld [vmem:[#allocation13 + $0x70] sm:$0xff]
        %v1772 = vld [vmem:[#allocation13 + $0x78] sm:$0xff]
        %v1773 = vld [vmem:[#allocation13 + $0x80] sm:$0xff]
        %v1774 = vld [vmem:[#allocation13 + $0x88] sm:$0xff]
        %v1775 = vld [vmem:[#allocation13 + $0x90] sm:$0xff]
        %v1776 = vld [vmem:[#allocation13 + $0x98] sm:$0xff]
        %v1777 = vld [vmem:[#allocation13 + $0xa0] sm:$0xff]
        %v1778 = vld [vmem:[#allocation13 + $0xa8] sm:$0xff]
        %v1779 = vld [vmem:[#allocation13 + $0xb0] sm:$0xff]
        %v1780 = vld [vmem:[#allocation13 + $0xb8] sm:$0xff]
        %v1781 = vld [vmem:[#allocation13 + $0xc0] sm:$0xff]
        %v1782 = vld [vmem:[#allocation13 + $0xc8] sm:$0xff]
        %v1783 = vld [vmem:[#allocation13 + $0xd0] sm:$0xff]
        %v1784 = vld [vmem:[#allocation13 + $0xd8] sm:$0xff]
        %v1785 = vld [vmem:[#allocation13 + $0xe0] sm:$0xff]
        %v1786 = vld [vmem:[#allocation13 + $0xe8] sm:$0xff]
        %v1787 = vld [vmem:[#allocation13 + $0xf0] sm:$0xff]
        %v1788 = vld [vmem:[#allocation13 + $0xf8] sm:$0xff]
        %v1789 = vld [vmem:[#allocation13 + $0x100] sm:$0xff]
        %v1790 = vld [vmem:[#allocation13 + $0x108] sm:$0xff]
        %v1791 = vld [vmem:[#allocation13 + $0x110] sm:$0xff]
        %v1792 = vld [vmem:[#allocation13 + $0x118] sm:$0xff]
        %v1793 = vld [vmem:[#allocation13 + $0x120] sm:$0xff]
        %v1794 = vld [vmem:[#allocation13 + $0x128] sm:$0xff]
        %v1795 = vld [vmem:[#allocation13 + $0x130] sm:$0xff]
        %v1796 = vld [vmem:[#allocation13 + $0x138] sm:$0xff]
        %v1797 = vld [vmem:[#allocation13 + $0x140] sm:$0xff]
        %v1798 = vld [vmem:[#allocation13 + $0x148] sm:$0xff]
        %v1799 = vld [vmem:[#allocation13 + $0x150] sm:$0xff]
        %v1800 = vld [vmem:[#allocation13 + $0x158] sm:$0xff]
        %v1801 = vld [vmem:[#allocation13 + $0x160] sm:$0xff]
        %v1802 = vld [vmem:[#allocation13 + $0x168] sm:$0xff]
        %v1803 = vld [vmem:[#allocation13 + $0x170] sm:$0xff]
        %v1804 = vld [vmem:[#allocation13 + $0x178] sm:$0xff]
        %v1805 = vld [vmem:[#allocation13 + $0x180] sm:$0xff]
        %v1806 = vld [vmem:[#allocation13 + $0x188] sm:$0xff]
        %v1807 = vld [vmem:[#allocation13 + $0x190] sm:$0xff]
        %v1808 = vld [vmem:[#allocation13 + $0x198] sm:$0xff]
        %v1809 = vld [vmem:[#allocation13 + $0x1a0] sm:$0xff]
        %v1810 = vld [vmem:[#allocation13 + $0x1a8] sm:$0xff]
        %v1811 = vld [vmem:[#allocation13 + $0x1b0] sm:$0xff]
        %v1812 = vld [vmem:[#allocation13 + $0x1b8] sm:$0xff]
        %v1813 = vld [vmem:[#allocation13 + $0x1c0] sm:$0xff]
        %v1814 = vld [vmem:[#allocation13 + $0x1c8] sm:$0xff]
        %v1815 = vld [vmem:[#allocation13 + $0x1d0] sm:$0xff]
        %v1816 = vld [vmem:[#allocation13 + $0x1d8] sm:$0xff]
        %v1817 = vld [vmem:[#allocation13 + $0x1e0] sm:$0xff]
        %v1818 = vld [vmem:[#allocation13 + $0x1e8] sm:$0xff]
        %v1819 = vld [vmem:[#allocation13 + $0x1f0] sm:$0xff]
        %v1820 = vld [vmem:[#allocation13 + $0x1f8] sm:$0xff]
        %v1821 = vld [vmem:[#allocation13 + $0x200] sm:$0xff]
        %v1822 = vld [vmem:[#allocation13 + $0x208] sm:$0xff]
        %v1823 = vld [vmem:[#allocation13 + $0x210] sm:$0xff]
        %v1824 = vld [vmem:[#allocation13 + $0x218] sm:$0xff]
        %v1825 = vld [vmem:[#allocation13 + $0x220] sm:$0xff]
        %v1826 = vld [vmem:[#allocation13 + $0x228] sm:$0xff]
        %v1827 = vld [vmem:[#allocation13 + $0x230] sm:$0xff]
        %v1828 = vld [vmem:[#allocation13 + $0x238] sm:$0xff]
        %v1829 = vld [vmem:[#allocation13 + $0x240] sm:$0xff]
        %v1830 = vld [vmem:[#allocation13 + $0x248] sm:$0xff]
        %v1831 = vld [vmem:[#allocation13 + $0x250] sm:$0xff]
        %v1832 = vld [vmem:[#allocation13 + $0x258] sm:$0xff]
        %v1833 = vld [vmem:[#allocation13 + $0x260] sm:$0xff]
        %v1834 = vld [vmem:[#allocation13 + $0x268] sm:$0xff]
        %v1835 = vld [vmem:[#allocation13 + $0x270] sm:$0xff]
        %v1836 = vld [vmem:[#allocation13 + $0x278] sm:$0xff]
        %v1837 = vld [vmem:[#allocation13 + $0x280] sm:$0xff]
        %v1838 = vld [vmem:[#allocation13 + $0x288] sm:$0xff]
        %v1839 = vld [vmem:[#allocation13 + $0x290] sm:$0xff]
        %v1840 = vld [vmem:[#allocation13 + $0x298] sm:$0xff]
        %v1841 = vld [vmem:[#allocation13 + $0x2a0] sm:$0xff]
        %v1842 = vld [vmem:[#allocation13 + $0x2a8] sm:$0xff]
        %v1843 = vld [vmem:[#allocation13 + $0x2b0] sm:$0xff]
        %v1844 = vld [vmem:[#allocation13 + $0x2b8] sm:$0xff]
        %v1845 = vld [vmem:[#allocation13 + $0x2c0] sm:$0xff]
        %v1846 = vld [vmem:[#allocation13 + $0x2c8] sm:$0xff]
        %v1847 = vld [vmem:[#allocation13 + $0x2d0] sm:$0xff]
        %v1848 = vld [vmem:[#allocation13 + $0x2d8] sm:$0xff]
        %v1849 = vld [vmem:[#allocation13 + $0x2e0] sm:$0xff]
        %v1850 = vld [vmem:[#allocation13 + $0x2e8] sm:$0xff]
        %v1851 = vld [vmem:[#allocation13 + $0x2f0] sm:$0xff]
        %v1852 = vld [vmem:[#allocation13 + $0x2f8] sm:$0xff]
        %v1853 = vld [vmem:[#allocation13 + $0x300] sm:$0xff]
        %v1854 = vld [vmem:[#allocation13 + $0x308] sm:$0xff]
        %v1855 = vld [vmem:[#allocation13 + $0x310] sm:$0xff]
        %v1856 = vld [vmem:[#allocation13 + $0x318] sm:$0xff]
        %v1857 = vld [vmem:[#allocation13 + $0x320] sm:$0xff]
        %v1858 = vld [vmem:[#allocation13 + $0x328] sm:$0xff]
        %v1859 = vld [vmem:[#allocation13 + $0x330] sm:$0xff]
        %v1860 = vld [vmem:[#allocation13 + $0x338] sm:$0xff]
        %v1861 = vld [vmem:[#allocation13 + $0x340] sm:$0xff]
        %v1862 = vld [vmem:[#allocation13 + $0x348] sm:$0xff]
        %v1863 = vld [vmem:[#allocation13 + $0x350] sm:$0xff]
        %v1864 = vld [vmem:[#allocation13 + $0x358] sm:$0xff]
        %v1865 = vld [vmem:[#allocation13 + $0x360] sm:$0xff]
        %v1866 = vld [vmem:[#allocation13 + $0x368] sm:$0xff]
        %v1867 = vld [vmem:[#allocation13 + $0x370] sm:$0xff]
        %v1868 = vld [vmem:[#allocation13 + $0x378] sm:$0xff]
        %v1869 = vld [vmem:[#allocation13 + $0x380] sm:$0xff]
        %v1870 = vld [vmem:[#allocation13 + $0x388] sm:$0xff]
        %v1871 = vld [vmem:[#allocation13 + $0x390] sm:$0xff]
        %v1872 = vld [vmem:[#allocation13 + $0x398] sm:$0xff]
        %v1873 = vld [vmem:[#allocation13 + $0x3a0] sm:$0xff]
        %v1874 = vld [vmem:[#allocation13 + $0x3a8] sm:$0xff]
        %v1875 = vld [vmem:[#allocation13 + $0x3b0] sm:$0xff]
        %v1876 = vld [vmem:[#allocation13 + $0x3b8] sm:$0xff]
        %v1877 = vld [vmem:[#allocation13 + $0x3c0] sm:$0xff]
        %v1878 = vld [vmem:[#allocation13 + $0x3c8] sm:$0xff]
        %v1879 = vld [vmem:[#allocation13 + $0x3d0] sm:$0xff]
        %v1880 = vld [vmem:[#allocation13 + $0x3d8] sm:$0xff]
        %v1881 = vld [vmem:[#allocation13 + $0x3e0] sm:$0xff]
        %v1882 = vld [vmem:[#allocation13 + $0x3e8] sm:$0xff]
        %v1883 = vld [vmem:[#allocation13 + $0x3f0] sm:$0xff]
        %v1884 = vld [vmem:[#allocation13 + $0x3f8] sm:$0xff]
        %v1885 = vld [vmem:[%s17] sm:$0xf]
        %v1887 = vlaneseq
        %v1888 = vshrl.u32 %v1887, 7
        %v1889 = vsub.s32 0, %v1888
        %v1890 = vrot.slane %v1885, %v1889
        %v1891 = vlaneseq
        %v1892 = vshrl.u32 %v1891, 7
        %v1893 = vsub.s32 1, %v1892
        %v1894 = vrot.slane %v1885, %v1893
        %v1895 = vlaneseq
        %v1896 = vshrl.u32 %v1895, 7
        %v1897 = vsub.s32 2, %v1896
        %v1898 = vrot.slane %v1885, %v1897
        %v1899 = vlaneseq
        %v1900 = vshrl.u32 %v1899, 7
        %v1901 = vsub.s32 3, %v1900
        %v1902 = vrot.slane %v1885, %v1901
        %v2035 = vunpack.c.l.b16 %v1757
        %v2036 = vunpack.c.h.b16 %v1757
        %v2037 = vunpack.c.l.b16 %v1758
        %v2038 = vunpack.c.h.b16 %v1758
        %v2039 = vunpack.c.l.b16 %v1759
        %v2040 = vunpack.c.h.b16 %v1759
        %v2041 = vunpack.c.l.b16 %v1760
        %v2042 = vunpack.c.h.b16 %v1760
        %v2043 = vunpack.c.l.b16 %v1761
        %v2044 = vunpack.c.h.b16 %v1761
        %v2045 = vunpack.c.l.b16 %v1762
        %v2046 = vunpack.c.h.b16 %v1762
        %v2047 = vunpack.c.l.b16 %v1763
        %v2048 = vunpack.c.h.b16 %v1763
        %v2049 = vunpack.c.l.b16 %v1764
        %v2050 = vunpack.c.h.b16 %v1764
        %v2051 = vunpack.c.l.b16 %v1765
        %v2052 = vunpack.c.h.b16 %v1765
        %v2053 = vunpack.c.l.b16 %v1766
        %v2054 = vunpack.c.h.b16 %v1766
        %v2055 = vunpack.c.l.b16 %v1767
        %v2056 = vunpack.c.h.b16 %v1767
        %v2057 = vunpack.c.l.b16 %v1768
        %v2058 = vunpack.c.h.b16 %v1768
        %v2059 = vunpack.c.l.b16 %v1769
        %v2060 = vunpack.c.h.b16 %v1769
        %v2061 = vunpack.c.l.b16 %v1770
        %v2062 = vunpack.c.h.b16 %v1770
        %v2063 = vunpack.c.l.b16 %v1771
        %v2064 = vunpack.c.h.b16 %v1771
        %v2065 = vunpack.c.l.b16 %v1772
        %v2066 = vunpack.c.h.b16 %v1772
        %v2067 = vunpack.c.l.b16 %v1773
        %v2068 = vunpack.c.h.b16 %v1773
        %v2069 = vunpack.c.l.b16 %v1774
        %v2070 = vunpack.c.h.b16 %v1774
        %v2071 = vunpack.c.l.b16 %v1775
        %v2072 = vunpack.c.h.b16 %v1775
        %v2073 = vunpack.c.l.b16 %v1776
        %v2074 = vunpack.c.h.b16 %v1776
        %v2075 = vunpack.c.l.b16 %v1777
        %v2076 = vunpack.c.h.b16 %v1777
        %v2077 = vunpack.c.l.b16 %v1778
        %v2078 = vunpack.c.h.b16 %v1778
        %v2079 = vunpack.c.l.b16 %v1779
        %v2080 = vunpack.c.h.b16 %v1779
        %v2081 = vunpack.c.l.b16 %v1780
        %v2082 = vunpack.c.h.b16 %v1780
        %v2083 = vunpack.c.l.b16 %v1781
        %v2084 = vunpack.c.h.b16 %v1781
        %v2085 = vunpack.c.l.b16 %v1782
        %v2086 = vunpack.c.h.b16 %v1782
        %v2087 = vunpack.c.l.b16 %v1783
        %v2088 = vunpack.c.h.b16 %v1783
        %v2089 = vunpack.c.l.b16 %v1784
        %v2090 = vunpack.c.h.b16 %v1784
        %v2091 = vunpack.c.l.b16 %v1785
        %v2092 = vunpack.c.h.b16 %v1785
        %v2093 = vunpack.c.l.b16 %v1786
        %v2094 = vunpack.c.h.b16 %v1786
        %v2095 = vunpack.c.l.b16 %v1787
        %v2096 = vunpack.c.h.b16 %v1787
        %v2097 = vunpack.c.l.b16 %v1788
        %v2098 = vunpack.c.h.b16 %v1788
        %v2099 = vunpack.c.l.b16 %v1789
        %v2100 = vunpack.c.h.b16 %v1789
        %v2101 = vunpack.c.l.b16 %v1790
        %v2102 = vunpack.c.h.b16 %v1790
        %v2103 = vunpack.c.l.b16 %v1791
        %v2104 = vunpack.c.h.b16 %v1791
        %v2105 = vunpack.c.l.b16 %v1792
        %v2106 = vunpack.c.h.b16 %v1792
        %v2107 = vunpack.c.l.b16 %v1793
        %v2108 = vunpack.c.h.b16 %v1793
        %v2109 = vunpack.c.l.b16 %v1794
        %v2110 = vunpack.c.h.b16 %v1794
        %v2111 = vunpack.c.l.b16 %v1795
        %v2112 = vunpack.c.h.b16 %v1795
        %v2113 = vunpack.c.l.b16 %v1796
        %v2114 = vunpack.c.h.b16 %v1796
        %v2115 = vunpack.c.l.b16 %v1797
        %v2116 = vunpack.c.h.b16 %v1797
        %v2117 = vunpack.c.l.b16 %v1798
        %v2118 = vunpack.c.h.b16 %v1798
        %v2119 = vunpack.c.l.b16 %v1799
        %v2120 = vunpack.c.h.b16 %v1799
        %v2121 = vunpack.c.l.b16 %v1800
        %v2122 = vunpack.c.h.b16 %v1800
        %v2123 = vunpack.c.l.b16 %v1801
        %v2124 = vunpack.c.h.b16 %v1801
        %v2125 = vunpack.c.l.b16 %v1802
        %v2126 = vunpack.c.h.b16 %v1802
        %v2127 = vunpack.c.l.b16 %v1803
        %v2128 = vunpack.c.h.b16 %v1803
        %v2129 = vunpack.c.l.b16 %v1804
        %v2130 = vunpack.c.h.b16 %v1804
        %v2131 = vunpack.c.l.b16 %v1805
        %v2132 = vunpack.c.h.b16 %v1805
        %v2133 = vunpack.c.l.b16 %v1806
        %v2134 = vunpack.c.h.b16 %v1806
        %v2135 = vunpack.c.l.b16 %v1807
        %v2136 = vunpack.c.h.b16 %v1807
        %v2137 = vunpack.c.l.b16 %v1808
        %v2138 = vunpack.c.h.b16 %v1808
        %v2139 = vunpack.c.l.b16 %v1809
        %v2140 = vunpack.c.h.b16 %v1809
        %v2141 = vunpack.c.l.b16 %v1810
        %v2142 = vunpack.c.h.b16 %v1810
        %v2143 = vunpack.c.l.b16 %v1811
        %v2144 = vunpack.c.h.b16 %v1811
        %v2145 = vunpack.c.l.b16 %v1812
        %v2146 = vunpack.c.h.b16 %v1812
        %v2147 = vunpack.c.l.b16 %v1813
        %v2148 = vunpack.c.h.b16 %v1813
        %v2149 = vunpack.c.l.b16 %v1814
        %v2150 = vunpack.c.h.b16 %v1814
        %v2151 = vunpack.c.l.b16 %v1815
        %v2152 = vunpack.c.h.b16 %v1815
        %v2153 = vunpack.c.l.b16 %v1816
        %v2154 = vunpack.c.h.b16 %v1816
        %v2155 = vunpack.c.l.b16 %v1817
        %v2156 = vunpack.c.h.b16 %v1817
        %v2157 = vunpack.c.l.b16 %v1818
        %v2158 = vunpack.c.h.b16 %v1818
        %v2159 = vunpack.c.l.b16 %v1819
        %v2160 = vunpack.c.h.b16 %v1819
        %v2161 = vunpack.c.l.b16 %v1820
        %v2162 = vunpack.c.h.b16 %v1820
        %v2163 = vunpack.c.l.b16 %v1821
        %v2164 = vunpack.c.h.b16 %v1821
        %v2165 = vunpack.c.l.b16 %v1822
        %v2166 = vunpack.c.h.b16 %v1822
        %v2167 = vunpack.c.l.b16 %v1823
        %v2168 = vunpack.c.h.b16 %v1823
        %v2169 = vunpack.c.l.b16 %v1824
        %v2170 = vunpack.c.h.b16 %v1824
        %v2171 = vunpack.c.l.b16 %v1825
        %v2172 = vunpack.c.h.b16 %v1825
        %v2173 = vunpack.c.l.b16 %v1826
        %v2174 = vunpack.c.h.b16 %v1826
        %v2175 = vunpack.c.l.b16 %v1827
        %v2176 = vunpack.c.h.b16 %v1827
        %v2177 = vunpack.c.l.b16 %v1828
        %v2178 = vunpack.c.h.b16 %v1828
        %v2179 = vunpack.c.l.b16 %v1829
        %v2180 = vunpack.c.h.b16 %v1829
        %v2181 = vunpack.c.l.b16 %v1830
        %v2182 = vunpack.c.h.b16 %v1830
        %v2183 = vunpack.c.l.b16 %v1831
        %v2184 = vunpack.c.h.b16 %v1831
        %v2185 = vunpack.c.l.b16 %v1832
        %v2186 = vunpack.c.h.b16 %v1832
        %v2187 = vunpack.c.l.b16 %v1833
        %v2188 = vunpack.c.h.b16 %v1833
        %v2189 = vunpack.c.l.b16 %v1834
        %v2190 = vunpack.c.h.b16 %v1834
        %v2191 = vunpack.c.l.b16 %v1835
        %v2192 = vunpack.c.h.b16 %v1835
        %v2193 = vunpack.c.l.b16 %v1836
        %v2194 = vunpack.c.h.b16 %v1836
        %v2195 = vunpack.c.l.b16 %v1837
        %v2196 = vunpack.c.h.b16 %v1837
        %v2197 = vunpack.c.l.b16 %v1838
        %v2198 = vunpack.c.h.b16 %v1838
        %v2199 = vunpack.c.l.b16 %v1839
        %v2200 = vunpack.c.h.b16 %v1839
        %v2201 = vunpack.c.l.b16 %v1840
        %v2202 = vunpack.c.h.b16 %v1840
        %v2203 = vunpack.c.l.b16 %v1841
        %v2204 = vunpack.c.h.b16 %v1841
        %v2205 = vunpack.c.l.b16 %v1842
        %v2206 = vunpack.c.h.b16 %v1842
        %v2207 = vunpack.c.l.b16 %v1843
        %v2208 = vunpack.c.h.b16 %v1843
        %v2209 = vunpack.c.l.b16 %v1844
        %v2210 = vunpack.c.h.b16 %v1844
        %v2211 = vunpack.c.l.b16 %v1845
        %v2212 = vunpack.c.h.b16 %v1845
        %v2213 = vunpack.c.l.b16 %v1846
        %v2214 = vunpack.c.h.b16 %v1846
        %v2215 = vunpack.c.l.b16 %v1847
        %v2216 = vunpack.c.h.b16 %v1847
        %v2217 = vunpack.c.l.b16 %v1848
        %v2218 = vunpack.c.h.b16 %v1848
        %v2219 = vunpack.c.l.b16 %v1849
        %v2220 = vunpack.c.h.b16 %v1849
        %v2221 = vunpack.c.l.b16 %v1850
        %v2222 = vunpack.c.h.b16 %v1850
        %v2223 = vunpack.c.l.b16 %v1851
        %v2224 = vunpack.c.h.b16 %v1851
        %v2225 = vunpack.c.l.b16 %v1852
        %v2226 = vunpack.c.h.b16 %v1852
        %v2227 = vunpack.c.l.b16 %v1853
        %v2228 = vunpack.c.h.b16 %v1853
        %v2229 = vunpack.c.l.b16 %v1854
        %v2230 = vunpack.c.h.b16 %v1854
        %v2231 = vunpack.c.l.b16 %v1855
        %v2232 = vunpack.c.h.b16 %v1855
        %v2233 = vunpack.c.l.b16 %v1856
        %v2234 = vunpack.c.h.b16 %v1856
        %v2235 = vunpack.c.l.b16 %v1857
        %v2236 = vunpack.c.h.b16 %v1857
        %v2237 = vunpack.c.l.b16 %v1858
        %v2238 = vunpack.c.h.b16 %v1858
        %v2239 = vunpack.c.l.b16 %v1859
        %v2240 = vunpack.c.h.b16 %v1859
        %v2241 = vunpack.c.l.b16 %v1860
        %v2242 = vunpack.c.h.b16 %v1860
        %v2243 = vunpack.c.l.b16 %v1861
        %v2244 = vunpack.c.h.b16 %v1861
        %v2245 = vunpack.c.l.b16 %v1862
        %v2246 = vunpack.c.h.b16 %v1862
        %v2247 = vunpack.c.l.b16 %v1863
        %v2248 = vunpack.c.h.b16 %v1863
        %v2249 = vunpack.c.l.b16 %v1864
        %v2250 = vunpack.c.h.b16 %v1864
        %v2251 = vunpack.c.l.b16 %v1865
        %v2252 = vunpack.c.h.b16 %v1865
        %v2253 = vunpack.c.l.b16 %v1866
        %v2254 = vunpack.c.h.b16 %v1866
        %v2255 = vunpack.c.l.b16 %v1867
        %v2256 = vunpack.c.h.b16 %v1867
        %v2257 = vunpack.c.l.b16 %v1868
        %v2258 = vunpack.c.h.b16 %v1868
        %v2259 = vunpack.c.l.b16 %v1869
        %v2260 = vunpack.c.h.b16 %v1869
        %v2261 = vunpack.c.l.b16 %v1870
        %v2262 = vunpack.c.h.b16 %v1870
        %v2263 = vunpack.c.l.b16 %v1871
        %v2264 = vunpack.c.h.b16 %v1871
        %v2265 = vunpack.c.l.b16 %v1872
        %v2266 = vunpack.c.h.b16 %v1872
        %v2267 = vunpack.c.l.b16 %v1873
        %v2268 = vunpack.c.h.b16 %v1873
        %v2269 = vunpack.c.l.b16 %v1874
        %v2270 = vunpack.c.h.b16 %v1874
        %v2271 = vunpack.c.l.b16 %v1875
        %v2272 = vunpack.c.h.b16 %v1875
        %v2273 = vunpack.c.l.b16 %v1876
        %v2274 = vunpack.c.h.b16 %v1876
        %v2275 = vunpack.c.l.b16 %v1877
        %v2276 = vunpack.c.h.b16 %v1877
        %v2277 = vunpack.c.l.b16 %v1878
        %v2278 = vunpack.c.h.b16 %v1878
        %v2279 = vunpack.c.l.b16 %v1879
        %v2280 = vunpack.c.h.b16 %v1879
        %v2281 = vunpack.c.l.b16 %v1880
        %v2282 = vunpack.c.h.b16 %v1880
        %v2283 = vunpack.c.l.b16 %v1881
        %v2284 = vunpack.c.h.b16 %v1881
        %v2285 = vunpack.c.l.b16 %v1882
        %v2286 = vunpack.c.h.b16 %v1882
        %v2287 = vunpack.c.l.b16 %v1883
        %v2288 = vunpack.c.h.b16 %v1883
        %v2289 = vunpack.c.l.b16 %v1884
        %v2290 = vunpack.c.h.b16 %v1884
        %v2291 = vpack.c.b16 %v2039, %v2035
        %v2292 = vpack.c.b16 %v2040, %v2036
        %v2293 = vpack.c.b16 %v2041, %v2037
        %v2294 = vpack.c.b16 %v2042, %v2038
        %v2295 = vpack.c.b16 %v2047, %v2043
        %v2296 = vpack.c.b16 %v2048, %v2044
        %v2297 = vpack.c.b16 %v2049, %v2045
        %v2298 = vpack.c.b16 %v2050, %v2046
        %v2299 = vpack.c.b16 %v2055, %v2051
        %v2300 = vpack.c.b16 %v2056, %v2052
        %v2301 = vpack.c.b16 %v2057, %v2053
        %v2302 = vpack.c.b16 %v2058, %v2054
        %v2303 = vpack.c.b16 %v2063, %v2059
        %v2304 = vpack.c.b16 %v2064, %v2060
        %v2305 = vpack.c.b16 %v2065, %v2061
        %v2306 = vpack.c.b16 %v2066, %v2062
        %v2307 = vpack.c.b16 %v2071, %v2067
        %v2308 = vpack.c.b16 %v2072, %v2068
        %v2309 = vpack.c.b16 %v2073, %v2069
        %v2310 = vpack.c.b16 %v2074, %v2070
        %v2311 = vpack.c.b16 %v2079, %v2075
        %v2312 = vpack.c.b16 %v2080, %v2076
        %v2313 = vpack.c.b16 %v2081, %v2077
        %v2314 = vpack.c.b16 %v2082, %v2078
        %v2315 = vpack.c.b16 %v2087, %v2083
        %v2316 = vpack.c.b16 %v2088, %v2084
        %v2317 = vpack.c.b16 %v2089, %v2085
        %v2318 = vpack.c.b16 %v2090, %v2086
        %v2319 = vpack.c.b16 %v2095, %v2091
        %v2320 = vpack.c.b16 %v2096, %v2092
        %v2321 = vpack.c.b16 %v2097, %v2093
        %v2322 = vpack.c.b16 %v2098, %v2094
        %v2323 = vpack.c.b16 %v2103, %v2099
        %v2324 = vpack.c.b16 %v2104, %v2100
        %v2325 = vpack.c.b16 %v2105, %v2101
        %v2326 = vpack.c.b16 %v2106, %v2102
        %v2327 = vpack.c.b16 %v2111, %v2107
        %v2328 = vpack.c.b16 %v2112, %v2108
        %v2329 = vpack.c.b16 %v2113, %v2109
        %v2330 = vpack.c.b16 %v2114, %v2110
        %v2331 = vpack.c.b16 %v2119, %v2115
        %v2332 = vpack.c.b16 %v2120, %v2116
        %v2333 = vpack.c.b16 %v2121, %v2117
        %v2334 = vpack.c.b16 %v2122, %v2118
        %v2335 = vpack.c.b16 %v2127, %v2123
        %v2336 = vpack.c.b16 %v2128, %v2124
        %v2337 = vpack.c.b16 %v2129, %v2125
        %v2338 = vpack.c.b16 %v2130, %v2126
        %v2339 = vpack.c.b16 %v2135, %v2131
        %v2340 = vpack.c.b16 %v2136, %v2132
        %v2341 = vpack.c.b16 %v2137, %v2133
        %v2342 = vpack.c.b16 %v2138, %v2134
        %v2343 = vpack.c.b16 %v2143, %v2139
        %v2344 = vpack.c.b16 %v2144, %v2140
        %v2345 = vpack.c.b16 %v2145, %v2141
        %v2346 = vpack.c.b16 %v2146, %v2142
        %v2347 = vpack.c.b16 %v2151, %v2147
        %v2348 = vpack.c.b16 %v2152, %v2148
        %v2349 = vpack.c.b16 %v2153, %v2149
        %v2350 = vpack.c.b16 %v2154, %v2150
        %v2351 = vpack.c.b16 %v2159, %v2155
        %v2352 = vpack.c.b16 %v2160, %v2156
        %v2353 = vpack.c.b16 %v2161, %v2157
        %v2354 = vpack.c.b16 %v2162, %v2158
        %v2355 = vpack.c.b16 %v2167, %v2163
        %v2356 = vpack.c.b16 %v2168, %v2164
        %v2357 = vpack.c.b16 %v2169, %v2165
        %v2358 = vpack.c.b16 %v2170, %v2166
        %v2359 = vpack.c.b16 %v2175, %v2171
        %v2360 = vpack.c.b16 %v2176, %v2172
        %v2361 = vpack.c.b16 %v2177, %v2173
        %v2362 = vpack.c.b16 %v2178, %v2174
        %v2363 = vpack.c.b16 %v2183, %v2179
        %v2364 = vpack.c.b16 %v2184, %v2180
        %v2365 = vpack.c.b16 %v2185, %v2181
        %v2366 = vpack.c.b16 %v2186, %v2182
        %v2367 = vpack.c.b16 %v2191, %v2187
        %v2368 = vpack.c.b16 %v2192, %v2188
        %v2369 = vpack.c.b16 %v2193, %v2189
        %v2370 = vpack.c.b16 %v2194, %v2190
        %v2371 = vpack.c.b16 %v2199, %v2195
        %v2372 = vpack.c.b16 %v2200, %v2196
        %v2373 = vpack.c.b16 %v2201, %v2197
        %v2374 = vpack.c.b16 %v2202, %v2198
        %v2375 = vpack.c.b16 %v2207, %v2203
        %v2376 = vpack.c.b16 %v2208, %v2204
        %v2377 = vpack.c.b16 %v2209, %v2205
        %v2378 = vpack.c.b16 %v2210, %v2206
        %v2379 = vpack.c.b16 %v2215, %v2211
        %v2380 = vpack.c.b16 %v2216, %v2212
        %v2381 = vpack.c.b16 %v2217, %v2213
        %v2382 = vpack.c.b16 %v2218, %v2214
        %v2383 = vpack.c.b16 %v2223, %v2219
        %v2384 = vpack.c.b16 %v2224, %v2220
        %v2385 = vpack.c.b16 %v2225, %v2221
        %v2386 = vpack.c.b16 %v2226, %v2222
        %v2387 = vpack.c.b16 %v2231, %v2227
        %v2388 = vpack.c.b16 %v2232, %v2228
        %v2389 = vpack.c.b16 %v2233, %v2229
        %v2390 = vpack.c.b16 %v2234, %v2230
        %v2391 = vpack.c.b16 %v2239, %v2235
        %v2392 = vpack.c.b16 %v2240, %v2236
        %v2393 = vpack.c.b16 %v2241, %v2237
        %v2394 = vpack.c.b16 %v2242, %v2238
        %v2395 = vpack.c.b16 %v2247, %v2243
        %v2396 = vpack.c.b16 %v2248, %v2244
        %v2397 = vpack.c.b16 %v2249, %v2245
        %v2398 = vpack.c.b16 %v2250, %v2246
        %v2399 = vpack.c.b16 %v2255, %v2251
        %v2400 = vpack.c.b16 %v2256, %v2252
        %v2401 = vpack.c.b16 %v2257, %v2253
        %v2402 = vpack.c.b16 %v2258, %v2254
        %v2403 = vpack.c.b16 %v2263, %v2259
        %v2404 = vpack.c.b16 %v2264, %v2260
        %v2405 = vpack.c.b16 %v2265, %v2261
        %v2406 = vpack.c.b16 %v2266, %v2262
        %v2407 = vpack.c.b16 %v2271, %v2267
        %v2408 = vpack.c.b16 %v2272, %v2268
        %v2409 = vpack.c.b16 %v2273, %v2269
        %v2410 = vpack.c.b16 %v2274, %v2270
        %v2411 = vpack.c.b16 %v2279, %v2275
        %v2412 = vpack.c.b16 %v2280, %v2276
        %v2413 = vpack.c.b16 %v2281, %v2277
        %v2414 = vpack.c.b16 %v2282, %v2278
        %v2415 = vpack.c.b16 %v2287, %v2283
        %v2416 = vpack.c.b16 %v2288, %v2284
        %v2417 = vpack.c.b16 %v2289, %v2285
        %v2418 = vpack.c.b16 %v2290, %v2286
        %2547 = vmatprep.subr.bf16.mxu0 %v2292
        %2548 = vmatpush1.bf16.msra.mxu0 %v2291
        %2549 = vmatprep.subr.bf16.mxu0 %v2296
        %2550 = vmatpush1.bf16.msra.mxu0 %v2295
        %2551 = vmatprep.subr.bf16.mxu0 %v2300
        %2552 = vmatpush1.bf16.msra.mxu0 %v2299
        %2553 = vmatprep.subr.bf16.mxu0 %v2304
        %2554 = vmatpush1.bf16.msra.mxu0 %v2303
        %2555 = vmatprep.subr.bf16.mxu0 %v2308
        %2556 = vmatpush1.bf16.msra.mxu0 %v2307
        %2557 = vmatprep.subr.bf16.mxu0 %v2312
        %2558 = vmatpush1.bf16.msra.mxu0 %v2311
        %2559 = vmatprep.subr.bf16.mxu0 %v2316
        %2560 = vmatpush1.bf16.msra.mxu0 %v2315
        %2561 = vmatprep.subr.bf16.mxu0 %v2320
        %2562 = vmatpush1.bf16.msra.mxu0 %v2319
        %2563 = vmatprep.subr.bf16.mxu0 %v2324
        %2564 = vmatpush1.bf16.msra.mxu0 %v2323
        %2565 = vmatprep.subr.bf16.mxu0 %v2328
        %2566 = vmatpush1.bf16.msra.mxu0 %v2327
        %2567 = vmatprep.subr.bf16.mxu0 %v2332
        %2568 = vmatpush1.bf16.msra.mxu0 %v2331
        %2569 = vmatprep.subr.bf16.mxu0 %v2336
        %2570 = vmatpush1.bf16.msra.mxu0 %v2335
        %2571 = vmatprep.subr.bf16.mxu0 %v2340
        %2572 = vmatpush1.bf16.msra.mxu0 %v2339
        %2573 = vmatprep.subr.bf16.mxu0 %v2344
        %2574 = vmatpush1.bf16.msra.mxu0 %v2343
        %2575 = vmatprep.subr.bf16.mxu0 %v2348
        %2576 = vmatpush1.bf16.msra.mxu0 %v2347
        %2577 = vmatprep.subr.bf16.mxu0 %v2352
        %2578 = vmatpush1.bf16.msra.mxu0 %v2351
        %2579 = vmatprep.mubr.bf16.mxu0 %v1754
        %2580 = vmatmul.mubr.bf16.gmra.mrb[0].mxu0 %v1753
        %v2581 = vpop.f32.mrb[0].mxu0
        %v2582 = vadd.f32 %v1890, %v2581
        %v2583 = vpop.f32.mrb[0].mxu0
        %v2584 = vadd.f32 %v1894, %v2583
        %v2585 = vpop.f32.mrb[0].mxu0
        %v2586 = vadd.f32 %v1890, %v2585
        %v2587 = vpop.f32.mrb[0].mxu0
        %v2588 = vadd.f32 %v1894, %v2587
        %2589 = vdwg.mxu0
        %2590 = vmatprep.subr.bf16.mxu0 %v2356
        %2591 = vmatpush1.bf16.msra.mxu0 %v2355
        %2592 = vmatprep.subr.bf16.mxu0 %v2360
        %2593 = vmatpush1.bf16.msra.mxu0 %v2359
        %2594 = vmatprep.subr.bf16.mxu0 %v2364
        %2595 = vmatpush1.bf16.msra.mxu0 %v2363
        %2596 = vmatprep.subr.bf16.mxu0 %v2368
        %2597 = vmatpush1.bf16.msra.mxu0 %v2367
        %2598 = vmatprep.subr.bf16.mxu0 %v2372
        %2599 = vmatpush1.bf16.msra.mxu0 %v2371
        %2600 = vmatprep.subr.bf16.mxu0 %v2376
        %2601 = vmatpush1.bf16.msra.mxu0 %v2375
        %2602 = vmatprep.subr.bf16.mxu0 %v2380
        %2603 = vmatpush1.bf16.msra.mxu0 %v2379
        %2604 = vmatprep.subr.bf16.mxu0 %v2384
        %2605 = vmatpush1.bf16.msra.mxu0 %v2383
        %2606 = vmatprep.subr.bf16.mxu0 %v2388
        %2607 = vmatpush1.bf16.msra.mxu0 %v2387
        %2608 = vmatprep.subr.bf16.mxu0 %v2392
        %2609 = vmatpush1.bf16.msra.mxu0 %v2391
        %2610 = vmatprep.subr.bf16.mxu0 %v2396
        %2611 = vmatpush1.bf16.msra.mxu0 %v2395
        %2612 = vmatprep.subr.bf16.mxu0 %v2400
        %2613 = vmatpush1.bf16.msra.mxu0 %v2399
        %2614 = vmatprep.subr.bf16.mxu0 %v2404
        %2615 = vmatpush1.bf16.msra.mxu0 %v2403
        %2616 = vmatprep.subr.bf16.mxu0 %v2408
        %2617 = vmatpush1.bf16.msra.mxu0 %v2407
        %2618 = vmatprep.subr.bf16.mxu0 %v2412
        %2619 = vmatpush1.bf16.msra.mxu0 %v2411
        %2620 = vmatprep.subr.bf16.mxu0 %v2416
        %2621 = vmatpush1.bf16.msra.mxu0 %v2415
        %2622 = vmatprep.mubr.bf16.mxu0 %v1756
        %2623 = vmatmul.mubr.bf16.gmra.mrb[0].mxu0 %v1755
        %v2624 = vpop.f32.mrb[0].mxu0
        %v2625 = vadd.f32 %v2582, %v2624
        %v2626 = vpop.f32.mrb[0].mxu0
        %v2627 = vadd.f32 %v2584, %v2626
        %v2628 = vpop.f32.mrb[0].mxu0
        %v2629 = vadd.f32 %v2586, %v2628
        %v2630 = vpop.f32.mrb[0].mxu0
        %v2631 = vadd.f32 %v2588, %v2630
        %2632 = vdwg.mxu0
        %2633 = vmatprep.subr.bf16.mxu0 %v2294
        %2634 = vmatpush1.bf16.msra.mxu0 %v2293
        %2635 = vmatprep.subr.bf16.mxu0 %v2298
        %2636 = vmatpush1.bf16.msra.mxu0 %v2297
        %2637 = vmatprep.subr.bf16.mxu0 %v2302
        %2638 = vmatpush1.bf16.msra.mxu0 %v2301
        %2639 = vmatprep.subr.bf16.mxu0 %v2306
        %2640 = vmatpush1.bf16.msra.mxu0 %v2305
        %2641 = vmatprep.subr.bf16.mxu0 %v2310
        %2642 = vmatpush1.bf16.msra.mxu0 %v2309
        %2643 = vmatprep.subr.bf16.mxu0 %v2314
        %2644 = vmatpush1.bf16.msra.mxu0 %v2313
        %2645 = vmatprep.subr.bf16.mxu0 %v2318
        %2646 = vmatpush1.bf16.msra.mxu0 %v2317
        %2647 = vmatprep.subr.bf16.mxu0 %v2322
        %2648 = vmatpush1.bf16.msra.mxu0 %v2321
        %2649 = vmatprep.subr.bf16.mxu0 %v2326
        %2650 = vmatpush1.bf16.msra.mxu0 %v2325
        %2651 = vmatprep.subr.bf16.mxu0 %v2330
        %2652 = vmatpush1.bf16.msra.mxu0 %v2329
        %2653 = vmatprep.subr.bf16.mxu0 %v2334
        %2654 = vmatpush1.bf16.msra.mxu0 %v2333
        %2655 = vmatprep.subr.bf16.mxu0 %v2338
        %2656 = vmatpush1.bf16.msra.mxu0 %v2337
        %2657 = vmatprep.subr.bf16.mxu0 %v2342
        %2658 = vmatpush1.bf16.msra.mxu0 %v2341
        %2659 = vmatprep.subr.bf16.mxu0 %v2346
        %2660 = vmatpush1.bf16.msra.mxu0 %v2345
        %2661 = vmatprep.subr.bf16.mxu0 %v2350
        %2662 = vmatpush1.bf16.msra.mxu0 %v2349
        %2663 = vmatprep.subr.bf16.mxu0 %v2354
        %2664 = vmatpush1.bf16.msra.mxu0 %v2353
        %2665 = vmatprep.mubr.bf16.mxu0 %v1754
        %2666 = vmatmul.mubr.bf16.gmra.mrb[0].mxu0 %v1753
        %v2667 = vpop.f32.mrb[0].mxu0
        %v2668 = vadd.f32 %v1898, %v2667
        %v2669 = vpop.f32.mrb[0].mxu0
        %v2670 = vadd.f32 %v1902, %v2669
        %v2671 = vpop.f32.mrb[0].mxu0
        %v2672 = vadd.f32 %v1898, %v2671
        %v2673 = vpop.f32.mrb[0].mxu0
        %v2674 = vadd.f32 %v1902, %v2673
        %2675 = vdwg.mxu0
        %2676 = vmatprep.subr.bf16.mxu0 %v2358
        %2677 = vmatpush1.bf16.msra.mxu0 %v2357
        %2678 = vmatprep.subr.bf16.mxu0 %v2362
        %2679 = vmatpush1.bf16.msra.mxu0 %v2361
        %2680 = vmatprep.subr.bf16.mxu0 %v2366
        %2681 = vmatpush1.bf16.msra.mxu0 %v2365
        %2682 = vmatprep.subr.bf16.mxu0 %v2370
        %2683 = vmatpush1.bf16.msra.mxu0 %v2369
        %2684 = vmatprep.subr.bf16.mxu0 %v2374
        %2685 = vmatpush1.bf16.msra.mxu0 %v2373
        %2686 = vmatprep.subr.bf16.mxu0 %v2378
        %2687 = vmatpush1.bf16.msra.mxu0 %v2377
        %2688 = vmatprep.subr.bf16.mxu0 %v2382
        %2689 = vmatpush1.bf16.msra.mxu0 %v2381
        %2690 = vmatprep.subr.bf16.mxu0 %v2386
        %2691 = vmatpush1.bf16.msra.mxu0 %v2385
        %2692 = vmatprep.subr.bf16.mxu0 %v2390
        %2693 = vmatpush1.bf16.msra.mxu0 %v2389
        %2694 = vmatprep.subr.bf16.mxu0 %v2394
        %2695 = vmatpush1.bf16.msra.mxu0 %v2393
        %2696 = vmatprep.subr.bf16.mxu0 %v2398
        %2697 = vmatpush1.bf16.msra.mxu0 %v2397
        %2698 = vmatprep.subr.bf16.mxu0 %v2402
        %2699 = vmatpush1.bf16.msra.mxu0 %v2401
        %2700 = vmatprep.subr.bf16.mxu0 %v2406
        %2701 = vmatpush1.bf16.msra.mxu0 %v2405
        %2702 = vmatprep.subr.bf16.mxu0 %v2410
        %2703 = vmatpush1.bf16.msra.mxu0 %v2409
        %2704 = vmatprep.subr.bf16.mxu0 %v2414
        %2705 = vmatpush1.bf16.msra.mxu0 %v2413
        %2706 = vmatprep.subr.bf16.mxu0 %v2418
        %2707 = vmatpush1.bf16.msra.mxu0 %v2417
        %2708 = vmatprep.mubr.bf16.mxu0 %v1756
        %2709 = vmatmul.mubr.bf16.gmra.mrb[0].mxu0 %v1755
        %v2710 = vpop.f32.mrb[0].mxu0
        %v2711 = vadd.f32 %v2668, %v2710
        %v2712 = vpop.f32.mrb[0].mxu0
        %v2713 = vadd.f32 %v2670, %v2712
        %v2714 = vpop.f32.mrb[0].mxu0
        %v2715 = vadd.f32 %v2672, %v2714
        %v2716 = vpop.f32.mrb[0].mxu0
        %v2717 = vadd.f32 %v2674, %v2716
        %2718 = vdwg.mxu0
        %v2719 = vtanh.pop %v2625
        %v2720 = vtanh.pop %v2627
        %v2721 = vtanh.pop %v2629
        %v2722 = vtanh.pop %v2631
        %v2723 = vxor.u32 %v2711, 2147483648
        %v2724 = vxor.u32 %v2713, 2147483648
        %v2725 = vxor.u32 %v2715, 2147483648
        %v2726 = vxor.u32 %v2717, 2147483648
        %v2727 = vmul.f32 %v2723, 1.442695
        %v2728 = vpow.pop %v2727
        %v2729 = vmul.f32 %v2724, 1.442695
        %v2730 = vpow.pop %v2729
        %v2731 = vmul.f32 %v2725, 1.442695
        %v2732 = vpow.pop %v2731
        %v2733 = vmul.f32 %v2726, 1.442695
        %v2734 = vpow.pop %v2733
        %v2735 = vadd.f32 %v2728, 1.0
        %v2736 = vadd.f32 %v2730, 1.0
        %v2737 = vadd.f32 %v2732, 1.0
        %v2738 = vadd.f32 %v2734, 1.0
        %v2739 = vrcp.pop %v2735
        %v2740 = vmul.f32 1.0, %v2739
        %v2741 = vrcp.pop %v2736
        %v2742 = vmul.f32 1.0, %v2741
        %v2743 = vrcp.pop %v2737
        %v2744 = vmul.f32 1.0, %v2743
        %v2745 = vrcp.pop %v2738
        %v2746 = vmul.f32 1.0, %v2745
        %v2747 = vmul.f32 %v2719, %v2740
        %v2748 = vmul.f32 %v2720, %v2742
        %v2749 = vmul.f32 %v2721, %v2744
        %v2750 = vmul.f32 %v2722, %v2746
        %v2751 = vpack.c.bf16 %v2749, %v2747
        %v2752 = vpack.c.bf16 %v2750, %v2748
        %v2753 = vld [vmem:[%s18] sm:$0xf]
        %v2754 = vld [vmem:[%s18 + $0x4] sm:$0xf]
        %v2755 = vld [vmem:[%s18 + $0x8] sm:$0xf]
        %v2756 = vld [vmem:[%s18 + $0xc] sm:$0xf]
        %v2757 = vld [vmem:[%s18 + $0x10] sm:$0xf]
        %v2758 = vld [vmem:[%s18 + $0x14] sm:$0xf]
        %v2759 = vld [vmem:[%s18 + $0x18] sm:$0xf]
        %v2760 = vld [vmem:[%s18 + $0x1c] sm:$0xf]
        %v2761 = vld [vmem:[%s18 + $0x20] sm:$0xf]
        %v2762 = vld [vmem:[%s18 + $0x24] sm:$0xf]
        %v2763 = vld [vmem:[%s18 + $0x28] sm:$0xf]
        %v2764 = vld [vmem:[%s18 + $0x2c] sm:$0xf]
        %v2765 = vld [vmem:[%s18 + $0x30] sm:$0xf]
        %v2766 = vld [vmem:[%s18 + $0x34] sm:$0xf]
        %v2767 = vld [vmem:[%s18 + $0x38] sm:$0xf]
        %v2768 = vld [vmem:[%s18 + $0x3c] sm:$0xf]
        %v2769 = vld [vmem:[%s18 + $0x40] sm:$0xf]
        %v2770 = vld [vmem:[%s18 + $0x44] sm:$0xf]
        %v2771 = vld [vmem:[%s18 + $0x48] sm:$0xf]
        %v2772 = vld [vmem:[%s18 + $0x4c] sm:$0xf]
        %v2773 = vld [vmem:[%s18 + $0x50] sm:$0xf]
        %v2774 = vld [vmem:[%s18 + $0x54] sm:$0xf]
        %v2775 = vld [vmem:[%s18 + $0x58] sm:$0xf]
        %v2776 = vld [vmem:[%s18 + $0x5c] sm:$0xf]
        %v2777 = vld [vmem:[%s18 + $0x60] sm:$0xf]
        %v2778 = vld [vmem:[%s18 + $0x64] sm:$0xf]
        %v2779 = vld [vmem:[%s18 + $0x68] sm:$0xf]
        %v2780 = vld [vmem:[%s18 + $0x6c] sm:$0xf]
        %v2781 = vld [vmem:[%s18 + $0x70] sm:$0xf]
        %v2782 = vld [vmem:[%s18 + $0x74] sm:$0xf]
        %v2783 = vld [vmem:[%s18 + $0x78] sm:$0xf]
        %v2784 = vld [vmem:[%s18 + $0x7c] sm:$0xf]
        %v2785 = vld [vmem:[%s19] sm:$0x1]
        %v2787 = vlaneseq
        %v2788 = vshrl.u32 %v2787, 7
        %v2789 = vsub.s32 0, %v2788
        %v2790 = vrot.slane %v2785, %v2789
        %v2824 = vunpack.c.l.b16 %v2753
        %v2825 = vunpack.c.l.b16 %v2754
        %v2826 = vunpack.c.l.b16 %v2755
        %v2827 = vunpack.c.l.b16 %v2756
        %v2828 = vunpack.c.l.b16 %v2757
        %v2829 = vunpack.c.l.b16 %v2758
        %v2830 = vunpack.c.l.b16 %v2759
        %v2831 = vunpack.c.l.b16 %v2760
        %v2832 = vunpack.c.l.b16 %v2761
        %v2833 = vunpack.c.l.b16 %v2762
        %v2834 = vunpack.c.l.b16 %v2763
        %v2835 = vunpack.c.l.b16 %v2764
        %v2836 = vunpack.c.l.b16 %v2765
        %v2837 = vunpack.c.l.b16 %v2766
        %v2838 = vunpack.c.l.b16 %v2767
        %v2839 = vunpack.c.l.b16 %v2768
        %v2840 = vunpack.c.l.b16 %v2769
        %v2841 = vunpack.c.l.b16 %v2770
        %v2842 = vunpack.c.l.b16 %v2771
        %v2843 = vunpack.c.l.b16 %v2772
        %v2844 = vunpack.c.l.b16 %v2773
        %v2845 = vunpack.c.l.b16 %v2774
        %v2846 = vunpack.c.l.b16 %v2775
        %v2847 = vunpack.c.l.b16 %v2776
        %v2848 = vunpack.c.l.b16 %v2777
        %v2849 = vunpack.c.l.b16 %v2778
        %v2850 = vunpack.c.l.b16 %v2779
        %v2851 = vunpack.c.l.b16 %v2780
        %v2852 = vunpack.c.l.b16 %v2781
        %v2853 = vunpack.c.l.b16 %v2782
        %v2854 = vunpack.c.l.b16 %v2783
        %v2855 = vunpack.c.l.b16 %v2784
        %v2856 = vpack.c.b16 %v2825, %v2824
        %v2857 = vpack.c.b16 %v2827, %v2826
        %v2858 = vpack.c.b16 %v2829, %v2828
        %v2859 = vpack.c.b16 %v2831, %v2830
        %v2860 = vpack.c.b16 %v2833, %v2832
        %v2861 = vpack.c.b16 %v2835, %v2834
        %v2862 = vpack.c.b16 %v2837, %v2836
        %v2863 = vpack.c.b16 %v2839, %v2838
        %v2864 = vpack.c.b16 %v2841, %v2840
        %v2865 = vpack.c.b16 %v2843, %v2842
        %v2866 = vpack.c.b16 %v2845, %v2844
        %v2867 = vpack.c.b16 %v2847, %v2846
        %v2868 = vpack.c.b16 %v2849, %v2848
        %v2869 = vpack.c.b16 %v2851, %v2850
        %v2870 = vpack.c.b16 %v2853, %v2852
        %v2871 = vpack.c.b16 %v2855, %v2854
        %2888 = vmatprep.subr.bf16.mxu0 0
        %2889 = vmatpush1.bf16.msra.mxu0 %v2856
        %2890 = vmatprep.subr.bf16.mxu0 0
        %2891 = vmatpush1.bf16.msra.mxu0 %v2857
        %2892 = vmatprep.subr.bf16.mxu0 0
        %2893 = vmatpush1.bf16.msra.mxu0 %v2858
        %2894 = vmatprep.subr.bf16.mxu0 0
        %2895 = vmatpush1.bf16.msra.mxu0 %v2859
        %2896 = vmatprep.subr.bf16.mxu0 0
        %2897 = vmatpush1.bf16.msra.mxu0 %v2860
        %2898 = vmatprep.subr.bf16.mxu0 0
        %2899 = vmatpush1.bf16.msra.mxu0 %v2861
        %2900 = vmatprep.subr.bf16.mxu0 0
        %2901 = vmatpush1.bf16.msra.mxu0 %v2862
        %2902 = vmatprep.subr.bf16.mxu0 0
        %2903 = vmatpush1.bf16.msra.mxu0 %v2863
        %2904 = vmatprep.subr.bf16.mxu0 0
        %2905 = vmatpush1.bf16.msra.mxu0 %v2864
        %2906 = vmatprep.subr.bf16.mxu0 0
        %2907 = vmatpush1.bf16.msra.mxu0 %v2865
        %2908 = vmatprep.subr.bf16.mxu0 0
        %2909 = vmatpush1.bf16.msra.mxu0 %v2866
        %2910 = vmatprep.subr.bf16.mxu0 0
        %2911 = vmatpush1.bf16.msra.mxu0 %v2867
        %2912 = vmatprep.subr.bf16.mxu0 0
        %2913 = vmatpush1.bf16.msra.mxu0 %v2868
        %2914 = vmatprep.subr.bf16.mxu0 0
        %2915 = vmatpush1.bf16.msra.mxu0 %v2869
        %2916 = vmatprep.subr.bf16.mxu0 0
        %2917 = vmatpush1.bf16.msra.mxu0 %v2870
        %2918 = vmatprep.subr.bf16.mxu0 0
        %2919 = vmatpush1.bf16.msra.mxu0 %v2871
        %2920 = vmatprep.mubr.bf16.mxu0 %v2752
        %2921 = vmatmul.mubr.bf16.gmra.mrb[0].mxu0 %v2751
        %v2922 = vpop.f32.mrb[0].mxu0
        %v2923 = vadd.f32 %v2790, %v2922
        %v2924 = vpop.f32.mrb[0].mxu0
        %v2925 = vpop.f32.mrb[0].mxu0
        %v2926 = vadd.f32 %v2790, %v2925
        %v2927 = vpop.f32.mrb[0].mxu0
        %2928 = vdwg.mxu0
        %v2929 = vld [vmem:[#allocation2] sm:$0x1]
        %vm2930 = vcmask 15360
        %v2931 = vsel %vm2930, %v2923, -inf
        %v2932 = vsel %vm2930, %v2926, -inf
        %v2933 = vmax.f32 %v2931, %v2932
        %v2934 = vrot.slane %v2933, 4
        %v2935 = vmax.f32 %v2933, %v2934
        %v2936 = vrot.slane %v2935, 2
        %v2937 = vmax.f32 %v2935, %v2936
        %v2938 = vrot.slane %v2937, 1
        %v2939 = vmax.f32 %v2937, %v2938
        %v2940 = vmax.f32 %v2929, %v2939
        %v2941 = vsub.f32 %v2929, %v2940
        %v2942 = vmul.f32 %v2941, 1.442695
        %v2943 = vpow.pop %v2942
        %v2945 = vlaneseq
        %v2946 = vshrl.u32 %v2945, 7
        %v2947 = vsub.s32 0, %v2946
        %v2948 = vrot.slane %v2940, %v2947
        %v2950 = vsub.f32 %v2923, %v2948
        %v2951 = vsub.f32 %v2926, %v2948
        %v2952 = vmul.f32 %v2950, 1.442695
        %v2953 = vpow.pop %v2952
        %v2954 = vmul.f32 %v2951, 1.442695
        %v2955 = vpow.pop %v2954
        %v2956 = vld [vmem:[#allocation3] sm:$0x1]
        %v2957 = vmul.f32 %v2943, %v2956
        %v2958 = vsel %vm2930, %v2953, 0.0
        %v2959 = vsel %vm2930, %v2955, 0.0
        %v2960 = vadd.f32 %v2958, %v2959
        %v2961 = vrot.slane %v2960, 4
        %v2962 = vadd.f32 %v2960, %v2961
        %v2963 = vrot.slane %v2962, 2
        %v2964 = vadd.f32 %v2962, %v2963
        %v2965 = vrot.slane %v2964, 1
        %v2966 = vadd.f32 %v2964, %v2965
        %v2967 = vadd.f32 %v2957, %v2966
        %vm2968 = vcmask 8192
        %2969 = vst.msk [vmem:[#allocation3] sm:$0x1] %vm2968, %v2967
        %2970 = vxpose.xlu0.b32.start [1/16] %v2943, 128
        %2971 = vxpose.xlu0.b32.cont [2/16] 0.0, 128
        %2972 = vxpose.xlu0.b32.cont [3/16] 0.0, 128
        %2973 = vxpose.xlu0.b32.cont [4/16] 0.0, 128
        %2974 = vxpose.xlu0.b32.cont [5/16] 0.0, 128
        %2975 = vxpose.xlu0.b32.cont [6/16] 0.0, 128
        %2976 = vxpose.xlu0.b32.cont [7/16] 0.0, 128
        %2977 = vxpose.xlu0.b32.cont [8/16] 0.0, 128
        %2978 = vxpose.xlu0.b32.cont [9/16] 0.0, 128
        %2979 = vxpose.xlu0.b32.cont [10/16] 0.0, 128
        %2980 = vxpose.xlu0.b32.cont [11/16] 0.0, 128
        %2981 = vxpose.xlu0.b32.cont [12/16] 0.0, 128
        %2982 = vxpose.xlu0.b32.cont [13/16] 0.0, 128
        %2983 = vxpose.xlu0.b32.cont [14/16] 0.0, 128
        %2984 = vxpose.xlu0.b32.cont [15/16] 0.0, 128
        %2985 = vxpose.xlu0.b32.end [16/16] 0.0, 128
        %v2986 = vpop.trf.xlu0
        %v2987 = vpop.trf.xlu0
        %v2988 = vpop.trf.xlu0
        %v2989 = vpop.trf.xlu0
        %v2990 = vpop.trf.xlu0
        %v2991 = vpop.trf.xlu0
        %v2992 = vpop.trf.xlu0
        %v2993 = vpop.trf.xlu0
        %v2994 = vpop.trf.xlu0
        %v2995 = vpop.trf.xlu0
        %v2996 = vpop.trf.xlu0
        %v2997 = vpop.trf.xlu0
        %v2998 = vpop.trf.xlu0
        %v2999 = vpop.trf.xlu0
        %v3000 = vpop.trf.xlu0
        %v3001 = vpop.trf.xlu0
        %v3002 = vld [vmem:[#allocation4] sm:$0xff]
        %3004 = vset.pattern.permute.xlu0 0
        %3005 = vperm.xlu0 %3004, %v2986
        %v3006 = vpop.permute.xlu0 %3005
        %v3008 = vunpack.c.l.s4 269488144
        %v3009 = vunpack.c.0.s8 %v3008
        %v3010 = vlaneseq
        %v3011 = vshrl.u32 %v3010, 7
        %v3012 = vsub.s32 %v3009, %v3011
        %v3013 = vrot.slane %v3006, %v3012
        %v3015 = vmul.f32 %v3002, %v3013
        %v3016 = vpack.c.bf16 %v2955, %v2953
        %3017 = vxpose.xlu0.c.b16.start [1/8] %v3016, 128
        %3018 = vxpose.xlu0.c.b16.cont [2/8] 0, 128
        %3019 = vxpose.xlu0.c.b16.cont [3/8] 0, 128
        %3020 = vxpose.xlu0.c.b16.cont [4/8] 0, 128
        %3021 = vxpose.xlu0.c.b16.cont [5/8] 0, 128
        %3022 = vxpose.xlu0.c.b16.cont [6/8] 0, 128
        %3023 = vxpose.xlu0.c.b16.cont [7/8] 0, 128
        %3024 = vxpose.xlu0.c.b16.end [8/8] 0, 128
        %v3025 = vpop.trf.xlu0
        %v3026 = vpop.trf.xlu0
        %v3027 = vpop.trf.xlu0
        %v3028 = vpop.trf.xlu0
        %v3029 = vpop.trf.xlu0
        %v3030 = vpop.trf.xlu0
        %v3031 = vpop.trf.xlu0
        %v3032 = vpop.trf.xlu0
        %vm3033 = vcmask 130048
        %v3035 = vsel %vm3033, %v3025, 0
        %3037 = vmatprep.subr.bf16.mxu0 %v1754
        %3038 = vmatpush1.bf16.msra.mxu0 %v1753
        %3039 = vmatprep.subr.bf16.mxu0 0
        %3040 = vmatpush1.bf16.msra.mxu0 0
        %3041 = vmatprep.subr.bf16.mxu0 0
        %3042 = vmatpush1.bf16.msra.mxu0 0
        %3043 = vmatprep.subr.bf16.mxu0 0
        %3044 = vmatpush1.bf16.msra.mxu0 0
        %3045 = vmatprep.subr.bf16.mxu0 0
        %3046 = vmatpush1.bf16.msra.mxu0 0
        %3047 = vmatprep.subr.bf16.mxu0 0
        %3048 = vmatpush1.bf16.msra.mxu0 0
        %3049 = vmatprep.subr.bf16.mxu0 0
        %3050 = vmatpush1.bf16.msra.mxu0 0
        %3051 = vmatprep.subr.bf16.mxu0 0
        %3052 = vmatpush1.bf16.msra.mxu0 0
        %3053 = vmatprep.subr.bf16.mxu0 0
        %3054 = vmatpush1.bf16.msra.mxu0 0
        %3055 = vmatprep.subr.bf16.mxu0 0
        %3056 = vmatpush1.bf16.msra.mxu0 0
        %3057 = vmatprep.subr.bf16.mxu0 0
        %3058 = vmatpush1.bf16.msra.mxu0 0
        %3059 = vmatprep.subr.bf16.mxu0 0
        %3060 = vmatpush1.bf16.msra.mxu0 0
        %3061 = vmatprep.subr.bf16.mxu0 0
        %3062 = vmatpush1.bf16.msra.mxu0 0
        %3063 = vmatprep.subr.bf16.mxu0 0
        %3064 = vmatpush1.bf16.msra.mxu0 0
        %3065 = vmatprep.subr.bf16.mxu0 0
        %3066 = vmatpush1.bf16.msra.mxu0 0
        %3067 = vmatprep.subr.bf16.mxu0 0
        %3068 = vmatpush1.bf16.msra.mxu0 0
        %3069 = vmatprep.mubr.bf16.mxu0 0
        %3070 = vmatmul.mubr.bf16.gmra.mrb[0].mxu0 %v3035
        %v3071 = vpop.f32.mrb[0].mxu0
        %v3072 = vadd.f32 0.0, %v3071
        %v3073 = vpop.f32.mrb[0].mxu0
        %v3074 = vadd.f32 0.0, %v3073
        %v3075 = vpop.f32.mrb[0].mxu0
        %v3076 = vpop.f32.mrb[0].mxu0
        %3077 = vdwg.mxu0
        %3078 = vmatprep.subr.bf16.mxu0 %v1756
        %3079 = vmatpush1.bf16.msra.mxu0 %v1755
        %3080 = vmatprep.subr.bf16.mxu0 0
        %3081 = vmatpush1.bf16.msra.mxu0 0
        %3082 = vmatprep.subr.bf16.mxu0 0
        %3083 = vmatpush1.bf16.msra.mxu0 0
        %3084 = vmatprep.subr.bf16.mxu0 0
        %3085 = vmatpush1.bf16.msra.mxu0 0
        %3086 = vmatprep.subr.bf16.mxu0 0
        %3087 = vmatpush1.bf16.msra.mxu0 0
        %3088 = vmatprep.subr.bf16.mxu0 0
        %3089 = vmatpush1.bf16.msra.mxu0 0
        %3090 = vmatprep.subr.bf16.mxu0 0
        %3091 = vmatpush1.bf16.msra.mxu0 0
        %3092 = vmatprep.subr.bf16.mxu0 0
        %3093 = vmatpush1.bf16.msra.mxu0 0
        %3094 = vmatprep.subr.bf16.mxu0 0
        %3095 = vmatpush1.bf16.msra.mxu0 0
        %3096 = vmatprep.subr.bf16.mxu0 0
        %3097 = vmatpush1.bf16.msra.mxu0 0
        %3098 = vmatprep.subr.bf16.mxu0 0
        %3099 = vmatpush1.bf16.msra.mxu0 0
        %3100 = vmatprep.subr.bf16.mxu0 0
        %3101 = vmatpush1.bf16.msra.mxu0 0
        %3102 = vmatprep.subr.bf16.mxu0 0
        %3103 = vmatpush1.bf16.msra.mxu0 0
        %3104 = vmatprep.subr.bf16.mxu0 0
        %3105 = vmatpush1.bf16.msra.mxu0 0
        %3106 = vmatprep.subr.bf16.mxu0 0
        %3107 = vmatpush1.bf16.msra.mxu0 0
        %3108 = vmatprep.subr.bf16.mxu0 0
        %3109 = vmatpush1.bf16.msra.mxu0 0
        %3110 = vmatprep.mubr.bf16.mxu0 0
        %3111 = vmatmul.mubr.bf16.gmra.mrb[0].mxu0 %v3035
        %v3112 = vpop.f32.mrb[0].mxu0
        %v3113 = vadd.f32 0.0, %v3112
        %v3114 = vpop.f32.mrb[0].mxu0
        %v3115 = vadd.f32 0.0, %v3114
        %v3116 = vpop.f32.mrb[0].mxu0
        %v3117 = vpop.f32.mrb[0].mxu0
        %3118 = vdwg.mxu0
        %v3123 = vcombine.low %v3072, %v3074
        %v3124 = vcombine.low %v3113, %v3115
        %v3126 = vunpack.c.l.s4 1983009808
        %v3127 = vunpack.c.0.s8 %v3126
        %v3128 = vlaneseq
        %v3129 = vshrl.u32 %v3128, 7
        %v3130 = vsub.s32 %v3127, %v3129
        %v3131 = vrot.slane %v3123, %v3130
        %v3133 = vunpack.c.l.s4 1983009808
        %v3134 = vunpack.c.0.s8 %v3133
        %v3135 = vlaneseq
        %v3136 = vshrl.u32 %v3135, 7
        %v3137 = vsub.s32 %v3134, %v3136
        %v3138 = vrot.slane %v3124, %v3137
        %v3139 = vcombine.low %v3131, %v3138
        %v3141 = vadd.f32 %v3015, %v3139
        %3142 = vst [vmem:[#allocation4] sm:$0xff] %v3141
        %3143 = vst.msk [vmem:[#allocation2] sm:$0x1] %vm2968, %v2940
        %p3144 = scmp.eq.s32.totalorder %s44, 1
        // Predicated region
        $region125: #{tpu_custom_call.1} parent=99 // pred_check
          %p3145 = pneg %p3144
        $region126: #{tpu_custom_call.1} parent=99 // pred_check_branch
          %3147 = sbr.rel (%p3145) target = $region128
        $region127: #{tpu_custom_call.1} parent=99 // pred_region
          %v3148 = vld [vmem:[#allocation3] sm:$0x1]
          %v3149 = vrcp.pop %v3148
          %3150 = vxpose.xlu0.b32.start [1/16] %v3149, 128
          %3151 = vxpose.xlu0.b32.cont [2/16] 0.0, 128
          %3152 = vxpose.xlu0.b32.cont [3/16] 0.0, 128
          %3153 = vxpose.xlu0.b32.cont [4/16] 0.0, 128
          %3154 = vxpose.xlu0.b32.cont [5/16] 0.0, 128
          %3155 = vxpose.xlu0.b32.cont [6/16] 0.0, 128
          %3156 = vxpose.xlu0.b32.cont [7/16] 0.0, 128
          %3157 = vxpose.xlu0.b32.cont [8/16] 0.0, 128
          %3158 = vxpose.xlu0.b32.cont [9/16] 0.0, 128
          %3159 = vxpose.xlu0.b32.cont [10/16] 0.0, 128
          %3160 = vxpose.xlu0.b32.cont [11/16] 0.0, 128
          %3161 = vxpose.xlu0.b32.cont [12/16] 0.0, 128
          %3162 = vxpose.xlu0.b32.cont [13/16] 0.0, 128
          %3163 = vxpose.xlu0.b32.cont [14/16] 0.0, 128
          %3164 = vxpose.xlu0.b32.cont [15/16] 0.0, 128
          %3165 = vxpose.xlu0.b32.end [16/16] 0.0, 128
          %v3166 = vpop.trf.xlu0
          %v3167 = vpop.trf.xlu0
          %v3168 = vpop.trf.xlu0
          %v3169 = vpop.trf.xlu0
          %v3170 = vpop.trf.xlu0
          %v3171 = vpop.trf.xlu0
          %v3172 = vpop.trf.xlu0
          %v3173 = vpop.trf.xlu0
          %v3174 = vpop.trf.xlu0
          %v3175 = vpop.trf.xlu0
          %v3176 = vpop.trf.xlu0
          %v3177 = vpop.trf.xlu0
          %v3178 = vpop.trf.xlu0
          %v3179 = vpop.trf.xlu0
          %v3180 = vpop.trf.xlu0
          %v3181 = vpop.trf.xlu0
          %v3182 = vld [vmem:[#allocation4] sm:$0xff]
          %3184 = vset.pattern.permute.xlu0 0
          %3185 = vperm.xlu0 %3184, %v3166
          %v3186 = vpop.permute.xlu0 %3185
          %v3188 = vunpack.c.l.s4 269488144
          %v3189 = vunpack.c.0.s8 %v3188
          %v3190 = vlaneseq
          %v3191 = vshrl.u32 %v3190, 7
          %v3192 = vsub.s32 %v3189, %v3191
          %v3193 = vrot.slane %v3186, %v3192
          %v3195 = vmul.f32 %v3182, %v3193
          %3196 = vst [vmem:[%s793] sm:$0xff] %v3195
        $region128: #{tpu_custom_call.1} parent=99 // pred_fallthru
          _
        %s3197 = sand.u32 %s507, 1
        %s3198 = scalar_lea.sflag [#allocation7], %s3197
        %s3199 = sand.u32 %s507, 1
        %s3200 = smul.addr %s3199, 8
        %s3201 = scalar_lea.vmem [#allocation14], %s3200
        // Predicated region
        $region129: #{tpu_custom_call.1} parent=99 // pred_check
          %p3202 = pneg %p517
        $region130: #{tpu_custom_call.1} parent=99 // pred_check_branch
          %3204 = sbr.rel (%p3202) target = $region132
        $region131: #{tpu_custom_call.1} parent=99 // pred_region
          %s3206 = ssub.s32 128, 128
          %3207 = vsyncadd %s3198, %s3206
          %s3208 = smul.addr %s43, 4
          %s3209 = smul.addr %s3208, 32
          %s3210 = scalar_lea.hbm %s20, %s3209
          %s3212 = sshll.u32 %s3201, 4
          %s3213 = int_to_ptr.vmem [resolvable:$true] %s3212
          %3215 = dma.vmem_to_hbm [thread:$0]  %s3213, 128, %s3210, %s3198
        $region132: #{tpu_custom_call.1} parent=99 // pred_fallthru
          _
      $region100: #{tpu_custom_call.1} parent=5 // pred_fallthru
        _
      %p3216 = scmp.le.s32.totalorder 2, %s34
      // Predicated region
      $region133: #{tpu_custom_call.1} parent=5 // pred_check
        %p3217 = pneg %p3216
      $region134: #{tpu_custom_call.1} parent=5 // pred_check_branch
        %3219 = sbr.rel (%p3217) target = $region136
      $region135: #{tpu_custom_call.1} parent=5 // pred_region
        %s3220 = ssub.s32 %s34, 2
        // Predicated region
        $region137: #{tpu_custom_call.1} parent=135 // pred_check
          %p3221 = pneg %p523
        $region138: #{tpu_custom_call.1} parent=135 // pred_check_branch
          %3223 = sbr.rel (%p3221) target = $region140
        $region139: #{tpu_custom_call.1} parent=135 // pred_region
          %s3224 = sand.u32 %s508, 1
          %s3225 = scalar_lea.sflag [#allocation7], %s3224
          %s3226 = sand.u32 %s508, 1
          %s3227 = smul.addr %s3226, 8
          %s3228 = scalar_lea.vmem [#allocation14], %s3227
          %3229 = dma.done %s3225, 128
        $region140: #{tpu_custom_call.1} parent=135 // pred_fallthru
          _
      $region136: #{tpu_custom_call.1} parent=5 // pred_fallthru
        _
    $region6: #{tpu_custom_call.1} parent=1 // loop_footer
      %s38 = sadd.s32 1, %s34
    $region7: #{tpu_custom_call.1} parent=1 // loop_footer_branch
      %33 = sbr.rel target = $region3
    $region8: #{tpu_custom_call.1} parent=1 // loop_exit
      _
    %3230 = vsyncpa [#allocation6], 1
    %s3231 = scalar_lea.sflag [#allocation6], 1
    %3232 = vsyncpa %s3231, 1
    %3233 = vsyncpa [#allocation9], 1
    %3234 = vsyncpa [#allocation12], 1
    %3235 = vsyncpa [#allocation7], 1
    %s3236 = scalar_lea.sflag [#allocation7], 1
    %3237 = vsyncpa %s3236, 1

</llo_original>
